<compile_context>
chip_gen: v5e
topology: v5e:2x2
jax: 0.10.0
libtpu: 0.0.40
codegen_flags: <defaults>
</compile_context>

<pallas_src>
import functools

import jax
import jax.numpy as jnp
from jax.experimental import pallas as pl
from jax.experimental.pallas import tpu as pltpu

NEG_SLOPE = 0.02                 # matches torch.nn.functional.leaky_relu(x, 0.02)
LANE = 128                       # lane width
SUB = 32                         # pad second-minor dims to 32 (covers f32/bf16 packing)
COMPUTE_DTYPE = jnp.bfloat16     # MXU operand dtype (f32 accumulate + f32 epilogue)
VMEM_LIMIT = 32 * 1024 * 1024    # safe on v5e/v6e/v7x


def _round_up(x, m):
    return (x + m - 1) // m * m


def _pad2d(a, rows, cols, dtype=None):
    r, c = a.shape
    out = jnp.pad(a, ((0, rows - r), (0, cols - c)))
    return out.astype(dtype) if dtype is not None else out


# ---------------------------------------------------------------------------
# Pallas kernel 1: fused  Y = act( X @ W + shift )   (scale pre-folded into W)
# ---------------------------------------------------------------------------
def _matmul_bias_act_kernel(x_ref, w_ref, shift_ref, o_ref, *, slope, apply_act):
    acc = jnp.dot(x_ref[...], w_ref[...], preferred_element_type=jnp.float32)
    acc = acc + shift_ref[...]                          # per-output-channel shift (f32)
    if apply_act:
        acc = jnp.where(acc >= 0.0, acc, slope * acc)   # LeakyReLU(0.02) in f32
    o_ref[...] = acc.astype(o_ref.dtype)


def fused_matmul(x, w, shift, *, apply_act=True, out_dtype=COMPUTE_DTYPE,
                 tile_m=512, slope=NEG_SLOPE):
    """x: (M, K), w: (K, N), shift: (N,) -> (M, N) out_dtype.
    Pads K/N to 128 multiples (lane-dense), tiles M with a parallel grid."""
    M, K = x.shape
    Kw, N = w.shape
    assert K == Kw
    Kp = _round_up(K, LANE)
    Np = _round_up(N, LANE)
    tm = min(tile_m, _round_up(M, SUB))
    Mp = _round_up(M, tm)

    x_p = _pad2d(x, Mp, Kp, COMPUTE_DTYPE)
    w_p = _pad2d(w, Kp, Np, COMPUTE_DTYPE)
    shift_p = _pad2d(shift.reshape(1, N).astype(jnp.float32), 1, Np)

    cost = pl.CostEstimate(
        flops=2 * Mp * Kp * Np,
        transcendentals=0,
        bytes_accessed=2 * (Mp * Kp + Kp * Np) + Mp * Np * jnp.dtype(out_dtype).itemsize,
    )
    out = pl.pallas_call(
        functools.partial(_matmul_bias_act_kernel, slope=slope, apply_act=apply_act),
        out_shape=jax.ShapeDtypeStruct((Mp, Np), out_dtype),
        grid=(Mp // tm,),
        in_specs=[
            pl.BlockSpec((tm, Kp), lambda i: (i, 0)),
            pl.BlockSpec((Kp, Np), lambda i: (0, 0)),
            pl.BlockSpec((1, Np), lambda i: (0, 0)),
        ],
        out_specs=pl.BlockSpec((tm, Np), lambda i: (i, 0)),
        compiler_params=pltpu.CompilerParams(
            dimension_semantics=("parallel",),      # shards M-tiles across v7x TCs
            vmem_limit_bytes=VMEM_LIMIT),
        cost_estimate=cost,
    )(x_p, w_p, shift_p)
    return out[:M, :N]


# ---------------------------------------------------------------------------
# Pallas kernel 2: fused tail  conv4(1x1) + BN4 + act + [h_x ; z] @ W1 + b1
#                              + act + @ W2 + b2     (single pallas_call)
# ---------------------------------------------------------------------------
def _tail_kernel(x4_ref, w4_ref, t4_ref, z_ref, w1h_ref, w1z_ref, b1_ref,
                 w2_ref, b2_ref, o_ref, *, slope):
    # conv4 (spatial already 1x1) + folded BN4 + LeakyReLU
    h = jnp.dot(x4_ref[...], w4_ref[...], preferred_element_type=jnp.float32)
    h = h + t4_ref[...]
    h = jnp.where(h >= 0.0, h, slope * h)               # padded cols stay exactly 0
    # lin_xz1 on concat(h_x, z), expressed as two matmuls (no in-kernel concat)
    h1 = (jnp.dot(h.astype(COMPUTE_DTYPE), w1h_ref[...],
                  preferred_element_type=jnp.float32)
          + jnp.dot(z_ref[...], w1z_ref[...], preferred_element_type=jnp.float32)
          + b1_ref[...])
    h1 = jnp.where(h1 >= 0.0, h1, slope * h1)
    # lin_xz2 (no activation)
    o_ref[...] = (jnp.dot(h1.astype(COMPUTE_DTYPE), w2_ref[...],
                          preferred_element_type=jnp.float32) + b2_ref[...])


def fused_head(h3_nhwc, w4_oihw, s4, t4, z, lin1_w, lin1_b, lin2_w, lin2_b,
               *, slope=NEG_SLOPE):
    n = h3_nhwc.shape[0]
    cout4, _, k4, _ = w4_oihw.shape
    cols4, oh, ow = im2col_nhwc(h3_nhwc, k4, 2)         # conv4 reduces spatial to 1x1
    assert oh == 1 and ow == 1
    M, K4 = cols4.shape
    fc_h = lin1_w.shape[0]
    latent = z.shape[1]

    Mp = _round_up(M, SUB)
    K4p = _round_up(K4, LANE)
    N4p = _round_up(cout4, LANE)
    Lzp = _round_up(latent, LANE)
    Fp = _round_up(fc_h, LANE)
    Np = LANE                                           # pad final N=1 to a full lane

    x4_p = _pad2d(cols4, Mp, K4p, COMPUTE_DTYPE)
    w4_p = _pad2d(conv_w_to_mat(w4_oihw) * s4[None, :], K4p, N4p, COMPUTE_DTYPE)
    t4_p = _pad2d(t4.reshape(1, -1).astype(jnp.float32), 1, N4p)
    z_p = _pad2d(z, Mp, Lzp, COMPUTE_DTYPE)
    w1 = lin1_w.T                                       # (h*8 + latent, fc_h)
    w1h_p = _pad2d(w1[:cout4, :], N4p, Fp, COMPUTE_DTYPE)
    w1z_p = _pad2d(w1[cout4:, :], Lzp, Fp, COMPUTE_DTYPE)
    b1_p = _pad2d(lin1_b.reshape(1, -1).astype(jnp.float32), 1, Fp)
    w2_p = _pad2d(lin2_w.T, Fp, Np, COMPUTE_DTYPE)
    b2_p = _pad2d(lin2_b.reshape(1, -1).astype(jnp.float32), 1, Np)

    cost = pl.CostEstimate(
        flops=2 * Mp * (K4p * N4p + N4p * Fp + Lzp * Fp + Fp * Np),
        transcendentals=0,
        bytes_accessed=2 * (Mp * K4p + K4p * N4p + Mp * Lzp + N4p * Fp
                            + Lzp * Fp + Fp * Np) + 4 * Mp * Np,
    )
    full = lambda shape: pl.BlockSpec(shape, lambda i: (0,) * len(shape))
    out = pl.pallas_call(
        functools.partial(_tail_kernel, slope=slope),
        out_shape=jax.ShapeDtypeStruct((Mp, Np), jnp.float32),
        grid=(1,),
        in_specs=[
            full((Mp, K4p)), full((K4p, N4p)), full((1, N4p)),
            full((Mp, Lzp)), full((N4p, Fp)), full((Lzp, Fp)), full((1, Fp)),
            full((Fp, Np)), full((1, Np)),
        ],
        out_specs=full((Mp, Np)),
        compiler_params=pltpu.CompilerParams(
            dimension_semantics=("arbitrary",),
            vmem_limit_bytes=VMEM_LIMIT),
        cost_estimate=cost,
    )(x4_p, w4_p, t4_p, z_p, w1h_p, w1z_p, b1_p, w2_p, b2_p)
    return out[:M, :1]


# ---------------------------------------------------------------------------
# JAX glue: channels-last im2col, weight reshaping, BN folding
# ---------------------------------------------------------------------------
def im2col_nhwc(x, k, stride):
    """x: (N, H, W, C) -> (N*OH*OW, k*k*C) with column order (kh, kw, C)."""
    n, h, w, c = x.shape
    oh = (h - k) // stride + 1
    ow = (w - k) // stride + 1
    patches = []
    for kh in range(k):
        for kw in range(k):
            patches.append(x[:, kh:kh + (oh - 1) * stride + 1:stride,
                               kw:kw + (ow - 1) * stride + 1:stride, :])
    cols = jnp.concatenate(patches, axis=-1)            # (N, OH, OW, k*k*C)
    return cols.reshape(n * oh * ow, k * k * c), oh, ow


def conv_w_to_mat(w_oihw):
    """PyTorch OIHW -> (kh*kw*Cin, Cout), matching (kh, kw, C) im2col order."""
    cout, cin, k, _ = w_oihw.shape
    return w_oihw.transpose(2, 3, 1, 0).reshape(k * k * cin, cout)


def conv_layer_nhwc(x_nhwc, w_oihw, scale, shift, stride, *, out_dtype=COMPUTE_DTYPE):
    """Conv2d (VALID, stride) + per-channel affine + LeakyReLU; NHWC in/out."""
    cout = w_oihw.shape[0]
    n = x_nhwc.shape[0]
    cols, oh, ow = im2col_nhwc(x_nhwc, w_oihw.shape[2], stride)
    w_mat = conv_w_to_mat(w_oihw) * scale[None, :]      # fold BN/identity scale into W
    out = fused_matmul(cols, w_mat, shift, apply_act=True, out_dtype=out_dtype)
    return out.reshape(n, oh, ow, cout)


def fold_bn(gamma, beta, running_mean, running_var, eps=1e-5):
    scale = gamma / jnp.sqrt(running_var + eps)
    shift = beta - running_mean * scale
    return scale, shift


# ---------------------------------------------------------------------------
# Parameter construction (deterministic, synthetic)
# ---------------------------------------------------------------------------
def make_params(key, n_channels, h_size, latent_size, fc_h_size):
    ks = jax.random.split(key, 24)
    nrm = lambda k, shp, s=0.05: s * jax.random.normal(k, shp, dtype=jnp.float32)
    p = {}
    p["w1"] = nrm(ks[0], (h_size, n_channels, 5, 5))
    p["b1"] = nrm(ks[1], (h_size,))
    p["w2"] = nrm(ks[2], (h_size * 2, h_size, 5, 5))
    p["w3"] = nrm(ks[3], (h_size * 4, h_size * 2, 7, 7))
    p["w4"] = nrm(ks[4], (h_size * 8, h_size * 4, 4, 4))
    for i, c in zip((2, 3, 4), (h_size * 2, h_size * 4, h_size * 8)):
        p[f"bn{i}_gamma"] = 1.0 + nrm(ks[4 + i], (c,))
        p[f"bn{i}_beta"] = nrm(ks[8 + i], (c,))
        p[f"bn{i}_mean"] = nrm(ks[12 + i], (c,))
        p[f"bn{i}_var"] = 1.0 + jnp.abs(nrm(ks[16 + i], (c,), 0.1))
    p["lin1_w"] = nrm(ks[21], (fc_h_size, h_size * 8 + latent_size))   # (out, in)
    p["lin1_b"] = nrm(ks[22], (fc_h_size,))
    p["lin2_w"] = nrm(ks[23], (1, fc_h_size))
    p["lin2_b"] = jnp.zeros((1,), jnp.float32)
    return p


# ---------------------------------------------------------------------------
# Forward pass
# ---------------------------------------------------------------------------
def veegan_discriminator_forward(params, x_nchw, z, *, h_size):
    p = params
    ones = lambda c: jnp.ones((c,), jnp.float32)
    # single NCHW -> NHWC transpose at the boundary; stay channels-last after
    h = jnp.transpose(x_nchw, (0, 2, 3, 1)).astype(COMPUTE_DTYPE)

    # compute_dx
    h = conv_layer_nhwc(h, p["w1"], ones(h_size), p["b1"], stride=2)       # conv1+bias+act
    s2, t2 = fold_bn(p["bn2_gamma"], p["bn2_beta"], p["bn2_mean"], p["bn2_var"])
    h = conv_layer_nhwc(h, p["w2"], s2, t2, stride=2)                      # conv2+bn+act
    s3, t3 = fold_bn(p["bn3_gamma"], p["bn3_beta"], p["bn3_mean"], p["bn3_var"])
    h = conv_layer_nhwc(h, p["w3"], s3, t3, stride=2)                      # conv3+bn+act
    s4, t4 = fold_bn(p["bn4_gamma"], p["bn4_beta"], p["bn4_mean"], p["bn4_var"])

    # conv4 (-> 1x1 spatial) + bn + act + flatten + compute_dxz, all in ONE kernel.
    # Dropout is eval-mode identity.
    pred = fused_head(h, p["w4"], s4, t4, z.astype(jnp.float32),
                      p["lin1_w"], p["lin1_b"], p["lin2_w"], p["lin2_b"])
    return pred                                                            # (N, 1)


# ---------------------------------------------------------------------------
# Main
# ---------------------------------------------------------------------------
if __name__ == "__main__":
    BATCH = 2
    N_CHANNELS = 3
    H_SIZE = 8            # -> h*8 = 64 conv features
    LATENT = 16
    FC_H = H_SIZE * 8     # fc_h_size default = h_size * 8
    IMG = 64              # 64x64 needed for the stride chain to reach 1x1 spatial

    key = jax.random.PRNGKey(0)
    k_p, k_x, k_z = jax.random.split(key, 3)
    params = make_params(k_p, N_CHANNELS, H_SIZE, LATENT, FC_H)
    x = jax.random.normal(k_x, (BATCH, N_CHANNELS, IMG, IMG), dtype=jnp.float32)
    z = jax.random.normal(k_z, (BATCH, LATENT), dtype=jnp.float32)

    fwd = jax.jit(functools.partial(veegan_discriminator_forward, h_size=H_SIZE))
    pred = jax.block_until_ready(fwd(params, x, z))

    assert pred.shape == (BATCH, 1), pred.shape
    assert bool(jnp.all(jnp.isfinite(pred)))
    print("KERNEL_OK")
</pallas_src>

<mosaic_0001>
module attributes {stable_mosaic.version = 11 : i64} {
  func.func @_matmul_bias_act_kernel(%arg0: i32, %arg1: memref<512x128xbf16, #tpu.memory_space<vmem>>, %arg2: memref<128x128xbf16, #tpu.memory_space<vmem>>, %arg3: memref<1x128xf32, #tpu.memory_space<vmem>>, %arg4: memref<512x128xbf16, #tpu.memory_space<vmem>>) attributes {dimension_semantics = [#tpu.dimension_semantics<parallel>], iteration_bounds = array<i64: 4>, scalar_prefetch = 0 : i64, scratch_operands = 0 : i64, tpu.core_type = #tpu.core_type<tc>, window_params = [{transform_indices = @transform_0, window_bounds = array<i64: 512, 128>}, {pipeline_mode = #tpu.pipeline_mode<synchronous>, transform_indices = @transform_1, window_bounds = array<i64: 128, 128>}, {pipeline_mode = #tpu.pipeline_mode<synchronous>, transform_indices = @transform_2, window_bounds = array<i64: 1, 128>}, {transform_indices = @transform_3, window_bounds = array<i64: 512, 128>}]} {
    %c0 = arith.constant 0 : index
    %c0_0 = arith.constant 0 : index
    %0 = vector.load %arg1[%c0, %c0_0] : memref<512x128xbf16, #tpu.memory_space<vmem>>, vector<512x128xbf16>
    %c0_1 = arith.constant 0 : index
    %c0_2 = arith.constant 0 : index
    %1 = vector.load %arg2[%c0_1, %c0_2] : memref<128x128xbf16, #tpu.memory_space<vmem>>, vector<128x128xbf16>
    %cst = arith.constant dense<0.000000e+00> : vector<512x128xf32>
    %2 = tpu.matmul %0, %1, %cst {dimension_numbers = #tpu.dot_dimension_numbers<[1], [0], [0], [1], [0, 0, 1, 1], [], []>} : vector<512x128xbf16>, vector<128x128xbf16>, vector<512x128xf32> -> vector<512x128xf32>
    %c0_3 = arith.constant 0 : index
    %c0_4 = arith.constant 0 : index
    %3 = vector.load %arg3[%c0_3, %c0_4] : memref<1x128xf32, #tpu.memory_space<vmem>>, vector<1x128xf32>
    %4 = vector.broadcast %3 : vector<1x128xf32> to vector<512x128xf32>
    %5 = arith.addf %2, %4 : vector<512x128xf32>
    %cst_5 = arith.constant 0.000000e+00 : f32
    %6 = vector.broadcast %cst_5 : f32 to vector<512x128xf32>
    %7 = arith.cmpf oge, %5, %6 : vector<512x128xf32>
    %cst_6 = arith.constant 2.000000e-02 : f32
    %8 = vector.broadcast %cst_6 : f32 to vector<512x128xf32>
    %9 = arith.mulf %8, %5 : vector<512x128xf32>
    %10 = arith.select %7, %5, %9 : vector<512x128xi1>, vector<512x128xf32>
    %11 = arith.truncf %10 : vector<512x128xf32> to vector<512x128xbf16>
    %c0_7 = arith.constant 0 : index
    %c0_8 = arith.constant 0 : index
    %12 = vector.load %arg4[%c0_7, %c0_8] : memref<512x128xbf16, #tpu.memory_space<vmem>>, vector<512x128xbf16>
    tpu.vector_store %arg4[%c0_7, %c0_8], %11 {strides = array<i32>} : memref<512x128xbf16, #tpu.memory_space<vmem>>, vector<512x128xbf16>,
    return
  }
  func.func @transform_0(%arg0: i32) -> (i32, i32) {
    %c0_i32 = arith.constant 0 : i32
    %c0_i32_0 = arith.constant 0 : i32
    return %arg0, %c0_i32 : i32, i32
  }
  func.func @transform_1(%arg0: i32) -> (i32, i32) {
    %c0_i32 = arith.constant 0 : i32
    %c0_i32_0 = arith.constant 0 : i32
    %c0_i32_1 = arith.constant 0 : i32
    return %c0_i32, %c0_i32_0 : i32, i32
  }
  func.func @transform_2(%arg0: i32) -> (i32, i32) {
    %c0_i32 = arith.constant 0 : i32
    %c0_i32_0 = arith.constant 0 : i32
    %c0_i32_1 = arith.constant 0 : i32
    return %c0_i32, %c0_i32_0 : i32, i32
  }
  func.func @transform_3(%arg0: i32) -> (i32, i32) {
    %c0_i32 = arith.constant 0 : i32
    %c0_i32_0 = arith.constant 0 : i32
    return %arg0, %c0_i32 : i32, i32
  }
}

module attributes {stable_mosaic.version = 11 : i64} {
  func.func @_matmul_bias_act_kernel(%arg0: i32, %arg1: memref<352x256xbf16, #tpu.memory_space<vmem>>, %arg2: memref<256x128xbf16, #tpu.memory_space<vmem>>, %arg3: memref<1x128xf32, #tpu.memory_space<vmem>>, %arg4: memref<352x128xbf16, #tpu.memory_space<vmem>>) attributes {dimension_semantics = [#tpu.dimension_semantics<parallel>], iteration_bounds = array<i64: 1>, scalar_prefetch = 0 : i64, scratch_operands = 0 : i64, tpu.core_type = #tpu.core_type<tc>, window_params = [{transform_indices = @transform_0, window_bounds = array<i64: 352, 256>}, {pipeline_mode = #tpu.pipeline_mode<synchronous>, transform_indices = @transform_1, window_bounds = array<i64: 256, 128>}, {pipeline_mode = #tpu.pipeline_mode<synchronous>, transform_indices = @transform_2, window_bounds = array<i64: 1, 128>}, {transform_indices = @transform_3, window_bounds = array<i64: 352, 128>}]} {
    %c0 = arith.constant 0 : index
    %c0_0 = arith.constant 0 : index
    %0 = vector.load %arg1[%c0, %c0_0] : memref<352x256xbf16, #tpu.memory_space<vmem>>, vector<352x256xbf16>
    %c0_1 = arith.constant 0 : index
    %c0_2 = arith.constant 0 : index
    %1 = vector.load %arg2[%c0_1, %c0_2] : memref<256x128xbf16, #tpu.memory_space<vmem>>, vector<256x128xbf16>
    %cst = arith.constant dense<0.000000e+00> : vector<352x128xf32>
    %2 = tpu.matmul %0, %1, %cst {dimension_numbers = #tpu.dot_dimension_numbers<[1], [0], [0], [1], [0, 0, 1, 1], [], []>} : vector<352x256xbf16>, vector<256x128xbf16>, vector<352x128xf32> -> vector<352x128xf32>
    %c0_3 = arith.constant 0 : index
    %c0_4 = arith.constant 0 : index
    %3 = vector.load %arg3[%c0_3, %c0_4] : memref<1x128xf32, #tpu.memory_space<vmem>>, vector<1x128xf32>
    %4 = vector.broadcast %3 : vector<1x128xf32> to vector<352x128xf32>
    %5 = arith.addf %2, %4 : vector<352x128xf32>
    %cst_5 = arith.constant 0.000000e+00 : f32
    %6 = vector.broadcast %cst_5 : f32 to vector<352x128xf32>
    %7 = arith.cmpf oge, %5, %6 : vector<352x128xf32>
    %cst_6 = arith.constant 2.000000e-02 : f32
    %8 = vector.broadcast %cst_6 : f32 to vector<352x128xf32>
    %9 = arith.mulf %8, %5 : vector<352x128xf32>
    %10 = arith.select %7, %5, %9 : vector<352x128xi1>, vector<352x128xf32>
    %11 = arith.truncf %10 : vector<352x128xf32> to vector<352x128xbf16>
    %c0_7 = arith.constant 0 : index
    %c0_8 = arith.constant 0 : index
    %12 = vector.load %arg4[%c0_7, %c0_8] : memref<352x128xbf16, #tpu.memory_space<vmem>>, vector<352x128xbf16>
    tpu.vector_store %arg4[%c0_7, %c0_8], %11 {strides = array<i32>} : memref<352x128xbf16, #tpu.memory_space<vmem>>, vector<352x128xbf16>,
    return
  }
  func.func @transform_0(%arg0: i32) -> (i32, i32) {
    %c0_i32 = arith.constant 0 : i32
    %c0_i32_0 = arith.constant 0 : i32
    return %arg0, %c0_i32 : i32, i32
  }
  func.func @transform_1(%arg0: i32) -> (i32, i32) {
    %c0_i32 = arith.constant 0 : i32
    %c0_i32_0 = arith.constant 0 : i32
    %c0_i32_1 = arith.constant 0 : i32
    return %c0_i32, %c0_i32_0 : i32, i32
  }
  func.func @transform_2(%arg0: i32) -> (i32, i32) {
    %c0_i32 = arith.constant 0 : i32
    %c0_i32_0 = arith.constant 0 : i32
    %c0_i32_1 = arith.constant 0 : i32
    return %c0_i32, %c0_i32_0 : i32, i32
  }
  func.func @transform_3(%arg0: i32) -> (i32, i32) {
    %c0_i32 = arith.constant 0 : i32
    %c0_i32_0 = arith.constant 0 : i32
    return %arg0, %c0_i32 : i32, i32
  }
}

module attributes {stable_mosaic.version = 11 : i64} {
  func.func @_matmul_bias_act_kernel(%arg0: i32, %arg1: memref<32x896xbf16, #tpu.memory_space<vmem>>, %arg2: memref<896x128xbf16, #tpu.memory_space<vmem>>, %arg3: memref<1x128xf32, #tpu.memory_space<vmem>>, %arg4: memref<32x128xbf16, #tpu.memory_space<vmem>>) attributes {dimension_semantics = [#tpu.dimension_semantics<parallel>], iteration_bounds = array<i64: 1>, scalar_prefetch = 0 : i64, scratch_operands = 0 : i64, tpu.core_type = #tpu.core_type<tc>, window_params = [{transform_indices = @transform_0, window_bounds = array<i64: 32, 896>}, {pipeline_mode = #tpu.pipeline_mode<synchronous>, transform_indices = @transform_1, window_bounds = array<i64: 896, 128>}, {pipeline_mode = #tpu.pipeline_mode<synchronous>, transform_indices = @transform_2, window_bounds = array<i64: 1, 128>}, {transform_indices = @transform_3, window_bounds = array<i64: 32, 128>}]} {
    %c0 = arith.constant 0 : index
    %c0_0 = arith.constant 0 : index
    %0 = vector.load %arg1[%c0, %c0_0] : memref<32x896xbf16, #tpu.memory_space<vmem>>, vector<32x896xbf16>
    %c0_1 = arith.constant 0 : index
    %c0_2 = arith.constant 0 : index
    %1 = vector.load %arg2[%c0_1, %c0_2] : memref<896x128xbf16, #tpu.memory_space<vmem>>, vector<896x128xbf16>
    %cst = arith.constant dense<0.000000e+00> : vector<32x128xf32>
    %2 = tpu.matmul %0, %1, %cst {dimension_numbers = #tpu.dot_dimension_numbers<[1], [0], [0], [1], [0, 0, 1, 1], [], []>} : vector<32x896xbf16>, vector<896x128xbf16>, vector<32x128xf32> -> vector<32x128xf32>
    %c0_3 = arith.constant 0 : index
    %c0_4 = arith.constant 0 : index
    %3 = vector.load %arg3[%c0_3, %c0_4] : memref<1x128xf32, #tpu.memory_space<vmem>>, vector<1x128xf32>
    %4 = vector.broadcast %3 : vector<1x128xf32> to vector<32x128xf32>
    %5 = arith.addf %2, %4 : vector<32x128xf32>
    %cst_5 = arith.constant 0.000000e+00 : f32
    %6 = vector.broadcast %cst_5 : f32 to vector<32x128xf32>
    %7 = arith.cmpf oge, %5, %6 : vector<32x128xf32>
    %cst_6 = arith.constant 2.000000e-02 : f32
    %8 = vector.broadcast %cst_6 : f32 to vector<32x128xf32>
    %9 = arith.mulf %8, %5 : vector<32x128xf32>
    %10 = arith.select %7, %5, %9 : vector<32x128xi1>, vector<32x128xf32>
    %11 = arith.truncf %10 : vector<32x128xf32> to vector<32x128xbf16>
    %c0_7 = arith.constant 0 : index
    %c0_8 = arith.constant 0 : index
    %12 = vector.load %arg4[%c0_7, %c0_8] : memref<32x128xbf16, #tpu.memory_space<vmem>>, vector<32x128xbf16>
    tpu.vector_store %arg4[%c0_7, %c0_8], %11 {strides = array<i32>} : memref<32x128xbf16, #tpu.memory_space<vmem>>, vector<32x128xbf16>,
    return
  }
  func.func @transform_0(%arg0: i32) -> (i32, i32) {
    %c0_i32 = arith.constant 0 : i32
    %c0_i32_0 = arith.constant 0 : i32
    return %arg0, %c0_i32 : i32, i32
  }
  func.func @transform_1(%arg0: i32) -> (i32, i32) {
    %c0_i32 = arith.constant 0 : i32
    %c0_i32_0 = arith.constant 0 : i32
    %c0_i32_1 = arith.constant 0 : i32
    return %c0_i32, %c0_i32_0 : i32, i32
  }
  func.func @transform_2(%arg0: i32) -> (i32, i32) {
    %c0_i32 = arith.constant 0 : i32
    %c0_i32_0 = arith.constant 0 : i32
    %c0_i32_1 = arith.constant 0 : i32
    return %c0_i32, %c0_i32_0 : i32, i32
  }
  func.func @transform_3(%arg0: i32) -> (i32, i32) {
    %c0_i32 = arith.constant 0 : i32
    %c0_i32_0 = arith.constant 0 : i32
    return %arg0, %c0_i32 : i32, i32
  }
}

module attributes {stable_mosaic.version = 11 : i64} {
  func.func @_tail_kernel(%arg0: i32, %arg1: memref<32x512xbf16, #tpu.memory_space<vmem>>, %arg2: memref<512x128xbf16, #tpu.memory_space<vmem>>, %arg3: memref<1x128xf32, #tpu.memory_space<vmem>>, %arg4: memref<32x128xbf16, #tpu.memory_space<vmem>>, %arg5: memref<128x128xbf16, #tpu.memory_space<vmem>>, %arg6: memref<128x128xbf16, #tpu.memory_space<vmem>>, %arg7: memref<1x128xf32, #tpu.memory_space<vmem>>, %arg8: memref<128x128xbf16, #tpu.memory_space<vmem>>, %arg9: memref<1x128xf32, #tpu.memory_space<vmem>>, %arg10: memref<32x128xf32, #tpu.memory_space<vmem>>) attributes {dimension_semantics = [#tpu.dimension_semantics<arbitrary>], iteration_bounds = array<i64: 1>, scalar_prefetch = 0 : i64, scratch_operands = 0 : i64, tpu.core_type = #tpu.core_type<tc>, window_params = [{pipeline_mode = #tpu.pipeline_mode<synchronous>, transform_indices = @transform_0, window_bounds = array<i64: 32, 512>}, {pipeline_mode = #tpu.pipeline_mode<synchronous>, transform_indices = @transform_1, window_bounds = array<i64: 512, 128>}, {pipeline_mode = #tpu.pipeline_mode<synchronous>, transform_indices = @transform_2, window_bounds = array<i64: 1, 128>}, {pipeline_mode = #tpu.pipeline_mode<synchronous>, transform_indices = @transform_3, window_bounds = array<i64: 32, 128>}, {pipeline_mode = #tpu.pipeline_mode<synchronous>, transform_indices = @transform_4, window_bounds = array<i64: 128, 128>}, {pipeline_mode = #tpu.pipeline_mode<synchronous>, transform_indices = @transform_5, window_bounds = array<i64: 128, 128>}, {pipeline_mode = #tpu.pipeline_mode<synchronous>, transform_indices = @transform_6, window_bounds = array<i64: 1, 128>}, {pipeline_mode = #tpu.pipeline_mode<synchronous>, transform_indices = @transform_7, window_bounds = array<i64: 128, 128>}, {pipeline_mode = #tpu.pipeline_mode<synchronous>, transform_indices = @transform_8, window_bounds = array<i64: 1, 128>}, {pipeline_mode = #tpu.pipeline_mode<synchronous>, transform_indices = @transform_9, window_bounds = array<i64: 32, 128>}]} {
    %c0 = arith.constant 0 : index
    %c0_0 = arith.constant 0 : index
    %0 = vector.load %arg1[%c0, %c0_0] : memref<32x512xbf16, #tpu.memory_space<vmem>>, vector<32x512xbf16>
    %c0_1 = arith.constant 0 : index
    %c0_2 = arith.constant 0 : index
    %1 = vector.load %arg2[%c0_1, %c0_2] : memref<512x128xbf16, #tpu.memory_space<vmem>>, vector<512x128xbf16>
    %cst = arith.constant dense<0.000000e+00> : vector<32x128xf32>
    %2 = tpu.matmul %0, %1, %cst {dimension_numbers = #tpu.dot_dimension_numbers<[1], [0], [0], [1], [0, 0, 1, 1], [], []>} : vector<32x512xbf16>, vector<512x128xbf16>, vector<32x128xf32> -> vector<32x128xf32>
    %c0_3 = arith.constant 0 : index
    %c0_4 = arith.constant 0 : index
    %3 = vector.load %arg3[%c0_3, %c0_4] : memref<1x128xf32, #tpu.memory_space<vmem>>, vector<1x128xf32>
    %4 = vector.broadcast %3 : vector<1x128xf32> to vector<32x128xf32>
    %5 = arith.addf %2, %4 : vector<32x128xf32>
    %cst_5 = arith.constant 0.000000e+00 : f32
    %6 = vector.broadcast %cst_5 : f32 to vector<32x128xf32>
    %7 = arith.cmpf oge, %5, %6 : vector<32x128xf32>
    %cst_6 = arith.constant 2.000000e-02 : f32
    %8 = vector.broadcast %cst_6 : f32 to vector<32x128xf32>
    %9 = arith.mulf %8, %5 : vector<32x128xf32>
    %10 = arith.select %7, %5, %9 : vector<32x128xi1>, vector<32x128xf32>
    %11 = arith.truncf %10 : vector<32x128xf32> to vector<32x128xbf16>
    %c0_7 = arith.constant 0 : index
    %c0_8 = arith.constant 0 : index
    %12 = vector.load %arg5[%c0_7, %c0_8] : memref<128x128xbf16, #tpu.memory_space<vmem>>, vector<128x128xbf16>
    %cst_9 = arith.constant dense<0.000000e+00> : vector<32x128xf32>
    %13 = tpu.matmul %11, %12, %cst_9 {dimension_numbers = #tpu.dot_dimension_numbers<[1], [0], [0], [1], [0, 0, 1, 1], [], []>} : vector<32x128xbf16>, vector<128x128xbf16>, vector<32x128xf32> -> vector<32x128xf32>
    %c0_10 = arith.constant 0 : index
    %c0_11 = arith.constant 0 : index
    %14 = vector.load %arg4[%c0_10, %c0_11] : memref<32x128xbf16, #tpu.memory_space<vmem>>, vector<32x128xbf16>
    %c0_12 = arith.constant 0 : index
    %c0_13 = arith.constant 0 : index
    %15 = vector.load %arg6[%c0_12, %c0_13] : memref<128x128xbf16, #tpu.memory_space<vmem>>, vector<128x128xbf16>
    %cst_14 = arith.constant dense<0.000000e+00> : vector<32x128xf32>
    %16 = tpu.matmul %14, %15, %cst_14 {dimension_numbers = #tpu.dot_dimension_numbers<[1], [0], [0], [1], [0, 0, 1, 1], [], []>} : vector<32x128xbf16>, vector<128x128xbf16>, vector<32x128xf32> -> vector<32x128xf32>
    %17 = arith.addf %13, %16 : vector<32x128xf32>
    %c0_15 = arith.constant 0 : index
    %c0_16 = arith.constant 0 : index
    %18 = vector.load %arg7[%c0_15, %c0_16] : memref<1x128xf32, #tpu.memory_space<vmem>>, vector<1x128xf32>
    %19 = vector.broadcast %18 : vector<1x128xf32> to vector<32x128xf32>
    %20 = arith.addf %17, %19 : vector<32x128xf32>
    %cst_17 = arith.constant 0.000000e+00 : f32
    %21 = vector.broadcast %cst_17 : f32 to vector<32x128xf32>
    %22 = arith.cmpf oge, %20, %21 : vector<32x128xf32>
    %cst_18 = arith.constant 2.000000e-02 : f32
    %23 = vector.broadcast %cst_18 : f32 to vector<32x128xf32>
    %24 = arith.mulf %23, %20 : vector<32x128xf32>
    %25 = arith.select %22, %20, %24 : vector<32x128xi1>, vector<32x128xf32>
    %26 = arith.truncf %25 : vector<32x128xf32> to vector<32x128xbf16>
    %c0_19 = arith.constant 0 : index
    %c0_20 = arith.constant 0 : index
    %27 = vector.load %arg8[%c0_19, %c0_20] : memref<128x128xbf16, #tpu.memory_space<vmem>>, vector<128x128xbf16>
    %cst_21 = arith.constant dense<0.000000e+00> : vector<32x128xf32>
    %28 = tpu.matmul %26, %27, %cst_21 {dimension_numbers = #tpu.dot_dimension_numbers<[1], [0], [0], [1], [0, 0, 1, 1], [], []>} : vector<32x128xbf16>, vector<128x128xbf16>, vector<32x128xf32> -> vector<32x128xf32>
    %c0_22 = arith.constant 0 : index
    %c0_23 = arith.constant 0 : index
    %29 = vector.load %arg9[%c0_22, %c0_23] : memref<1x128xf32, #tpu.memory_space<vmem>>, vector<1x128xf32>
    %30 = vector.broadcast %29 : vector<1x128xf32> to vector<32x128xf32>
    %31 = arith.addf %28, %30 : vector<32x128xf32>
    %c0_24 = arith.constant 0 : index
    %c0_25 = arith.constant 0 : index
    %32 = vector.load %arg10[%c0_24, %c0_25] : memref<32x128xf32, #tpu.memory_space<vmem>>, vector<32x128xf32>
    tpu.vector_store %arg10[%c0_24, %c0_25], %31 {strides = array<i32>} : memref<32x128xf32, #tpu.memory_space<vmem>>, vector<32x128xf32>,
    return
  }
  func.func @transform_0(%arg0: i32) -> (i32, i32) {
    %c0_i32 = arith.constant 0 : i32
    %c0_i32_0 = arith.constant 0 : i32
    %c0_i32_1 = arith.constant 0 : i32
    return %c0_i32, %c0_i32_0 : i32, i32
  }
  func.func @transform_1(%arg0: i32) -> (i32, i32) {
    %c0_i32 = arith.constant 0 : i32
    %c0_i32_0 = arith.constant 0 : i32
    %c0_i32_1 = arith.constant 0 : i32
    return %c0_i32, %c0_i32_0 : i32, i32
  }
  func.func @transform_2(%arg0: i32) -> (i32, i32) {
    %c0_i32 = arith.constant 0 : i32
    %c0_i32_0 = arith.constant 0 : i32
    %c0_i32_1 = arith.constant 0 : i32
    return %c0_i32, %c0_i32_0 : i32, i32
  }
  func.func @transform_3(%arg0: i32) -> (i32, i32) {
    %c0_i32 = arith.constant 0 : i32
    %c0_i32_0 = arith.constant 0 : i32
    %c0_i32_1 = arith.constant 0 : i32
    return %c0_i32, %c0_i32_0 : i32, i32
  }
  func.func @transform_4(%arg0: i32) -> (i32, i32) {
    %c0_i32 = arith.constant 0 : i32
    %c0_i32_0 = arith.constant 0 : i32
    %c0_i32_1 = arith.constant 0 : i32
    return %c0_i32, %c0_i32_0 : i32, i32
  }
  func.func @transform_5(%arg0: i32) -> (i32, i32) {
    %c0_i32 = arith.constant 0 : i32
    %c0_i32_0 = arith.constant 0 : i32
    %c0_i32_1 = arith.constant 0 : i32
    return %c0_i32, %c0_i32_0 : i32, i32
  }
  func.func @transform_6(%arg0: i32) -> (i32, i32) {
    %c0_i32 = arith.constant 0 : i32
    %c0_i32_0 = arith.constant 0 : i32
    %c0_i32_1 = arith.constant 0 : i32
    return %c0_i32, %c0_i32_0 : i32, i32
  }
  func.func @transform_7(%arg0: i32) -> (i32, i32) {
    %c0_i32 = arith.constant 0 : i32
    %c0_i32_0 = arith.constant 0 : i32
    %c0_i32_1 = arith.constant 0 : i32
    return %c0_i32, %c0_i32_0 : i32, i32
  }
  func.func @transform_8(%arg0: i32) -> (i32, i32) {
    %c0_i32 = arith.constant 0 : i32
    %c0_i32_0 = arith.constant 0 : i32
    %c0_i32_1 = arith.constant 0 : i32
    return %c0_i32, %c0_i32_0 : i32, i32
  }
  func.func @transform_9(%arg0: i32) -> (i32, i32) {
    %c0_i32 = arith.constant 0 : i32
    %c0_i32_0 = arith.constant 0 : i32
    %c0_i32_1 = arith.constant 0 : i32
    return %c0_i32, %c0_i32_0 : i32, i32
  }
}

</mosaic_0001>

<llo_original>
// kernel: veegan_discriminator_forward.4
$region0: #{veegan_discriminator_forward.4}
  #allocation0 [shape = 'u32[]', space=smem, size = 0x4, offset = 0x4, fixed_abs, tag = 'smem constant byte address 0x4 - core index']
  #allocation1 [shape = 'u32[72,128]{1,0:T(1,128)}', space=vmem, size = 0x9000, scoped, tag = 'internal scratch']
  %s0 = inlined_call_operand.vmem [shape: bf16[2048,128], index: 0, kind: input, shape index: {}]
  %s1 = inlined_call_operand.vmem [shape: bf16[128,128], index: 1, kind: input, shape index: {}]
  %s2 = inlined_call_operand.vmem [shape: f32[1,128], index: 2, kind: input, shape index: {}]
  %s3 = inlined_call_operand.vmem [shape: bf16[2048,128], index: 3, kind: output, shape index: {}]
  %s4 = sld [smem:[#allocation0]]
  $region45: #{veegan_discriminator_forward.4} parent=0
    _
  %s6 = ssub.s32 1, %s4
  %s7 = scalar_select 0, %s6, %s4
  loop: start=0, step=1, limit=6
  $region2: #{veegan_discriminator_forward.4} parent=0 // loop_pre_header
    _
  $region3: #{veegan_discriminator_forward.4} parent=0 // loop_header
    %s9 = sphi 0, %s13
    %p10 = scmp.ge.s32.totalorder %s9, 6
    %s19 = sphi 0, %s21
    %s22 = sphi 0, %s19
    %s23 = sphi 0, %s22
    %s39 = sphi 0, %s23
    %s43 = sphi 0, %s43
    %s45 = sphi 0, %s43
    %s46 = sphi 0, %s45
    %s60 = sphi 0, %s46
    %s64 = sphi 0, %s64
    %s66 = sphi 0, %s64
    %s67 = sphi 0, %s66
    %s81 = sphi 0, %s67
    %s87 = sphi 0, %s89
    %s90 = sphi 0, %s87
    %s91 = sphi 0, %s90
    %s107 = sphi 0, %s91
  $region4: #{veegan_discriminator_forward.4} parent=0 // loop_header_branch
    %12 = sbr.rel (%p10) target = $region8
  $region5: #{veegan_discriminator_forward.4} parent=0 // loop_body
    %s14 = ssub.s32 %s9, 1
    %s15 = ssub.s32 %s9, 2
    %s16 = sadd.s32 %s9, 1
    %s17 = ssub.s32 %s9, %s16
    %p18 = scmp.eq.s32.totalorder %s17, 0
    %s20 = sadd.s32 %s19, 1
    %s21 = scalar_select %p18, %s19, %s20
    %p24 = pneg %p18
    %p25 = scmp.eq.s32.totalorder %s9, 3
    %p26 = por %p24, %p25
    %p27 = scmp.ne.s32.totalorder %s19, %s22
    %p28 = scmp.eq.s32.totalorder %s9, 0
    %p29 = por %p27, %p28
    %p30 = scmp.ne.s32.totalorder %s19, %s22
    %p31 = scmp.eq.s32.totalorder %s14, 3
    %p32 = por %p30, %p31
    %p33 = scmp.ne.s32.totalorder %s22, %s23
    %p34 = scmp.eq.s32.totalorder %s14, 0
    %p35 = por %p33, %p34
    %p36 = scmp.ne.s32.totalorder %s22, %s23
    %p37 = scmp.eq.s32.totalorder %s15, 3
    %p38 = por %p36, %p37
    %p40 = scmp.ne.s32.totalorder %s23, %s39
    %p41 = scmp.eq.s32.totalorder %s15, 0
    %p42 = por %p40, %p41
    %s44 = sadd.s32 %s43, 1
    %p47 = scmp.eq.s32.totalorder %s9, 3
    %p48 = scmp.ne.s32.totalorder %s43, %s45
    %p49 = scmp.eq.s32.totalorder %s9, 0
    %p50 = por %p48, %p49
    %p51 = scmp.ne.s32.totalorder %s43, %s45
    %p52 = scmp.eq.s32.totalorder %s14, 3
    %p53 = por %p51, %p52
    %p54 = scmp.ne.s32.totalorder %s45, %s46
    %p55 = scmp.eq.s32.totalorder %s14, 0
    %p56 = por %p54, %p55
    %p57 = scmp.ne.s32.totalorder %s45, %s46
    %p58 = scmp.eq.s32.totalorder %s15, 3
    %p59 = por %p57, %p58
    %p61 = scmp.ne.s32.totalorder %s46, %s60
    %p62 = scmp.eq.s32.totalorder %s15, 0
    %p63 = por %p61, %p62
    %s65 = sadd.s32 %s64, 1
    %p68 = scmp.eq.s32.totalorder %s9, 3
    %p69 = scmp.ne.s32.totalorder %s64, %s66
    %p70 = scmp.eq.s32.totalorder %s9, 0
    %p71 = por %p69, %p70
    %p72 = scmp.ne.s32.totalorder %s64, %s66
    %p73 = scmp.eq.s32.totalorder %s14, 3
    %p74 = por %p72, %p73
    %p75 = scmp.ne.s32.totalorder %s66, %s67
    %p76 = scmp.eq.s32.totalorder %s14, 0
    %p77 = por %p75, %p76
    %p78 = scmp.ne.s32.totalorder %s66, %s67
    %p79 = scmp.eq.s32.totalorder %s15, 3
    %p80 = por %p78, %p79
    %p82 = scmp.ne.s32.totalorder %s67, %s81
    %p83 = scmp.eq.s32.totalorder %s15, 0
    %p84 = por %p82, %p83
    %s85 = ssub.s32 %s9, %s16
    %p86 = scmp.eq.s32.totalorder %s85, 0
    %s88 = sadd.s32 %s87, 1
    %s89 = scalar_select %p86, %s87, %s88
    %p92 = pneg %p86
    %p93 = scmp.eq.s32.totalorder %s9, 3
    %p94 = por %p92, %p93
    %p95 = scmp.ne.s32.totalorder %s87, %s90
    %p96 = scmp.eq.s32.totalorder %s9, 0
    %p97 = por %p95, %p96
    %p98 = scmp.ne.s32.totalorder %s87, %s90
    %p99 = scmp.eq.s32.totalorder %s14, 3
    %p100 = por %p98, %p99
    %p101 = scmp.ne.s32.totalorder %s90, %s91
    %p102 = scmp.eq.s32.totalorder %s14, 0
    %p103 = por %p101, %p102
    %p104 = scmp.ne.s32.totalorder %s90, %s91
    %p105 = scmp.eq.s32.totalorder %s15, 3
    %p106 = por %p104, %p105
    %p108 = scmp.ne.s32.totalorder %s91, %s107
    %p109 = scmp.eq.s32.totalorder %s15, 0
    %p110 = por %p108, %p109
    %p111 = scmp.le.s32.totalorder 1, %s9
    %p112 = scmp.lt.s32.totalorder %s9, 5
    %p113 = pnand %p111, %p112
    %p114 = pneg %p113
    // Predicated region
    $region9: #{veegan_discriminator_forward.4} parent=5 // pred_check
      _
    $region10: #{veegan_discriminator_forward.4} parent=5 // pred_check_branch
      %116 = sbr.rel (%p113) target = $region12
    $region11: #{veegan_discriminator_forward.4} parent=5 // pred_region
      %s117 = ssub.s32 %s9, 1
      // Predicated region
      $region13: #{veegan_discriminator_forward.4} parent=11 // pred_check
        %p118 = pneg %p56
      $region14: #{veegan_discriminator_forward.4} parent=11 // pred_check_branch
        %120 = sbr.rel (%p118) target = $region16
      $region15: #{veegan_discriminator_forward.4} parent=11 // pred_region
        _
      $region16: #{veegan_discriminator_forward.4} parent=11 // pred_fallthru
        _
      // Predicated region
      $region17: #{veegan_discriminator_forward.4} parent=11 // pred_check
        %p121 = pneg %p77
      $region18: #{veegan_discriminator_forward.4} parent=11 // pred_check_branch
        %123 = sbr.rel (%p121) target = $region20
      $region19: #{veegan_discriminator_forward.4} parent=11 // pred_region
        _
      $region20: #{veegan_discriminator_forward.4} parent=11 // pred_fallthru
        _
    $region12: #{veegan_discriminator_forward.4} parent=5 // pred_fallthru
      _
    %p124 = scmp.lt.s32.totalorder %s9, 4
    // Predicated region
    $region21: #{veegan_discriminator_forward.4} parent=5 // pred_check
      %p125 = pneg %p124
    $region22: #{veegan_discriminator_forward.4} parent=5 // pred_check_branch
      %127 = sbr.rel (%p125) target = $region24
    $region23: #{veegan_discriminator_forward.4} parent=5 // pred_region
      // Predicated region
      $region25: #{veegan_discriminator_forward.4} parent=23 // pred_check
        %p128 = pneg %p29
      $region26: #{veegan_discriminator_forward.4} parent=23 // pred_check_branch
        %130 = sbr.rel (%p128) target = $region28
      $region27: #{veegan_discriminator_forward.4} parent=23 // pred_region
        %s131 = smul.u32 64, %s9
        %p132 = scmp.lt.s32.totalorder %s131, 255
        %s133 = scalar_select %p132, %s131, 255
        %s134 = smul.addr %s133, 4
        %s135 = scalar_lea.vmem %s0, %s134
        %s136 = smul.u32 64, %s9
      $region28: #{veegan_discriminator_forward.4} parent=23 // pred_fallthru
        _
    $region24: #{veegan_discriminator_forward.4} parent=5 // pred_fallthru
      _
    %p137 = scmp.le.s32.totalorder 1, %s9
    %p138 = scmp.lt.s32.totalorder %s9, 5
    %p139 = pnand %p137, %p138
    %p140 = pneg %p139
    // Predicated region
    $region29: #{veegan_discriminator_forward.4} parent=5 // pred_check
      _
    $region30: #{veegan_discriminator_forward.4} parent=5 // pred_check_branch
      %142 = sbr.rel (%p139) target = $region32
    $region31: #{veegan_discriminator_forward.4} parent=5 // pred_region
      %s143 = ssub.s32 %s9, 1
      %s144 = smul.u32 64, %s14
      %p145 = scmp.lt.s32.totalorder %s144, 255
      %s146 = scalar_select %p145, %s144, 255
      %s147 = smul.addr %s146, 4
      %s148 = scalar_lea.vmem %s0, %s147
      %p149 = pneg %p35
      %p150 = pneg %p32
      %p151 = pneg %p56
      %p152 = pneg %p53
      %p153 = pneg %p77
      %p154 = pneg %p74
      %p155 = pneg %p103
      %p156 = pneg %p100
      %s157 = smul.u32 64, %s14
      %p158 = scmp.lt.s32.totalorder %s157, 255
      %s159 = scalar_select %p158, %s157, 255
      %s160 = smul.addr %s159, 4
      %s161 = scalar_lea.vmem %s3, %s160
      %s162 = smul.u32 64, %s14
      %p163 = scmp.lt.s32.totalorder %s162, 255
      %s164 = scalar_select %p163, %s162, 255
      %s165 = smul.addr %s164, 4
      %s166 = scalar_lea.vmem %s0, %s165
      %s167 = smul.u32 64, %s14
      %s168 = smul.u32 64, %s14
      %p169 = scmp.lt.s32.totalorder %s168, 255
      %s170 = scalar_select %p169, %s168, 255
      %s171 = smul.addr %s170, 4
      %s172 = scalar_lea.vmem %s3, %s171
      %s173 = smul.u32 64, %s14
      %v174 = vld [vmem:[%s166] sm:$0xf]
      %v175 = vld [vmem:[%s166 + $0x4] sm:$0xf]
      %v176 = vld [vmem:[%s166 + $0x8] sm:$0xf]
      %v177 = vld [vmem:[%s166 + $0xc] sm:$0xf]
      %v178 = vld [vmem:[%s166 + $0x10] sm:$0xf]
      %v179 = vld [vmem:[%s166 + $0x14] sm:$0xf]
      %v180 = vld [vmem:[%s166 + $0x18] sm:$0xf]
      %v181 = vld [vmem:[%s166 + $0x1c] sm:$0xf]
      %v182 = vld [vmem:[%s166 + $0x20] sm:$0xf]
      %v183 = vld [vmem:[%s166 + $0x24] sm:$0xf]
      %v184 = vld [vmem:[%s166 + $0x28] sm:$0xf]
      %v185 = vld [vmem:[%s166 + $0x2c] sm:$0xf]
      %v186 = vld [vmem:[%s166 + $0x30] sm:$0xf]
      %v187 = vld [vmem:[%s166 + $0x34] sm:$0xf]
      %v188 = vld [vmem:[%s166 + $0x38] sm:$0xf]
      %v189 = vld [vmem:[%s166 + $0x3c] sm:$0xf]
      %v190 = vld [vmem:[%s166 + $0x40] sm:$0xf]
      %v191 = vld [vmem:[%s166 + $0x44] sm:$0xf]
      %v192 = vld [vmem:[%s166 + $0x48] sm:$0xf]
      %v193 = vld [vmem:[%s166 + $0x4c] sm:$0xf]
      %v194 = vld [vmem:[%s166 + $0x50] sm:$0xf]
      %v195 = vld [vmem:[%s166 + $0x54] sm:$0xf]
      %v196 = vld [vmem:[%s166 + $0x58] sm:$0xf]
      %v197 = vld [vmem:[%s166 + $0x5c] sm:$0xf]
      %v198 = vld [vmem:[%s166 + $0x60] sm:$0xf]
      %v199 = vld [vmem:[%s166 + $0x64] sm:$0xf]
      %v200 = vld [vmem:[%s166 + $0x68] sm:$0xf]
      %v201 = vld [vmem:[%s166 + $0x6c] sm:$0xf]
      %v202 = vld [vmem:[%s166 + $0x70] sm:$0xf]
      %v203 = vld [vmem:[%s166 + $0x74] sm:$0xf]
      %v204 = vld [vmem:[%s166 + $0x78] sm:$0xf]
      %v205 = vld [vmem:[%s166 + $0x7c] sm:$0xf]
      %v206 = vld [vmem:[%s166 + $0x80] sm:$0xf]
      %v207 = vld [vmem:[%s166 + $0x84] sm:$0xf]
      %v208 = vld [vmem:[%s166 + $0x88] sm:$0xf]
      %v209 = vld [vmem:[%s166 + $0x8c] sm:$0xf]
      %v210 = vld [vmem:[%s166 + $0x90] sm:$0xf]
      %v211 = vld [vmem:[%s166 + $0x94] sm:$0xf]
      %v212 = vld [vmem:[%s166 + $0x98] sm:$0xf]
      %v213 = vld [vmem:[%s166 + $0x9c] sm:$0xf]
      %v214 = vld [vmem:[%s166 + $0xa0] sm:$0xf]
      %v215 = vld [vmem:[%s166 + $0xa4] sm:$0xf]
      %v216 = vld [vmem:[%s166 + $0xa8] sm:$0xf]
      %v217 = vld [vmem:[%s166 + $0xac] sm:$0xf]
      %v218 = vld [vmem:[%s166 + $0xb0] sm:$0xf]
      %v219 = vld [vmem:[%s166 + $0xb4] sm:$0xf]
      %v220 = vld [vmem:[%s166 + $0xb8] sm:$0xf]
      %v221 = vld [vmem:[%s166 + $0xbc] sm:$0xf]
      %v222 = vld [vmem:[%s166 + $0xc0] sm:$0xf]
      %v223 = vld [vmem:[%s166 + $0xc4] sm:$0xf]
      %v224 = vld [vmem:[%s166 + $0xc8] sm:$0xf]
      %v225 = vld [vmem:[%s166 + $0xcc] sm:$0xf]
      %v226 = vld [vmem:[%s166 + $0xd0] sm:$0xf]
      %v227 = vld [vmem:[%s166 + $0xd4] sm:$0xf]
      %v228 = vld [vmem:[%s166 + $0xd8] sm:$0xf]
      %v229 = vld [vmem:[%s166 + $0xdc] sm:$0xf]
      %v230 = vld [vmem:[%s166 + $0xe0] sm:$0xf]
      %v231 = vld [vmem:[%s166 + $0xe4] sm:$0xf]
      %v232 = vld [vmem:[%s166 + $0xe8] sm:$0xf]
      %v233 = vld [vmem:[%s166 + $0xec] sm:$0xf]
      %v234 = vld [vmem:[%s166 + $0xf0] sm:$0xf]
      %v235 = vld [vmem:[%s166 + $0xf4] sm:$0xf]
      %v236 = vld [vmem:[%s166 + $0xf8] sm:$0xf]
      %v237 = vld [vmem:[%s166 + $0xfc] sm:$0xf]
      %v238 = vld [vmem:[%s1] sm:$0xf]
      %v239 = vld [vmem:[%s1 + $0x4] sm:$0xf]
      %v240 = vld [vmem:[%s1 + $0x8] sm:$0xf]
      %v241 = vld [vmem:[%s1 + $0xc] sm:$0xf]
      %v242 = vld [vmem:[%s1 + $0x10] sm:$0xf]
      %v243 = vld [vmem:[%s1 + $0x14] sm:$0xf]
      %v244 = vld [vmem:[%s1 + $0x18] sm:$0xf]
      %v245 = vld [vmem:[%s1 + $0x1c] sm:$0xf]
      %v246 = vld [vmem:[%s1 + $0x20] sm:$0xf]
      %v247 = vld [vmem:[%s1 + $0x24] sm:$0xf]
      %v248 = vld [vmem:[%s1 + $0x28] sm:$0xf]
      %v249 = vld [vmem:[%s1 + $0x2c] sm:$0xf]
      %v250 = vld [vmem:[%s1 + $0x30] sm:$0xf]
      %v251 = vld [vmem:[%s1 + $0x34] sm:$0xf]
      %v252 = vld [vmem:[%s1 + $0x38] sm:$0xf]
      %v253 = vld [vmem:[%s1 + $0x3c] sm:$0xf]
      %v254 = vld [vmem:[%s2] sm:$0x1]
      %v256 = vperm.slane %v254, 0
      %v322 = vunpack.c.l.b16 %v174
      %v323 = vunpack.c.l.b16 %v175
      %v324 = vunpack.c.l.b16 %v176
      %v325 = vunpack.c.l.b16 %v177
      %v326 = vunpack.c.l.b16 %v178
      %v327 = vunpack.c.l.b16 %v179
      %v328 = vunpack.c.l.b16 %v180
      %v329 = vunpack.c.l.b16 %v181
      %v330 = vunpack.c.l.b16 %v182
      %v331 = vunpack.c.l.b16 %v183
      %v332 = vunpack.c.l.b16 %v184
      %v333 = vunpack.c.l.b16 %v185
      %v334 = vunpack.c.l.b16 %v186
      %v335 = vunpack.c.l.b16 %v187
      %v336 = vunpack.c.l.b16 %v188
      %v337 = vunpack.c.l.b16 %v189
      %v338 = vunpack.c.l.b16 %v190
      %v339 = vunpack.c.l.b16 %v191
      %v340 = vunpack.c.l.b16 %v192
      %v341 = vunpack.c.l.b16 %v193
      %v342 = vunpack.c.l.b16 %v194
      %v343 = vunpack.c.l.b16 %v195
      %v344 = vunpack.c.l.b16 %v196
      %v345 = vunpack.c.l.b16 %v197
      %v346 = vunpack.c.l.b16 %v198
      %v347 = vunpack.c.l.b16 %v199
      %v348 = vunpack.c.l.b16 %v200
      %v349 = vunpack.c.l.b16 %v201
      %v350 = vunpack.c.l.b16 %v202
      %v351 = vunpack.c.l.b16 %v203
      %v352 = vunpack.c.l.b16 %v204
      %v353 = vunpack.c.l.b16 %v205
      %v354 = vunpack.c.l.b16 %v206
      %v355 = vunpack.c.l.b16 %v207
      %v356 = vunpack.c.l.b16 %v208
      %v357 = vunpack.c.l.b16 %v209
      %v358 = vunpack.c.l.b16 %v210
      %v359 = vunpack.c.l.b16 %v211
      %v360 = vunpack.c.l.b16 %v212
      %v361 = vunpack.c.l.b16 %v213
      %v362 = vunpack.c.l.b16 %v214
      %v363 = vunpack.c.l.b16 %v215
      %v364 = vunpack.c.l.b16 %v216
      %v365 = vunpack.c.l.b16 %v217
      %v366 = vunpack.c.l.b16 %v218
      %v367 = vunpack.c.l.b16 %v219
      %v368 = vunpack.c.l.b16 %v220
      %v369 = vunpack.c.l.b16 %v221
      %v370 = vunpack.c.l.b16 %v222
      %v371 = vunpack.c.l.b16 %v223
      %v372 = vunpack.c.l.b16 %v224
      %v373 = vunpack.c.l.b16 %v225
      %v374 = vunpack.c.l.b16 %v226
      %v375 = vunpack.c.l.b16 %v227
      %v376 = vunpack.c.l.b16 %v228
      %v377 = vunpack.c.l.b16 %v229
      %v378 = vunpack.c.l.b16 %v230
      %v379 = vunpack.c.l.b16 %v231
      %v380 = vunpack.c.l.b16 %v232
      %v381 = vunpack.c.l.b16 %v233
      %v382 = vunpack.c.l.b16 %v234
      %v383 = vunpack.c.l.b16 %v235
      %v384 = vunpack.c.l.b16 %v236
      %v385 = vunpack.c.l.b16 %v237
      %v386 = vpack.c.b16 %v323, %v322
      %v387 = vpack.c.b16 %v325, %v324
      %v388 = vpack.c.b16 %v327, %v326
      %v389 = vpack.c.b16 %v329, %v328
      %v390 = vpack.c.b16 %v331, %v330
      %v391 = vpack.c.b16 %v333, %v332
      %v392 = vpack.c.b16 %v335, %v334
      %v393 = vpack.c.b16 %v337, %v336
      %v394 = vpack.c.b16 %v339, %v338
      %v395 = vpack.c.b16 %v341, %v340
      %v396 = vpack.c.b16 %v343, %v342
      %v397 = vpack.c.b16 %v345, %v344
      %v398 = vpack.c.b16 %v347, %v346
      %v399 = vpack.c.b16 %v349, %v348
      %v400 = vpack.c.b16 %v351, %v350
      %v401 = vpack.c.b16 %v353, %v352
      %v402 = vpack.c.b16 %v355, %v354
      %v403 = vpack.c.b16 %v357, %v356
      %v404 = vpack.c.b16 %v359, %v358
      %v405 = vpack.c.b16 %v361, %v360
      %v406 = vpack.c.b16 %v363, %v362
      %v407 = vpack.c.b16 %v365, %v364
      %v408 = vpack.c.b16 %v367, %v366
      %v409 = vpack.c.b16 %v369, %v368
      %v410 = vpack.c.b16 %v371, %v370
      %v411 = vpack.c.b16 %v373, %v372
      %v412 = vpack.c.b16 %v375, %v374
      %v413 = vpack.c.b16 %v377, %v376
      %v414 = vpack.c.b16 %v379, %v378
      %v415 = vpack.c.b16 %v381, %v380
      %v416 = vpack.c.b16 %v383, %v382
      %v417 = vpack.c.b16 %v385, %v384
      %v466 = vunpack.c.l.b16 %v238
      %v467 = vunpack.c.l.b16 %v239
      %v468 = vunpack.c.l.b16 %v240
      %v469 = vunpack.c.l.b16 %v241
      %v470 = vunpack.c.l.b16 %v242
      %v471 = vunpack.c.l.b16 %v243
      %v472 = vunpack.c.l.b16 %v244
      %v473 = vunpack.c.l.b16 %v245
      %v474 = vunpack.c.l.b16 %v246
      %v475 = vunpack.c.l.b16 %v247
      %v476 = vunpack.c.l.b16 %v248
      %v477 = vunpack.c.l.b16 %v249
      %v478 = vunpack.c.l.b16 %v250
      %v479 = vunpack.c.l.b16 %v251
      %v480 = vunpack.c.l.b16 %v252
      %v481 = vunpack.c.l.b16 %v253
      %v482 = vpack.c.b16 %v467, %v466
      %v483 = vpack.c.b16 %v469, %v468
      %v484 = vpack.c.b16 %v471, %v470
      %v485 = vpack.c.b16 %v473, %v472
      %v486 = vpack.c.b16 %v475, %v474
      %v487 = vpack.c.b16 %v477, %v476
      %v488 = vpack.c.b16 %v479, %v478
      %v489 = vpack.c.b16 %v481, %v480
      %498 = vmatpush.bf16.msra.mxu0 %v489
      %499 = vmatpush.bf16.msra.mxu0 %v488
      %500 = vmatpush.bf16.msra.mxu0 %v487
      %501 = vmatpush.bf16.msra.mxu0 %v486
      %502 = vmatpush.bf16.msra.mxu0 %v485
      %503 = vmatpush.bf16.msra.mxu0 %v484
      %504 = vmatpush.bf16.msra.mxu0 %v483
      %505 = vmatpush.bf16.msra.mxu0 %v482
      %506 = vmatmul.bf16.gmra.mxu0 %v386
      %v507 = vpop.f32.mrf.mxu0
      %v508 = vadd.f32 %v256, %v507
      %v509 = vpop.f32.mrf.mxu0
      %v510 = vadd.f32 %v256, %v509
      %511 = vmatmul.bf16.gmra.mxu0 %v387
      %v512 = vpop.f32.mrf.mxu0
      %v513 = vadd.f32 %v256, %v512
      %v514 = vpop.f32.mrf.mxu0
      %v515 = vadd.f32 %v256, %v514
      %516 = vmatmul.bf16.gmra.mxu0 %v388
      %v517 = vpop.f32.mrf.mxu0
      %v518 = vadd.f32 %v256, %v517
      %v519 = vpop.f32.mrf.mxu0
      %v520 = vadd.f32 %v256, %v519
      %521 = vmatmul.bf16.gmra.mxu0 %v389
      %v522 = vpop.f32.mrf.mxu0
      %v523 = vadd.f32 %v256, %v522
      %v524 = vpop.f32.mrf.mxu0
      %v525 = vadd.f32 %v256, %v524
      %526 = vmatmul.bf16.gmra.mxu0 %v390
      %v527 = vpop.f32.mrf.mxu0
      %v528 = vadd.f32 %v256, %v527
      %v529 = vpop.f32.mrf.mxu0
      %v530 = vadd.f32 %v256, %v529
      %531 = vmatmul.bf16.gmra.mxu0 %v391
      %v532 = vpop.f32.mrf.mxu0
      %v533 = vadd.f32 %v256, %v532
      %v534 = vpop.f32.mrf.mxu0
      %v535 = vadd.f32 %v256, %v534
      %536 = vmatmul.bf16.gmra.mxu0 %v392
      %v537 = vpop.f32.mrf.mxu0
      %v538 = vadd.f32 %v256, %v537
      %v539 = vpop.f32.mrf.mxu0
      %v540 = vadd.f32 %v256, %v539
      %541 = vmatmul.bf16.gmra.mxu0 %v393
      %v542 = vpop.f32.mrf.mxu0
      %v543 = vadd.f32 %v256, %v542
      %v544 = vpop.f32.mrf.mxu0
      %v545 = vadd.f32 %v256, %v544
      %546 = vmatmul.bf16.gmra.mxu0 %v394
      %v547 = vpop.f32.mrf.mxu0
      %v548 = vadd.f32 %v256, %v547
      %v549 = vpop.f32.mrf.mxu0
      %v550 = vadd.f32 %v256, %v549
      %551 = vmatmul.bf16.gmra.mxu0 %v395
      %v552 = vpop.f32.mrf.mxu0
      %v553 = vadd.f32 %v256, %v552
      %v554 = vpop.f32.mrf.mxu0
      %v555 = vadd.f32 %v256, %v554
      %556 = vmatmul.bf16.gmra.mxu0 %v396
      %v557 = vpop.f32.mrf.mxu0
      %v558 = vadd.f32 %v256, %v557
      %v559 = vpop.f32.mrf.mxu0
      %v560 = vadd.f32 %v256, %v559
      %561 = vmatmul.bf16.gmra.mxu0 %v397
      %v562 = vpop.f32.mrf.mxu0
      %v563 = vadd.f32 %v256, %v562
      %v564 = vpop.f32.mrf.mxu0
      %v565 = vadd.f32 %v256, %v564
      %566 = vmatmul.bf16.gmra.mxu0 %v398
      %v567 = vpop.f32.mrf.mxu0
      %v568 = vadd.f32 %v256, %v567
      %v569 = vpop.f32.mrf.mxu0
      %v570 = vadd.f32 %v256, %v569
      %571 = vmatmul.bf16.gmra.mxu0 %v399
      %v572 = vpop.f32.mrf.mxu0
      %v573 = vadd.f32 %v256, %v572
      %v574 = vpop.f32.mrf.mxu0
      %v575 = vadd.f32 %v256, %v574
      %576 = vmatmul.bf16.gmra.mxu0 %v400
      %v577 = vpop.f32.mrf.mxu0
      %v578 = vadd.f32 %v256, %v577
      %v579 = vpop.f32.mrf.mxu0
      %v580 = vadd.f32 %v256, %v579
      %581 = vmatmul.bf16.gmra.mxu0 %v401
      %v582 = vpop.f32.mrf.mxu0
      %v583 = vadd.f32 %v256, %v582
      %v584 = vpop.f32.mrf.mxu0
      %v585 = vadd.f32 %v256, %v584
      %586 = vmatmul.bf16.gmra.mxu0 %v402
      %v587 = vpop.f32.mrf.mxu0
      %v588 = vadd.f32 %v256, %v587
      %v589 = vpop.f32.mrf.mxu0
      %v590 = vadd.f32 %v256, %v589
      %591 = vmatmul.bf16.gmra.mxu0 %v403
      %v592 = vpop.f32.mrf.mxu0
      %v593 = vadd.f32 %v256, %v592
      %v594 = vpop.f32.mrf.mxu0
      %v595 = vadd.f32 %v256, %v594
      %596 = vmatmul.bf16.gmra.mxu0 %v404
      %v597 = vpop.f32.mrf.mxu0
      %v598 = vadd.f32 %v256, %v597
      %v599 = vpop.f32.mrf.mxu0
      %v600 = vadd.f32 %v256, %v599
      %601 = vmatmul.bf16.gmra.mxu0 %v405
      %v602 = vpop.f32.mrf.mxu0
      %v603 = vadd.f32 %v256, %v602
      %v604 = vpop.f32.mrf.mxu0
      %v605 = vadd.f32 %v256, %v604
      %606 = vmatmul.bf16.gmra.mxu0 %v406
      %v607 = vpop.f32.mrf.mxu0
      %v608 = vadd.f32 %v256, %v607
      %v609 = vpop.f32.mrf.mxu0
      %v610 = vadd.f32 %v256, %v609
      %611 = vmatmul.bf16.gmra.mxu0 %v407
      %v612 = vpop.f32.mrf.mxu0
      %v613 = vadd.f32 %v256, %v612
      %v614 = vpop.f32.mrf.mxu0
      %v615 = vadd.f32 %v256, %v614
      %616 = vmatmul.bf16.gmra.mxu0 %v408
      %v617 = vpop.f32.mrf.mxu0
      %v618 = vadd.f32 %v256, %v617
      %v619 = vpop.f32.mrf.mxu0
      %v620 = vadd.f32 %v256, %v619
      %621 = vmatmul.bf16.gmra.mxu0 %v409
      %v622 = vpop.f32.mrf.mxu0
      %v623 = vadd.f32 %v256, %v622
      %v624 = vpop.f32.mrf.mxu0
      %v625 = vadd.f32 %v256, %v624
      %626 = vmatmul.bf16.gmra.mxu0 %v410
      %v627 = vpop.f32.mrf.mxu0
      %v628 = vadd.f32 %v256, %v627
      %v629 = vpop.f32.mrf.mxu0
      %v630 = vadd.f32 %v256, %v629
      %631 = vmatmul.bf16.gmra.mxu0 %v411
      %v632 = vpop.f32.mrf.mxu0
      %v633 = vadd.f32 %v256, %v632
      %v634 = vpop.f32.mrf.mxu0
      %v635 = vadd.f32 %v256, %v634
      %636 = vmatmul.bf16.gmra.mxu0 %v412
      %v637 = vpop.f32.mrf.mxu0
      %v638 = vadd.f32 %v256, %v637
      %v639 = vpop.f32.mrf.mxu0
      %v640 = vadd.f32 %v256, %v639
      %641 = vmatmul.bf16.gmra.mxu0 %v413
      %v642 = vpop.f32.mrf.mxu0
      %v643 = vadd.f32 %v256, %v642
      %v644 = vpop.f32.mrf.mxu0
      %v645 = vadd.f32 %v256, %v644
      %646 = vmatmul.bf16.gmra.mxu0 %v414
      %v647 = vpop.f32.mrf.mxu0
      %v648 = vadd.f32 %v256, %v647
      %v649 = vpop.f32.mrf.mxu0
      %v650 = vadd.f32 %v256, %v649
      %651 = vmatmul.bf16.gmra.mxu0 %v415
      %v652 = vpop.f32.mrf.mxu0
      %v653 = vadd.f32 %v256, %v652
      %v654 = vpop.f32.mrf.mxu0
      %v655 = vadd.f32 %v256, %v654
      %656 = vmatmul.bf16.gmra.mxu0 %v416
      %v657 = vpop.f32.mrf.mxu0
      %v658 = vadd.f32 %v256, %v657
      %v659 = vpop.f32.mrf.mxu0
      %v660 = vadd.f32 %v256, %v659
      %661 = vmatmul.bf16.gmra.mxu0 %v417
      %v662 = vpop.f32.mrf.mxu0
      %v663 = vadd.f32 %v256, %v662
      %v664 = vpop.f32.mrf.mxu0
      %v665 = vadd.f32 %v256, %v664
      %666 = vdwg.mxu0
      %vm667 = vcmp.ge.f32.partialorder %v508, 0.0
      %vm668 = vcmp.ge.f32.partialorder %v510, 0.0
      %vm669 = vcmp.ge.f32.partialorder %v513, 0.0
      %vm670 = vcmp.ge.f32.partialorder %v515, 0.0
      %vm671 = vcmp.ge.f32.partialorder %v518, 0.0
      %vm672 = vcmp.ge.f32.partialorder %v520, 0.0
      %vm673 = vcmp.ge.f32.partialorder %v523, 0.0
      %vm674 = vcmp.ge.f32.partialorder %v525, 0.0
      %vm675 = vcmp.ge.f32.partialorder %v528, 0.0
      %vm676 = vcmp.ge.f32.partialorder %v530, 0.0
      %vm677 = vcmp.ge.f32.partialorder %v533, 0.0
      %vm678 = vcmp.ge.f32.partialorder %v535, 0.0
      %vm679 = vcmp.ge.f32.partialorder %v538, 0.0
      %vm680 = vcmp.ge.f32.partialorder %v540, 0.0
      %vm681 = vcmp.ge.f32.partialorder %v543, 0.0
      %vm682 = vcmp.ge.f32.partialorder %v545, 0.0
      %vm683 = vcmp.ge.f32.partialorder %v548, 0.0
      %vm684 = vcmp.ge.f32.partialorder %v550, 0.0
      %vm685 = vcmp.ge.f32.partialorder %v553, 0.0
      %vm686 = vcmp.ge.f32.partialorder %v555, 0.0
      %vm687 = vcmp.ge.f32.partialorder %v558, 0.0
      %vm688 = vcmp.ge.f32.partialorder %v560, 0.0
      %vm689 = vcmp.ge.f32.partialorder %v563, 0.0
      %vm690 = vcmp.ge.f32.partialorder %v565, 0.0
      %vm691 = vcmp.ge.f32.partialorder %v568, 0.0
      %vm692 = vcmp.ge.f32.partialorder %v570, 0.0
      %vm693 = vcmp.ge.f32.partialorder %v573, 0.0
      %vm694 = vcmp.ge.f32.partialorder %v575, 0.0
      %vm695 = vcmp.ge.f32.partialorder %v578, 0.0
      %vm696 = vcmp.ge.f32.partialorder %v580, 0.0
      %vm697 = vcmp.ge.f32.partialorder %v583, 0.0
      %vm698 = vcmp.ge.f32.partialorder %v585, 0.0
      %vm699 = vcmp.ge.f32.partialorder %v588, 0.0
      %vm700 = vcmp.ge.f32.partialorder %v590, 0.0
      %vm701 = vcmp.ge.f32.partialorder %v593, 0.0
      %vm702 = vcmp.ge.f32.partialorder %v595, 0.0
      %vm703 = vcmp.ge.f32.partialorder %v598, 0.0
      %vm704 = vcmp.ge.f32.partialorder %v600, 0.0
      %vm705 = vcmp.ge.f32.partialorder %v603, 0.0
      %vm706 = vcmp.ge.f32.partialorder %v605, 0.0
      %vm707 = vcmp.ge.f32.partialorder %v608, 0.0
      %vm708 = vcmp.ge.f32.partialorder %v610, 0.0
      %vm709 = vcmp.ge.f32.partialorder %v613, 0.0
      %vm710 = vcmp.ge.f32.partialorder %v615, 0.0
      %vm711 = vcmp.ge.f32.partialorder %v618, 0.0
      %vm712 = vcmp.ge.f32.partialorder %v620, 0.0
      %vm713 = vcmp.ge.f32.partialorder %v623, 0.0
      %vm714 = vcmp.ge.f32.partialorder %v625, 0.0
      %vm715 = vcmp.ge.f32.partialorder %v628, 0.0
      %vm716 = vcmp.ge.f32.partialorder %v630, 0.0
      %vm717 = vcmp.ge.f32.partialorder %v633, 0.0
      %vm718 = vcmp.ge.f32.partialorder %v635, 0.0
      %vm719 = vcmp.ge.f32.partialorder %v638, 0.0
      %vm720 = vcmp.ge.f32.partialorder %v640, 0.0
      %vm721 = vcmp.ge.f32.partialorder %v643, 0.0
      %vm722 = vcmp.ge.f32.partialorder %v645, 0.0
      %vm723 = vcmp.ge.f32.partialorder %v648, 0.0
      %vm724 = vcmp.ge.f32.partialorder %v650, 0.0
      %vm725 = vcmp.ge.f32.partialorder %v653, 0.0
      %vm726 = vcmp.ge.f32.partialorder %v655, 0.0
      %vm727 = vcmp.ge.f32.partialorder %v658, 0.0
      %vm728 = vcmp.ge.f32.partialorder %v660, 0.0
      %vm729 = vcmp.ge.f32.partialorder %v663, 0.0
      %vm730 = vcmp.ge.f32.partialorder %v665, 0.0
      %v731 = vmul.f32 %v508, 0.02
      %v732 = vmul.f32 %v510, 0.02
      %v733 = vmul.f32 %v513, 0.02
      %v734 = vmul.f32 %v515, 0.02
      %v735 = vmul.f32 %v518, 0.02
      %v736 = vmul.f32 %v520, 0.02
      %v737 = vmul.f32 %v523, 0.02
      %v738 = vmul.f32 %v525, 0.02
      %v739 = vmul.f32 %v528, 0.02
      %v740 = vmul.f32 %v530, 0.02
      %v741 = vmul.f32 %v533, 0.02
      %v742 = vmul.f32 %v535, 0.02
      %v743 = vmul.f32 %v538, 0.02
      %v744 = vmul.f32 %v540, 0.02
      %v745 = vmul.f32 %v543, 0.02
      %v746 = vmul.f32 %v545, 0.02
      %v747 = vmul.f32 %v548, 0.02
      %v748 = vmul.f32 %v550, 0.02
      %v749 = vmul.f32 %v553, 0.02
      %v750 = vmul.f32 %v555, 0.02
      %v751 = vmul.f32 %v558, 0.02
      %v752 = vmul.f32 %v560, 0.02
      %v753 = vmul.f32 %v563, 0.02
      %v754 = vmul.f32 %v565, 0.02
      %v755 = vmul.f32 %v568, 0.02
      %v756 = vmul.f32 %v570, 0.02
      %v757 = vmul.f32 %v573, 0.02
      %v758 = vmul.f32 %v575, 0.02
      %v759 = vmul.f32 %v578, 0.02
      %v760 = vmul.f32 %v580, 0.02
      %v761 = vmul.f32 %v583, 0.02
      %v762 = vmul.f32 %v585, 0.02
      %v763 = vmul.f32 %v588, 0.02
      %v764 = vmul.f32 %v590, 0.02
      %v765 = vmul.f32 %v593, 0.02
      %v766 = vmul.f32 %v595, 0.02
      %v767 = vmul.f32 %v598, 0.02
      %v768 = vmul.f32 %v600, 0.02
      %v769 = vmul.f32 %v603, 0.02
      %v770 = vmul.f32 %v605, 0.02
      %v771 = vmul.f32 %v608, 0.02
      %v772 = vmul.f32 %v610, 0.02
      %v773 = vmul.f32 %v613, 0.02
      %v774 = vmul.f32 %v615, 0.02
      %v775 = vmul.f32 %v618, 0.02
      %v776 = vmul.f32 %v620, 0.02
      %v777 = vmul.f32 %v623, 0.02
      %v778 = vmul.f32 %v625, 0.02
      %v779 = vmul.f32 %v628, 0.02
      %v780 = vmul.f32 %v630, 0.02
      %v781 = vmul.f32 %v633, 0.02
      %v782 = vmul.f32 %v635, 0.02
      %v783 = vmul.f32 %v638, 0.02
      %v784 = vmul.f32 %v640, 0.02
      %v785 = vmul.f32 %v643, 0.02
      %v786 = vmul.f32 %v645, 0.02
      %v787 = vmul.f32 %v648, 0.02
      %v788 = vmul.f32 %v650, 0.02
      %v789 = vmul.f32 %v653, 0.02
      %v790 = vmul.f32 %v655, 0.02
      %v791 = vmul.f32 %v658, 0.02
      %v792 = vmul.f32 %v660, 0.02
      %v793 = vmul.f32 %v663, 0.02
      %v794 = vmul.f32 %v665, 0.02
      %v795 = vsel %vm667, %v508, %v731
      %v796 = vsel %vm668, %v510, %v732
      %v797 = vsel %vm669, %v513, %v733
      %v798 = vsel %vm670, %v515, %v734
      %v799 = vsel %vm671, %v518, %v735
      %v800 = vsel %vm672, %v520, %v736
      %v801 = vsel %vm673, %v523, %v737
      %v802 = vsel %vm674, %v525, %v738
      %v803 = vsel %vm675, %v528, %v739
      %v804 = vsel %vm676, %v530, %v740
      %v805 = vsel %vm677, %v533, %v741
      %v806 = vsel %vm678, %v535, %v742
      %v807 = vsel %vm679, %v538, %v743
      %v808 = vsel %vm680, %v540, %v744
      %v809 = vsel %vm681, %v543, %v745
      %v810 = vsel %vm682, %v545, %v746
      %v811 = vsel %vm683, %v548, %v747
      %v812 = vsel %vm684, %v550, %v748
      %v813 = vsel %vm685, %v553, %v749
      %v814 = vsel %vm686, %v555, %v750
      %v815 = vsel %vm687, %v558, %v751
      %v816 = vsel %vm688, %v560, %v752
      %v817 = vsel %vm689, %v563, %v753
      %v818 = vsel %vm690, %v565, %v754
      %v819 = vsel %vm691, %v568, %v755
      %v820 = vsel %vm692, %v570, %v756
      %v821 = vsel %vm693, %v573, %v757
      %v822 = vsel %vm694, %v575, %v758
      %v823 = vsel %vm695, %v578, %v759
      %v824 = vsel %vm696, %v580, %v760
      %v825 = vsel %vm697, %v583, %v761
      %v826 = vsel %vm698, %v585, %v762
      %v827 = vsel %vm699, %v588, %v763
      %v828 = vsel %vm700, %v590, %v764
      %v829 = vsel %vm701, %v593, %v765
      %v830 = vsel %vm702, %v595, %v766
      %v831 = vsel %vm703, %v598, %v767
      %v832 = vsel %vm704, %v600, %v768
      %v833 = vsel %vm705, %v603, %v769
      %v834 = vsel %vm706, %v605, %v770
      %v835 = vsel %vm707, %v608, %v771
      %v836 = vsel %vm708, %v610, %v772
      %v837 = vsel %vm709, %v613, %v773
      %v838 = vsel %vm710, %v615, %v774
      %v839 = vsel %vm711, %v618, %v775
      %v840 = vsel %vm712, %v620, %v776
      %v841 = vsel %vm713, %v623, %v777
      %v842 = vsel %vm714, %v625, %v778
      %v843 = vsel %vm715, %v628, %v779
      %v844 = vsel %vm716, %v630, %v780
      %v845 = vsel %vm717, %v633, %v781
      %v846 = vsel %vm718, %v635, %v782
      %v847 = vsel %vm719, %v638, %v783
      %v848 = vsel %vm720, %v640, %v784
      %v849 = vsel %vm721, %v643, %v785
      %v850 = vsel %vm722, %v645, %v786
      %v851 = vsel %vm723, %v648, %v787
      %v852 = vsel %vm724, %v650, %v788
      %v853 = vsel %vm725, %v653, %v789
      %v854 = vsel %vm726, %v655, %v790
      %v855 = vsel %vm727, %v658, %v791
      %v856 = vsel %vm728, %v660, %v792
      %v857 = vsel %vm729, %v663, %v793
      %v858 = vsel %vm730, %v665, %v794
      %v859 = vpack.c.bf16 %v795, %v795
      %v860 = vpack.c.bf16 %v796, %v796
      %v861 = vpack.c.bf16 %v797, %v797
      %v862 = vpack.c.bf16 %v798, %v798
      %v863 = vpack.c.bf16 %v799, %v799
      %v864 = vpack.c.bf16 %v800, %v800
      %v865 = vpack.c.bf16 %v801, %v801
      %v866 = vpack.c.bf16 %v802, %v802
      %v867 = vpack.c.bf16 %v803, %v803
      %v868 = vpack.c.bf16 %v804, %v804
      %v869 = vpack.c.bf16 %v805, %v805
      %v870 = vpack.c.bf16 %v806, %v806
      %v871 = vpack.c.bf16 %v807, %v807
      %v872 = vpack.c.bf16 %v808, %v808
      %v873 = vpack.c.bf16 %v809, %v809
      %v874 = vpack.c.bf16 %v810, %v810
      %v875 = vpack.c.bf16 %v811, %v811
      %v876 = vpack.c.bf16 %v812, %v812
      %v877 = vpack.c.bf16 %v813, %v813
      %v878 = vpack.c.bf16 %v814, %v814
      %v879 = vpack.c.bf16 %v815, %v815
      %v880 = vpack.c.bf16 %v816, %v816
      %v881 = vpack.c.bf16 %v817, %v817
      %v882 = vpack.c.bf16 %v818, %v818
      %v883 = vpack.c.bf16 %v819, %v819
      %v884 = vpack.c.bf16 %v820, %v820
      %v885 = vpack.c.bf16 %v821, %v821
      %v886 = vpack.c.bf16 %v822, %v822
      %v887 = vpack.c.bf16 %v823, %v823
      %v888 = vpack.c.bf16 %v824, %v824
      %v889 = vpack.c.bf16 %v825, %v825
      %v890 = vpack.c.bf16 %v826, %v826
      %v891 = vpack.c.bf16 %v827, %v827
      %v892 = vpack.c.bf16 %v828, %v828
      %v893 = vpack.c.bf16 %v829, %v829
      %v894 = vpack.c.bf16 %v830, %v830
      %v895 = vpack.c.bf16 %v831, %v831
      %v896 = vpack.c.bf16 %v832, %v832
      %v897 = vpack.c.bf16 %v833, %v833
      %v898 = vpack.c.bf16 %v834, %v834
      %v899 = vpack.c.bf16 %v835, %v835
      %v900 = vpack.c.bf16 %v836, %v836
      %v901 = vpack.c.bf16 %v837, %v837
      %v902 = vpack.c.bf16 %v838, %v838
      %v903 = vpack.c.bf16 %v839, %v839
      %v904 = vpack.c.bf16 %v840, %v840
      %v905 = vpack.c.bf16 %v841, %v841
      %v906 = vpack.c.bf16 %v842, %v842
      %v907 = vpack.c.bf16 %v843, %v843
      %v908 = vpack.c.bf16 %v844, %v844
      %v909 = vpack.c.bf16 %v845, %v845
      %v910 = vpack.c.bf16 %v846, %v846
      %v911 = vpack.c.bf16 %v847, %v847
      %v912 = vpack.c.bf16 %v848, %v848
      %v913 = vpack.c.bf16 %v849, %v849
      %v914 = vpack.c.bf16 %v850, %v850
      %v915 = vpack.c.bf16 %v851, %v851
      %v916 = vpack.c.bf16 %v852, %v852
      %v917 = vpack.c.bf16 %v853, %v853
      %v918 = vpack.c.bf16 %v854, %v854
      %v919 = vpack.c.bf16 %v855, %v855
      %v920 = vpack.c.bf16 %v856, %v856
      %v921 = vpack.c.bf16 %v857, %v857
      %v922 = vpack.c.bf16 %v858, %v858
      %923 = vst [vmem:[%s172] sm:$0xf] %v859
      %924 = vst [vmem:[%s172 + $0x4] sm:$0xf] %v860
      %925 = vst [vmem:[%s172 + $0x8] sm:$0xf] %v861
      %926 = vst [vmem:[%s172 + $0xc] sm:$0xf] %v862
      %927 = vst [vmem:[%s172 + $0x10] sm:$0xf] %v863
      %928 = vst [vmem:[%s172 + $0x14] sm:$0xf] %v864
      %929 = vst [vmem:[%s172 + $0x18] sm:$0xf] %v865
      %930 = vst [vmem:[%s172 + $0x1c] sm:$0xf] %v866
      %931 = vst [vmem:[%s172 + $0x20] sm:$0xf] %v867
      %932 = vst [vmem:[%s172 + $0x24] sm:$0xf] %v868
      %933 = vst [vmem:[%s172 + $0x28] sm:$0xf] %v869
      %934 = vst [vmem:[%s172 + $0x2c] sm:$0xf] %v870
      %935 = vst [vmem:[%s172 + $0x30] sm:$0xf] %v871
      %936 = vst [vmem:[%s172 + $0x34] sm:$0xf] %v872
      %937 = vst [vmem:[%s172 + $0x38] sm:$0xf] %v873
      %938 = vst [vmem:[%s172 + $0x3c] sm:$0xf] %v874
      %939 = vst [vmem:[%s172 + $0x40] sm:$0xf] %v875
      %940 = vst [vmem:[%s172 + $0x44] sm:$0xf] %v876
      %941 = vst [vmem:[%s172 + $0x48] sm:$0xf] %v877
      %942 = vst [vmem:[%s172 + $0x4c] sm:$0xf] %v878
      %943 = vst [vmem:[%s172 + $0x50] sm:$0xf] %v879
      %944 = vst [vmem:[%s172 + $0x54] sm:$0xf] %v880
      %945 = vst [vmem:[%s172 + $0x58] sm:$0xf] %v881
      %946 = vst [vmem:[%s172 + $0x5c] sm:$0xf] %v882
      %947 = vst [vmem:[%s172 + $0x60] sm:$0xf] %v883
      %948 = vst [vmem:[%s172 + $0x64] sm:$0xf] %v884
      %949 = vst [vmem:[%s172 + $0x68] sm:$0xf] %v885
      %950 = vst [vmem:[%s172 + $0x6c] sm:$0xf] %v886
      %951 = vst [vmem:[%s172 + $0x70] sm:$0xf] %v887
      %952 = vst [vmem:[%s172 + $0x74] sm:$0xf] %v888
      %953 = vst [vmem:[%s172 + $0x78] sm:$0xf] %v889
      %954 = vst [vmem:[%s172 + $0x7c] sm:$0xf] %v890
      %955 = vst [vmem:[%s172 + $0x80] sm:$0xf] %v891
      %956 = vst [vmem:[%s172 + $0x84] sm:$0xf] %v892
      %957 = vst [vmem:[%s172 + $0x88] sm:$0xf] %v893
      %958 = vst [vmem:[%s172 + $0x8c] sm:$0xf] %v894
      %959 = vst [vmem:[%s172 + $0x90] sm:$0xf] %v895
      %960 = vst [vmem:[%s172 + $0x94] sm:$0xf] %v896
      %961 = vst [vmem:[%s172 + $0x98] sm:$0xf] %v897
      %962 = vst [vmem:[%s172 + $0x9c] sm:$0xf] %v898
      %963 = vst [vmem:[%s172 + $0xa0] sm:$0xf] %v899
      %964 = vst [vmem:[%s172 + $0xa4] sm:$0xf] %v900
      %965 = vst [vmem:[%s172 + $0xa8] sm:$0xf] %v901
      %966 = vst [vmem:[%s172 + $0xac] sm:$0xf] %v902
      %967 = vst [vmem:[%s172 + $0xb0] sm:$0xf] %v903
      %968 = vst [vmem:[%s172 + $0xb4] sm:$0xf] %v904
      %969 = vst [vmem:[%s172 + $0xb8] sm:$0xf] %v905
      %970 = vst [vmem:[%s172 + $0xbc] sm:$0xf] %v906
      %971 = vst [vmem:[%s172 + $0xc0] sm:$0xf] %v907
      %972 = vst [vmem:[%s172 + $0xc4] sm:$0xf] %v908
      %973 = vst [vmem:[%s172 + $0xc8] sm:$0xf] %v909
      %974 = vst [vmem:[%s172 + $0xcc] sm:$0xf] %v910
      %975 = vst [vmem:[%s172 + $0xd0] sm:$0xf] %v911
      %976 = vst [vmem:[%s172 + $0xd4] sm:$0xf] %v912
      %977 = vst [vmem:[%s172 + $0xd8] sm:$0xf] %v913
      %978 = vst [vmem:[%s172 + $0xdc] sm:$0xf] %v914
      %979 = vst [vmem:[%s172 + $0xe0] sm:$0xf] %v915
      %980 = vst [vmem:[%s172 + $0xe4] sm:$0xf] %v916
      %981 = vst [vmem:[%s172 + $0xe8] sm:$0xf] %v917
      %982 = vst [vmem:[%s172 + $0xec] sm:$0xf] %v918
      %983 = vst [vmem:[%s172 + $0xf0] sm:$0xf] %v919
      %984 = vst [vmem:[%s172 + $0xf4] sm:$0xf] %v920
      %985 = vst [vmem:[%s172 + $0xf8] sm:$0xf] %v921
      %986 = vst [vmem:[%s172 + $0xfc] sm:$0xf] %v922
      %s987 = smul.u32 64, %s14
      %p988 = scmp.lt.s32.totalorder %s987, 255
      %s989 = scalar_select %p988, %s987, 255
      %s990 = smul.addr %s989, 4
      %s991 = scalar_lea.vmem %s3, %s990
      // Predicated region
      $region33: #{veegan_discriminator_forward.4} parent=31 // pred_check
        %p992 = pneg %p100
      $region34: #{veegan_discriminator_forward.4} parent=31 // pred_check_branch
        %994 = sbr.rel (%p992) target = $region36
      $region35: #{veegan_discriminator_forward.4} parent=31 // pred_region
        %s995 = smul.u32 64, %s14
      $region36: #{veegan_discriminator_forward.4} parent=31 // pred_fallthru
        _
    $region32: #{veegan_discriminator_forward.4} parent=5 // pred_fallthru
      _
    %p996 = scmp.le.s32.totalorder 2, %s9
    // Predicated region
    $region37: #{veegan_discriminator_forward.4} parent=5 // pred_check
      %p997 = pneg %p996
    $region38: #{veegan_discriminator_forward.4} parent=5 // pred_check_branch
      %999 = sbr.rel (%p997) target = $region40
    $region39: #{veegan_discriminator_forward.4} parent=5 // pred_region
      %s1000 = ssub.s32 %s9, 2
      // Predicated region
      $region41: #{veegan_discriminator_forward.4} parent=39 // pred_check
        %p1001 = pneg %p106
      $region42: #{veegan_discriminator_forward.4} parent=39 // pred_check_branch
        %1003 = sbr.rel (%p1001) target = $region44
      $region43: #{veegan_discriminator_forward.4} parent=39 // pred_region
        %s1004 = smul.u32 64, %s15
        %p1005 = scmp.lt.s32.totalorder %s1004, 255
        %s1006 = scalar_select %p1005, %s1004, 255
        %s1007 = smul.addr %s1006, 4
        %s1008 = scalar_lea.vmem %s3, %s1007
      $region44: #{veegan_discriminator_forward.4} parent=39 // pred_fallthru
        _
    $region40: #{veegan_discriminator_forward.4} parent=5 // pred_fallthru
      _
  $region6: #{veegan_discriminator_forward.4} parent=0 // loop_footer
    %s13 = sadd.s32 1, %s9
  $region7: #{veegan_discriminator_forward.4} parent=0 // loop_footer_branch
    %8 = sbr.rel target = $region3
  $region8: #{veegan_discriminator_forward.4} parent=0 // loop_exit
    _

// kernel: veegan_discriminator_forward.5
$region0: #{veegan_discriminator_forward.5}
  #allocation0 [shape = 'u32[]', space=smem, size = 0x4, offset = 0x4, fixed_abs, tag = 'smem constant byte address 0x4 - core index']
  #allocation1 [shape = 'u32[72,128]{1,0:T(1,128)}', space=vmem, size = 0x9000, scoped, tag = 'internal scratch']
  %s0 = inlined_call_operand.vmem [shape: bf16[352,256], index: 0, kind: input, shape index: {}]
  %s1 = inlined_call_operand.vmem [shape: bf16[256,128], index: 1, kind: input, shape index: {}]
  %s2 = inlined_call_operand.vmem [shape: f32[1,128], index: 2, kind: input, shape index: {}]
  %s3 = inlined_call_operand.vmem [shape: bf16[352,128], index: 3, kind: output, shape index: {}]
  %s4 = sld [smem:[#allocation0]]
  $region22: #{veegan_discriminator_forward.5} parent=0
    _
  %s6 = ssub.s32 1, %s4
  %s7 = scalar_select 0, %s6, %s4
  // Predicated region
  $region2: #{veegan_discriminator_forward.5} parent=0 // pred_check
    _
  $region3: #{veegan_discriminator_forward.5} parent=0 // pred_check_branch
    %9 = sbr.rel (0) target = $region5
  $region4: #{veegan_discriminator_forward.5} parent=0 // pred_region
    _
  $region5: #{veegan_discriminator_forward.5} parent=0 // pred_fallthru
    _
  // Predicated region
  $region6: #{veegan_discriminator_forward.5} parent=0 // pred_check
    _
  $region7: #{veegan_discriminator_forward.5} parent=0 // pred_check_branch
    %11 = sbr.rel (0) target = $region9
  $region8: #{veegan_discriminator_forward.5} parent=0 // pred_region
    _
  $region9: #{veegan_discriminator_forward.5} parent=0 // pred_fallthru
    _
  // Predicated region
  $region10: #{veegan_discriminator_forward.5} parent=0 // pred_check
    _
  $region11: #{veegan_discriminator_forward.5} parent=0 // pred_check_branch
    %13 = sbr.rel (0) target = $region13
  $region12: #{veegan_discriminator_forward.5} parent=0 // pred_region
    _
  $region13: #{veegan_discriminator_forward.5} parent=0 // pred_fallthru
    _
  %v14 = vld [vmem:[%s0] sm:$0xff]
  %v15 = vld [vmem:[%s0 + $0x8] sm:$0xff]
  %v16 = vld [vmem:[%s0 + $0x10] sm:$0xff]
  %v17 = vld [vmem:[%s0 + $0x18] sm:$0xff]
  %v18 = vld [vmem:[%s0 + $0x20] sm:$0xff]
  %v19 = vld [vmem:[%s0 + $0x28] sm:$0xff]
  %v20 = vld [vmem:[%s0 + $0x30] sm:$0xff]
  %v21 = vld [vmem:[%s0 + $0x38] sm:$0xff]
  %v22 = vld [vmem:[%s0 + $0x40] sm:$0xff]
  %v23 = vld [vmem:[%s0 + $0x48] sm:$0xff]
  %v24 = vld [vmem:[%s0 + $0x50] sm:$0xff]
  %v25 = vld [vmem:[%s0 + $0x58] sm:$0xff]
  %v26 = vld [vmem:[%s0 + $0x60] sm:$0xff]
  %v27 = vld [vmem:[%s0 + $0x68] sm:$0xff]
  %v28 = vld [vmem:[%s0 + $0x70] sm:$0xff]
  %v29 = vld [vmem:[%s0 + $0x78] sm:$0xff]
  %v30 = vld [vmem:[%s0 + $0x80] sm:$0xff]
  %v31 = vld [vmem:[%s0 + $0x88] sm:$0xff]
  %v32 = vld [vmem:[%s0 + $0x90] sm:$0xff]
  %v33 = vld [vmem:[%s0 + $0x98] sm:$0xff]
  %v34 = vld [vmem:[%s0 + $0xa0] sm:$0xff]
  %v35 = vld [vmem:[%s0 + $0xa8] sm:$0xff]
  %v36 = vld [vmem:[%s0 + $0xb0] sm:$0xff]
  %v37 = vld [vmem:[%s0 + $0xb8] sm:$0xff]
  %v38 = vld [vmem:[%s0 + $0xc0] sm:$0xff]
  %v39 = vld [vmem:[%s0 + $0xc8] sm:$0xff]
  %v40 = vld [vmem:[%s0 + $0xd0] sm:$0xff]
  %v41 = vld [vmem:[%s0 + $0xd8] sm:$0xff]
  %v42 = vld [vmem:[%s0 + $0xe0] sm:$0xff]
  %v43 = vld [vmem:[%s0 + $0xe8] sm:$0xff]
  %v44 = vld [vmem:[%s0 + $0xf0] sm:$0xff]
  %v45 = vld [vmem:[%s0 + $0xf8] sm:$0xff]
  %v46 = vld [vmem:[%s0 + $0x100] sm:$0xff]
  %v47 = vld [vmem:[%s0 + $0x108] sm:$0xff]
  %v48 = vld [vmem:[%s0 + $0x110] sm:$0xff]
  %v49 = vld [vmem:[%s0 + $0x118] sm:$0xff]
  %v50 = vld [vmem:[%s0 + $0x120] sm:$0xff]
  %v51 = vld [vmem:[%s0 + $0x128] sm:$0xff]
  %v52 = vld [vmem:[%s0 + $0x130] sm:$0xff]
  %v53 = vld [vmem:[%s0 + $0x138] sm:$0xff]
  %v54 = vld [vmem:[%s0 + $0x140] sm:$0xff]
  %v55 = vld [vmem:[%s0 + $0x148] sm:$0xff]
  %v56 = vld [vmem:[%s0 + $0x150] sm:$0xff]
  %v57 = vld [vmem:[%s0 + $0x158] sm:$0xff]
  %v58 = vld [vmem:[%s1] sm:$0xf]
  %v59 = vld [vmem:[%s1 + $0x4] sm:$0xf]
  %v60 = vld [vmem:[%s1 + $0x8] sm:$0xf]
  %v61 = vld [vmem:[%s1 + $0xc] sm:$0xf]
  %v62 = vld [vmem:[%s1 + $0x10] sm:$0xf]
  %v63 = vld [vmem:[%s1 + $0x14] sm:$0xf]
  %v64 = vld [vmem:[%s1 + $0x18] sm:$0xf]
  %v65 = vld [vmem:[%s1 + $0x1c] sm:$0xf]
  %v66 = vld [vmem:[%s1 + $0x20] sm:$0xf]
  %v67 = vld [vmem:[%s1 + $0x24] sm:$0xf]
  %v68 = vld [vmem:[%s1 + $0x28] sm:$0xf]
  %v69 = vld [vmem:[%s1 + $0x2c] sm:$0xf]
  %v70 = vld [vmem:[%s1 + $0x30] sm:$0xf]
  %v71 = vld [vmem:[%s1 + $0x34] sm:$0xf]
  %v72 = vld [vmem:[%s1 + $0x38] sm:$0xf]
  %v73 = vld [vmem:[%s1 + $0x3c] sm:$0xf]
  %v74 = vld [vmem:[%s1 + $0x40] sm:$0xf]
  %v75 = vld [vmem:[%s1 + $0x44] sm:$0xf]
  %v76 = vld [vmem:[%s1 + $0x48] sm:$0xf]
  %v77 = vld [vmem:[%s1 + $0x4c] sm:$0xf]
  %v78 = vld [vmem:[%s1 + $0x50] sm:$0xf]
  %v79 = vld [vmem:[%s1 + $0x54] sm:$0xf]
  %v80 = vld [vmem:[%s1 + $0x58] sm:$0xf]
  %v81 = vld [vmem:[%s1 + $0x5c] sm:$0xf]
  %v82 = vld [vmem:[%s1 + $0x60] sm:$0xf]
  %v83 = vld [vmem:[%s1 + $0x64] sm:$0xf]
  %v84 = vld [vmem:[%s1 + $0x68] sm:$0xf]
  %v85 = vld [vmem:[%s1 + $0x6c] sm:$0xf]
  %v86 = vld [vmem:[%s1 + $0x70] sm:$0xf]
  %v87 = vld [vmem:[%s1 + $0x74] sm:$0xf]
  %v88 = vld [vmem:[%s1 + $0x78] sm:$0xf]
  %v89 = vld [vmem:[%s1 + $0x7c] sm:$0xf]
  %v90 = vld [vmem:[%s2] sm:$0x1]
  %v92 = vperm.slane %v90, 0
  %v138 = vunpack.c.l.b16 %v14
  %v139 = vunpack.c.h.b16 %v14
  %v140 = vunpack.c.l.b16 %v15
  %v141 = vunpack.c.h.b16 %v15
  %v142 = vunpack.c.l.b16 %v16
  %v143 = vunpack.c.h.b16 %v16
  %v144 = vunpack.c.l.b16 %v17
  %v145 = vunpack.c.h.b16 %v17
  %v146 = vunpack.c.l.b16 %v18
  %v147 = vunpack.c.h.b16 %v18
  %v148 = vunpack.c.l.b16 %v19
  %v149 = vunpack.c.h.b16 %v19
  %v150 = vunpack.c.l.b16 %v20
  %v151 = vunpack.c.h.b16 %v20
  %v152 = vunpack.c.l.b16 %v21
  %v153 = vunpack.c.h.b16 %v21
  %v154 = vunpack.c.l.b16 %v22
  %v155 = vunpack.c.h.b16 %v22
  %v156 = vunpack.c.l.b16 %v23
  %v157 = vunpack.c.h.b16 %v23
  %v158 = vunpack.c.l.b16 %v24
  %v159 = vunpack.c.h.b16 %v24
  %v160 = vunpack.c.l.b16 %v25
  %v161 = vunpack.c.h.b16 %v25
  %v162 = vunpack.c.l.b16 %v26
  %v163 = vunpack.c.h.b16 %v26
  %v164 = vunpack.c.l.b16 %v27
  %v165 = vunpack.c.h.b16 %v27
  %v166 = vunpack.c.l.b16 %v28
  %v167 = vunpack.c.h.b16 %v28
  %v168 = vunpack.c.l.b16 %v29
  %v169 = vunpack.c.h.b16 %v29
  %v170 = vunpack.c.l.b16 %v30
  %v171 = vunpack.c.h.b16 %v30
  %v172 = vunpack.c.l.b16 %v31
  %v173 = vunpack.c.h.b16 %v31
  %v174 = vunpack.c.l.b16 %v32
  %v175 = vunpack.c.h.b16 %v32
  %v176 = vunpack.c.l.b16 %v33
  %v177 = vunpack.c.h.b16 %v33
  %v178 = vunpack.c.l.b16 %v34
  %v179 = vunpack.c.h.b16 %v34
  %v180 = vunpack.c.l.b16 %v35
  %v181 = vunpack.c.h.b16 %v35
  %v182 = vunpack.c.l.b16 %v36
  %v183 = vunpack.c.h.b16 %v36
  %v184 = vunpack.c.l.b16 %v37
  %v185 = vunpack.c.h.b16 %v37
  %v186 = vunpack.c.l.b16 %v38
  %v187 = vunpack.c.h.b16 %v38
  %v188 = vunpack.c.l.b16 %v39
  %v189 = vunpack.c.h.b16 %v39
  %v190 = vunpack.c.l.b16 %v40
  %v191 = vunpack.c.h.b16 %v40
  %v192 = vunpack.c.l.b16 %v41
  %v193 = vunpack.c.h.b16 %v41
  %v194 = vunpack.c.l.b16 %v42
  %v195 = vunpack.c.h.b16 %v42
  %v196 = vunpack.c.l.b16 %v43
  %v197 = vunpack.c.h.b16 %v43
  %v198 = vunpack.c.l.b16 %v44
  %v199 = vunpack.c.h.b16 %v44
  %v200 = vunpack.c.l.b16 %v45
  %v201 = vunpack.c.h.b16 %v45
  %v202 = vunpack.c.l.b16 %v46
  %v203 = vunpack.c.h.b16 %v46
  %v204 = vunpack.c.l.b16 %v47
  %v205 = vunpack.c.h.b16 %v47
  %v206 = vunpack.c.l.b16 %v48
  %v207 = vunpack.c.h.b16 %v48
  %v208 = vunpack.c.l.b16 %v49
  %v209 = vunpack.c.h.b16 %v49
  %v210 = vunpack.c.l.b16 %v50
  %v211 = vunpack.c.h.b16 %v50
  %v212 = vunpack.c.l.b16 %v51
  %v213 = vunpack.c.h.b16 %v51
  %v214 = vunpack.c.l.b16 %v52
  %v215 = vunpack.c.h.b16 %v52
  %v216 = vunpack.c.l.b16 %v53
  %v217 = vunpack.c.h.b16 %v53
  %v218 = vunpack.c.l.b16 %v54
  %v219 = vunpack.c.h.b16 %v54
  %v220 = vunpack.c.l.b16 %v55
  %v221 = vunpack.c.h.b16 %v55
  %v222 = vunpack.c.l.b16 %v56
  %v223 = vunpack.c.h.b16 %v56
  %v224 = vunpack.c.l.b16 %v57
  %v225 = vunpack.c.h.b16 %v57
  %v226 = vpack.c.b16 %v140, %v138
  %v227 = vpack.c.b16 %v141, %v139
  %v228 = vpack.c.b16 %v144, %v142
  %v229 = vpack.c.b16 %v145, %v143
  %v230 = vpack.c.b16 %v148, %v146
  %v231 = vpack.c.b16 %v149, %v147
  %v232 = vpack.c.b16 %v152, %v150
  %v233 = vpack.c.b16 %v153, %v151
  %v234 = vpack.c.b16 %v156, %v154
  %v235 = vpack.c.b16 %v157, %v155
  %v236 = vpack.c.b16 %v160, %v158
  %v237 = vpack.c.b16 %v161, %v159
  %v238 = vpack.c.b16 %v164, %v162
  %v239 = vpack.c.b16 %v165, %v163
  %v240 = vpack.c.b16 %v168, %v166
  %v241 = vpack.c.b16 %v169, %v167
  %v242 = vpack.c.b16 %v172, %v170
  %v243 = vpack.c.b16 %v173, %v171
  %v244 = vpack.c.b16 %v176, %v174
  %v245 = vpack.c.b16 %v177, %v175
  %v246 = vpack.c.b16 %v180, %v178
  %v247 = vpack.c.b16 %v181, %v179
  %v248 = vpack.c.b16 %v184, %v182
  %v249 = vpack.c.b16 %v185, %v183
  %v250 = vpack.c.b16 %v188, %v186
  %v251 = vpack.c.b16 %v189, %v187
  %v252 = vpack.c.b16 %v192, %v190
  %v253 = vpack.c.b16 %v193, %v191
  %v254 = vpack.c.b16 %v196, %v194
  %v255 = vpack.c.b16 %v197, %v195
  %v256 = vpack.c.b16 %v200, %v198
  %v257 = vpack.c.b16 %v201, %v199
  %v258 = vpack.c.b16 %v204, %v202
  %v259 = vpack.c.b16 %v205, %v203
  %v260 = vpack.c.b16 %v208, %v206
  %v261 = vpack.c.b16 %v209, %v207
  %v262 = vpack.c.b16 %v212, %v210
  %v263 = vpack.c.b16 %v213, %v211
  %v264 = vpack.c.b16 %v216, %v214
  %v265 = vpack.c.b16 %v217, %v215
  %v266 = vpack.c.b16 %v220, %v218
  %v267 = vpack.c.b16 %v221, %v219
  %v268 = vpack.c.b16 %v224, %v222
  %v269 = vpack.c.b16 %v225, %v223
  %v346 = vunpack.c.l.b16 %v58
  %v347 = vunpack.c.l.b16 %v59
  %v348 = vunpack.c.l.b16 %v60
  %v349 = vunpack.c.l.b16 %v61
  %v350 = vunpack.c.l.b16 %v62
  %v351 = vunpack.c.l.b16 %v63
  %v352 = vunpack.c.l.b16 %v64
  %v353 = vunpack.c.l.b16 %v65
  %v354 = vunpack.c.l.b16 %v66
  %v355 = vunpack.c.l.b16 %v67
  %v356 = vunpack.c.l.b16 %v68
  %v357 = vunpack.c.l.b16 %v69
  %v358 = vunpack.c.l.b16 %v70
  %v359 = vunpack.c.l.b16 %v71
  %v360 = vunpack.c.l.b16 %v72
  %v361 = vunpack.c.l.b16 %v73
  %v362 = vunpack.c.l.b16 %v74
  %v363 = vunpack.c.l.b16 %v75
  %v364 = vunpack.c.l.b16 %v76
  %v365 = vunpack.c.l.b16 %v77
  %v366 = vunpack.c.l.b16 %v78
  %v367 = vunpack.c.l.b16 %v79
  %v368 = vunpack.c.l.b16 %v80
  %v369 = vunpack.c.l.b16 %v81
  %v370 = vunpack.c.l.b16 %v82
  %v371 = vunpack.c.l.b16 %v83
  %v372 = vunpack.c.l.b16 %v84
  %v373 = vunpack.c.l.b16 %v85
  %v374 = vunpack.c.l.b16 %v86
  %v375 = vunpack.c.l.b16 %v87
  %v376 = vunpack.c.l.b16 %v88
  %v377 = vunpack.c.l.b16 %v89
  %v378 = vpack.c.b16 %v347, %v346
  %v379 = vpack.c.b16 %v349, %v348
  %v380 = vpack.c.b16 %v351, %v350
  %v381 = vpack.c.b16 %v353, %v352
  %v382 = vpack.c.b16 %v355, %v354
  %v383 = vpack.c.b16 %v357, %v356
  %v384 = vpack.c.b16 %v359, %v358
  %v385 = vpack.c.b16 %v361, %v360
  %v386 = vpack.c.b16 %v363, %v362
  %v387 = vpack.c.b16 %v365, %v364
  %v388 = vpack.c.b16 %v367, %v366
  %v389 = vpack.c.b16 %v369, %v368
  %v390 = vpack.c.b16 %v371, %v370
  %v391 = vpack.c.b16 %v373, %v372
  %v392 = vpack.c.b16 %v375, %v374
  %v393 = vpack.c.b16 %v377, %v376
  %410 = vmatpush.bf16.msra.mxu0 %v385
  %411 = vmatpush.bf16.msra.mxu0 %v384
  %412 = vmatpush.bf16.msra.mxu0 %v383
  %413 = vmatpush.bf16.msra.mxu0 %v382
  %414 = vmatpush.bf16.msra.mxu0 %v381
  %415 = vmatpush.bf16.msra.mxu0 %v380
  %416 = vmatpush.bf16.msra.mxu0 %v379
  %417 = vmatpush.bf16.msra.mxu0 %v378
  %418 = vmatmul.bf16.gmra.mxu0 %v226
  %v419 = vpop.f32.mrf.mxu0
  %v420 = vadd.f32 %v92, %v419
  %v421 = vpop.f32.mrf.mxu0
  %v422 = vadd.f32 %v92, %v421
  %423 = vmatmul.bf16.gmra.mxu0 %v228
  %v424 = vpop.f32.mrf.mxu0
  %v425 = vadd.f32 %v92, %v424
  %v426 = vpop.f32.mrf.mxu0
  %v427 = vadd.f32 %v92, %v426
  %428 = vmatmul.bf16.gmra.mxu0 %v230
  %v429 = vpop.f32.mrf.mxu0
  %v430 = vadd.f32 %v92, %v429
  %v431 = vpop.f32.mrf.mxu0
  %v432 = vadd.f32 %v92, %v431
  %433 = vmatmul.bf16.gmra.mxu0 %v232
  %v434 = vpop.f32.mrf.mxu0
  %v435 = vadd.f32 %v92, %v434
  %v436 = vpop.f32.mrf.mxu0
  %v437 = vadd.f32 %v92, %v436
  %438 = vmatmul.bf16.gmra.mxu0 %v234
  %v439 = vpop.f32.mrf.mxu0
  %v440 = vadd.f32 %v92, %v439
  %v441 = vpop.f32.mrf.mxu0
  %v442 = vadd.f32 %v92, %v441
  %443 = vmatmul.bf16.gmra.mxu0 %v236
  %v444 = vpop.f32.mrf.mxu0
  %v445 = vadd.f32 %v92, %v444
  %v446 = vpop.f32.mrf.mxu0
  %v447 = vadd.f32 %v92, %v446
  %448 = vmatmul.bf16.gmra.mxu0 %v238
  %v449 = vpop.f32.mrf.mxu0
  %v450 = vadd.f32 %v92, %v449
  %v451 = vpop.f32.mrf.mxu0
  %v452 = vadd.f32 %v92, %v451
  %453 = vmatmul.bf16.gmra.mxu0 %v240
  %v454 = vpop.f32.mrf.mxu0
  %v455 = vadd.f32 %v92, %v454
  %v456 = vpop.f32.mrf.mxu0
  %v457 = vadd.f32 %v92, %v456
  %458 = vmatmul.bf16.gmra.mxu0 %v242
  %v459 = vpop.f32.mrf.mxu0
  %v460 = vadd.f32 %v92, %v459
  %v461 = vpop.f32.mrf.mxu0
  %v462 = vadd.f32 %v92, %v461
  %463 = vmatmul.bf16.gmra.mxu0 %v244
  %v464 = vpop.f32.mrf.mxu0
  %v465 = vadd.f32 %v92, %v464
  %v466 = vpop.f32.mrf.mxu0
  %v467 = vadd.f32 %v92, %v466
  %468 = vmatmul.bf16.gmra.mxu0 %v246
  %v469 = vpop.f32.mrf.mxu0
  %v470 = vadd.f32 %v92, %v469
  %v471 = vpop.f32.mrf.mxu0
  %v472 = vadd.f32 %v92, %v471
  %473 = vmatmul.bf16.gmra.mxu0 %v248
  %v474 = vpop.f32.mrf.mxu0
  %v475 = vadd.f32 %v92, %v474
  %v476 = vpop.f32.mrf.mxu0
  %v477 = vadd.f32 %v92, %v476
  %478 = vmatmul.bf16.gmra.mxu0 %v250
  %v479 = vpop.f32.mrf.mxu0
  %v480 = vadd.f32 %v92, %v479
  %v481 = vpop.f32.mrf.mxu0
  %v482 = vadd.f32 %v92, %v481
  %483 = vmatmul.bf16.gmra.mxu0 %v252
  %v484 = vpop.f32.mrf.mxu0
  %v485 = vadd.f32 %v92, %v484
  %v486 = vpop.f32.mrf.mxu0
  %v487 = vadd.f32 %v92, %v486
  %488 = vmatmul.bf16.gmra.mxu0 %v254
  %v489 = vpop.f32.mrf.mxu0
  %v490 = vadd.f32 %v92, %v489
  %v491 = vpop.f32.mrf.mxu0
  %v492 = vadd.f32 %v92, %v491
  %493 = vmatmul.bf16.gmra.mxu0 %v256
  %v494 = vpop.f32.mrf.mxu0
  %v495 = vadd.f32 %v92, %v494
  %v496 = vpop.f32.mrf.mxu0
  %v497 = vadd.f32 %v92, %v496
  %498 = vmatmul.bf16.gmra.mxu0 %v258
  %v499 = vpop.f32.mrf.mxu0
  %v500 = vadd.f32 %v92, %v499
  %v501 = vpop.f32.mrf.mxu0
  %v502 = vadd.f32 %v92, %v501
  %503 = vmatmul.bf16.gmra.mxu0 %v260
  %v504 = vpop.f32.mrf.mxu0
  %v505 = vadd.f32 %v92, %v504
  %v506 = vpop.f32.mrf.mxu0
  %v507 = vadd.f32 %v92, %v506
  %508 = vmatmul.bf16.gmra.mxu0 %v262
  %v509 = vpop.f32.mrf.mxu0
  %v510 = vadd.f32 %v92, %v509
  %v511 = vpop.f32.mrf.mxu0
  %v512 = vadd.f32 %v92, %v511
  %513 = vmatmul.bf16.gmra.mxu0 %v264
  %v514 = vpop.f32.mrf.mxu0
  %v515 = vadd.f32 %v92, %v514
  %v516 = vpop.f32.mrf.mxu0
  %v517 = vadd.f32 %v92, %v516
  %518 = vmatmul.bf16.gmra.mxu0 %v266
  %v519 = vpop.f32.mrf.mxu0
  %v520 = vadd.f32 %v92, %v519
  %v521 = vpop.f32.mrf.mxu0
  %v522 = vadd.f32 %v92, %v521
  %523 = vmatmul.bf16.gmra.mxu0 %v268
  %v524 = vpop.f32.mrf.mxu0
  %v525 = vadd.f32 %v92, %v524
  %v526 = vpop.f32.mrf.mxu0
  %v527 = vadd.f32 %v92, %v526
  %528 = vdwg.mxu0
  %529 = vmatpush.bf16.msra.mxu0 %v393
  %530 = vmatpush.bf16.msra.mxu0 %v392
  %531 = vmatpush.bf16.msra.mxu0 %v391
  %532 = vmatpush.bf16.msra.mxu0 %v390
  %533 = vmatpush.bf16.msra.mxu0 %v389
  %534 = vmatpush.bf16.msra.mxu0 %v388
  %535 = vmatpush.bf16.msra.mxu0 %v387
  %536 = vmatpush.bf16.msra.mxu0 %v386
  %537 = vmatmul.bf16.gmra.mxu0 %v227
  %v538 = vpop.f32.mrf.mxu0
  %v539 = vadd.f32 %v420, %v538
  %v540 = vpop.f32.mrf.mxu0
  %v541 = vadd.f32 %v422, %v540
  %542 = vmatmul.bf16.gmra.mxu0 %v229
  %v543 = vpop.f32.mrf.mxu0
  %v544 = vadd.f32 %v425, %v543
  %v545 = vpop.f32.mrf.mxu0
  %v546 = vadd.f32 %v427, %v545
  %547 = vmatmul.bf16.gmra.mxu0 %v231
  %v548 = vpop.f32.mrf.mxu0
  %v549 = vadd.f32 %v430, %v548
  %v550 = vpop.f32.mrf.mxu0
  %v551 = vadd.f32 %v432, %v550
  %552 = vmatmul.bf16.gmra.mxu0 %v233
  %v553 = vpop.f32.mrf.mxu0
  %v554 = vadd.f32 %v435, %v553
  %v555 = vpop.f32.mrf.mxu0
  %v556 = vadd.f32 %v437, %v555
  %557 = vmatmul.bf16.gmra.mxu0 %v235
  %v558 = vpop.f32.mrf.mxu0
  %v559 = vadd.f32 %v440, %v558
  %v560 = vpop.f32.mrf.mxu0
  %v561 = vadd.f32 %v442, %v560
  %562 = vmatmul.bf16.gmra.mxu0 %v237
  %v563 = vpop.f32.mrf.mxu0
  %v564 = vadd.f32 %v445, %v563
  %v565 = vpop.f32.mrf.mxu0
  %v566 = vadd.f32 %v447, %v565
  %567 = vmatmul.bf16.gmra.mxu0 %v239
  %v568 = vpop.f32.mrf.mxu0
  %v569 = vadd.f32 %v450, %v568
  %v570 = vpop.f32.mrf.mxu0
  %v571 = vadd.f32 %v452, %v570
  %572 = vmatmul.bf16.gmra.mxu0 %v241
  %v573 = vpop.f32.mrf.mxu0
  %v574 = vadd.f32 %v455, %v573
  %v575 = vpop.f32.mrf.mxu0
  %v576 = vadd.f32 %v457, %v575
  %577 = vmatmul.bf16.gmra.mxu0 %v243
  %v578 = vpop.f32.mrf.mxu0
  %v579 = vadd.f32 %v460, %v578
  %v580 = vpop.f32.mrf.mxu0
  %v581 = vadd.f32 %v462, %v580
  %582 = vmatmul.bf16.gmra.mxu0 %v245
  %v583 = vpop.f32.mrf.mxu0
  %v584 = vadd.f32 %v465, %v583
  %v585 = vpop.f32.mrf.mxu0
  %v586 = vadd.f32 %v467, %v585
  %587 = vmatmul.bf16.gmra.mxu0 %v247
  %v588 = vpop.f32.mrf.mxu0
  %v589 = vadd.f32 %v470, %v588
  %v590 = vpop.f32.mrf.mxu0
  %v591 = vadd.f32 %v472, %v590
  %592 = vmatmul.bf16.gmra.mxu0 %v249
  %v593 = vpop.f32.mrf.mxu0
  %v594 = vadd.f32 %v475, %v593
  %v595 = vpop.f32.mrf.mxu0
  %v596 = vadd.f32 %v477, %v595
  %597 = vmatmul.bf16.gmra.mxu0 %v251
  %v598 = vpop.f32.mrf.mxu0
  %v599 = vadd.f32 %v480, %v598
  %v600 = vpop.f32.mrf.mxu0
  %v601 = vadd.f32 %v482, %v600
  %602 = vmatmul.bf16.gmra.mxu0 %v253
  %v603 = vpop.f32.mrf.mxu0
  %v604 = vadd.f32 %v485, %v603
  %v605 = vpop.f32.mrf.mxu0
  %v606 = vadd.f32 %v487, %v605
  %607 = vmatmul.bf16.gmra.mxu0 %v255
  %v608 = vpop.f32.mrf.mxu0
  %v609 = vadd.f32 %v490, %v608
  %v610 = vpop.f32.mrf.mxu0
  %v611 = vadd.f32 %v492, %v610
  %612 = vmatmul.bf16.gmra.mxu0 %v257
  %v613 = vpop.f32.mrf.mxu0
  %v614 = vadd.f32 %v495, %v613
  %v615 = vpop.f32.mrf.mxu0
  %v616 = vadd.f32 %v497, %v615
  %617 = vmatmul.bf16.gmra.mxu0 %v259
  %v618 = vpop.f32.mrf.mxu0
  %v619 = vadd.f32 %v500, %v618
  %v620 = vpop.f32.mrf.mxu0
  %v621 = vadd.f32 %v502, %v620
  %622 = vmatmul.bf16.gmra.mxu0 %v261
  %v623 = vpop.f32.mrf.mxu0
  %v624 = vadd.f32 %v505, %v623
  %v625 = vpop.f32.mrf.mxu0
  %v626 = vadd.f32 %v507, %v625
  %627 = vmatmul.bf16.gmra.mxu0 %v263
  %v628 = vpop.f32.mrf.mxu0
  %v629 = vadd.f32 %v510, %v628
  %v630 = vpop.f32.mrf.mxu0
  %v631 = vadd.f32 %v512, %v630
  %632 = vmatmul.bf16.gmra.mxu0 %v265
  %v633 = vpop.f32.mrf.mxu0
  %v634 = vadd.f32 %v515, %v633
  %v635 = vpop.f32.mrf.mxu0
  %v636 = vadd.f32 %v517, %v635
  %637 = vmatmul.bf16.gmra.mxu0 %v267
  %v638 = vpop.f32.mrf.mxu0
  %v639 = vadd.f32 %v520, %v638
  %v640 = vpop.f32.mrf.mxu0
  %v641 = vadd.f32 %v522, %v640
  %642 = vmatmul.bf16.gmra.mxu0 %v269
  %v643 = vpop.f32.mrf.mxu0
  %v644 = vadd.f32 %v525, %v643
  %v645 = vpop.f32.mrf.mxu0
  %v646 = vadd.f32 %v527, %v645
  %647 = vdwg.mxu0
  %vm648 = vcmp.ge.f32.partialorder %v539, 0.0
  %vm649 = vcmp.ge.f32.partialorder %v541, 0.0
  %vm650 = vcmp.ge.f32.partialorder %v544, 0.0
  %vm651 = vcmp.ge.f32.partialorder %v546, 0.0
  %vm652 = vcmp.ge.f32.partialorder %v549, 0.0
  %vm653 = vcmp.ge.f32.partialorder %v551, 0.0
  %vm654 = vcmp.ge.f32.partialorder %v554, 0.0
  %vm655 = vcmp.ge.f32.partialorder %v556, 0.0
  %vm656 = vcmp.ge.f32.partialorder %v559, 0.0
  %vm657 = vcmp.ge.f32.partialorder %v561, 0.0
  %vm658 = vcmp.ge.f32.partialorder %v564, 0.0
  %vm659 = vcmp.ge.f32.partialorder %v566, 0.0
  %vm660 = vcmp.ge.f32.partialorder %v569, 0.0
  %vm661 = vcmp.ge.f32.partialorder %v571, 0.0
  %vm662 = vcmp.ge.f32.partialorder %v574, 0.0
  %vm663 = vcmp.ge.f32.partialorder %v576, 0.0
  %vm664 = vcmp.ge.f32.partialorder %v579, 0.0
  %vm665 = vcmp.ge.f32.partialorder %v581, 0.0
  %vm666 = vcmp.ge.f32.partialorder %v584, 0.0
  %vm667 = vcmp.ge.f32.partialorder %v586, 0.0
  %vm668 = vcmp.ge.f32.partialorder %v589, 0.0
  %vm669 = vcmp.ge.f32.partialorder %v591, 0.0
  %vm670 = vcmp.ge.f32.partialorder %v594, 0.0
  %vm671 = vcmp.ge.f32.partialorder %v596, 0.0
  %vm672 = vcmp.ge.f32.partialorder %v599, 0.0
  %vm673 = vcmp.ge.f32.partialorder %v601, 0.0
  %vm674 = vcmp.ge.f32.partialorder %v604, 0.0
  %vm675 = vcmp.ge.f32.partialorder %v606, 0.0
  %vm676 = vcmp.ge.f32.partialorder %v609, 0.0
  %vm677 = vcmp.ge.f32.partialorder %v611, 0.0
  %vm678 = vcmp.ge.f32.partialorder %v614, 0.0
  %vm679 = vcmp.ge.f32.partialorder %v616, 0.0
  %vm680 = vcmp.ge.f32.partialorder %v619, 0.0
  %vm681 = vcmp.ge.f32.partialorder %v621, 0.0
  %vm682 = vcmp.ge.f32.partialorder %v624, 0.0
  %vm683 = vcmp.ge.f32.partialorder %v626, 0.0
  %vm684 = vcmp.ge.f32.partialorder %v629, 0.0
  %vm685 = vcmp.ge.f32.partialorder %v631, 0.0
  %vm686 = vcmp.ge.f32.partialorder %v634, 0.0
  %vm687 = vcmp.ge.f32.partialorder %v636, 0.0
  %vm688 = vcmp.ge.f32.partialorder %v639, 0.0
  %vm689 = vcmp.ge.f32.partialorder %v641, 0.0
  %vm690 = vcmp.ge.f32.partialorder %v644, 0.0
  %vm691 = vcmp.ge.f32.partialorder %v646, 0.0
  %v692 = vmul.f32 %v539, 0.02
  %v693 = vmul.f32 %v541, 0.02
  %v694 = vmul.f32 %v544, 0.02
  %v695 = vmul.f32 %v546, 0.02
  %v696 = vmul.f32 %v549, 0.02
  %v697 = vmul.f32 %v551, 0.02
  %v698 = vmul.f32 %v554, 0.02
  %v699 = vmul.f32 %v556, 0.02
  %v700 = vmul.f32 %v559, 0.02
  %v701 = vmul.f32 %v561, 0.02
  %v702 = vmul.f32 %v564, 0.02
  %v703 = vmul.f32 %v566, 0.02
  %v704 = vmul.f32 %v569, 0.02
  %v705 = vmul.f32 %v571, 0.02
  %v706 = vmul.f32 %v574, 0.02
  %v707 = vmul.f32 %v576, 0.02
  %v708 = vmul.f32 %v579, 0.02
  %v709 = vmul.f32 %v581, 0.02
  %v710 = vmul.f32 %v584, 0.02
  %v711 = vmul.f32 %v586, 0.02
  %v712 = vmul.f32 %v589, 0.02
  %v713 = vmul.f32 %v591, 0.02
  %v714 = vmul.f32 %v594, 0.02
  %v715 = vmul.f32 %v596, 0.02
  %v716 = vmul.f32 %v599, 0.02
  %v717 = vmul.f32 %v601, 0.02
  %v718 = vmul.f32 %v604, 0.02
  %v719 = vmul.f32 %v606, 0.02
  %v720 = vmul.f32 %v609, 0.02
  %v721 = vmul.f32 %v611, 0.02
  %v722 = vmul.f32 %v614, 0.02
  %v723 = vmul.f32 %v616, 0.02
  %v724 = vmul.f32 %v619, 0.02
  %v725 = vmul.f32 %v621, 0.02
  %v726 = vmul.f32 %v624, 0.02
  %v727 = vmul.f32 %v626, 0.02
  %v728 = vmul.f32 %v629, 0.02
  %v729 = vmul.f32 %v631, 0.02
  %v730 = vmul.f32 %v634, 0.02
  %v731 = vmul.f32 %v636, 0.02
  %v732 = vmul.f32 %v639, 0.02
  %v733 = vmul.f32 %v641, 0.02
  %v734 = vmul.f32 %v644, 0.02
  %v735 = vmul.f32 %v646, 0.02
  %v736 = vsel %vm648, %v539, %v692
  %v737 = vsel %vm649, %v541, %v693
  %v738 = vsel %vm650, %v544, %v694
  %v739 = vsel %vm651, %v546, %v695
  %v740 = vsel %vm652, %v549, %v696
  %v741 = vsel %vm653, %v551, %v697
  %v742 = vsel %vm654, %v554, %v698
  %v743 = vsel %vm655, %v556, %v699
  %v744 = vsel %vm656, %v559, %v700
  %v745 = vsel %vm657, %v561, %v701
  %v746 = vsel %vm658, %v564, %v702
  %v747 = vsel %vm659, %v566, %v703
  %v748 = vsel %vm660, %v569, %v704
  %v749 = vsel %vm661, %v571, %v705
  %v750 = vsel %vm662, %v574, %v706
  %v751 = vsel %vm663, %v576, %v707
  %v752 = vsel %vm664, %v579, %v708
  %v753 = vsel %vm665, %v581, %v709
  %v754 = vsel %vm666, %v584, %v710
  %v755 = vsel %vm667, %v586, %v711
  %v756 = vsel %vm668, %v589, %v712
  %v757 = vsel %vm669, %v591, %v713
  %v758 = vsel %vm670, %v594, %v714
  %v759 = vsel %vm671, %v596, %v715
  %v760 = vsel %vm672, %v599, %v716
  %v761 = vsel %vm673, %v601, %v717
  %v762 = vsel %vm674, %v604, %v718
  %v763 = vsel %vm675, %v606, %v719
  %v764 = vsel %vm676, %v609, %v720
  %v765 = vsel %vm677, %v611, %v721
  %v766 = vsel %vm678, %v614, %v722
  %v767 = vsel %vm679, %v616, %v723
  %v768 = vsel %vm680, %v619, %v724
  %v769 = vsel %vm681, %v621, %v725
  %v770 = vsel %vm682, %v624, %v726
  %v771 = vsel %vm683, %v626, %v727
  %v772 = vsel %vm684, %v629, %v728
  %v773 = vsel %vm685, %v631, %v729
  %v774 = vsel %vm686, %v634, %v730
  %v775 = vsel %vm687, %v636, %v731
  %v776 = vsel %vm688, %v639, %v732
  %v777 = vsel %vm689, %v641, %v733
  %v778 = vsel %vm690, %v644, %v734
  %v779 = vsel %vm691, %v646, %v735
  %v780 = vpack.c.bf16 %v736, %v736
  %v781 = vpack.c.bf16 %v737, %v737
  %v782 = vpack.c.bf16 %v738, %v738
  %v783 = vpack.c.bf16 %v739, %v739
  %v784 = vpack.c.bf16 %v740, %v740
  %v785 = vpack.c.bf16 %v741, %v741
  %v786 = vpack.c.bf16 %v742, %v742
  %v787 = vpack.c.bf16 %v743, %v743
  %v788 = vpack.c.bf16 %v744, %v744
  %v789 = vpack.c.bf16 %v745, %v745
  %v790 = vpack.c.bf16 %v746, %v746
  %v791 = vpack.c.bf16 %v747, %v747
  %v792 = vpack.c.bf16 %v748, %v748
  %v793 = vpack.c.bf16 %v749, %v749
  %v794 = vpack.c.bf16 %v750, %v750
  %v795 = vpack.c.bf16 %v751, %v751
  %v796 = vpack.c.bf16 %v752, %v752
  %v797 = vpack.c.bf16 %v753, %v753
  %v798 = vpack.c.bf16 %v754, %v754
  %v799 = vpack.c.bf16 %v755, %v755
  %v800 = vpack.c.bf16 %v756, %v756
  %v801 = vpack.c.bf16 %v757, %v757
  %v802 = vpack.c.bf16 %v758, %v758
  %v803 = vpack.c.bf16 %v759, %v759
  %v804 = vpack.c.bf16 %v760, %v760
  %v805 = vpack.c.bf16 %v761, %v761
  %v806 = vpack.c.bf16 %v762, %v762
  %v807 = vpack.c.bf16 %v763, %v763
  %v808 = vpack.c.bf16 %v764, %v764
  %v809 = vpack.c.bf16 %v765, %v765
  %v810 = vpack.c.bf16 %v766, %v766
  %v811 = vpack.c.bf16 %v767, %v767
  %v812 = vpack.c.bf16 %v768, %v768
  %v813 = vpack.c.bf16 %v769, %v769
  %v814 = vpack.c.bf16 %v770, %v770
  %v815 = vpack.c.bf16 %v771, %v771
  %v816 = vpack.c.bf16 %v772, %v772
  %v817 = vpack.c.bf16 %v773, %v773
  %v818 = vpack.c.bf16 %v774, %v774
  %v819 = vpack.c.bf16 %v775, %v775
  %v820 = vpack.c.bf16 %v776, %v776
  %v821 = vpack.c.bf16 %v777, %v777
  %v822 = vpack.c.bf16 %v778, %v778
  %v823 = vpack.c.bf16 %v779, %v779
  %824 = vst [vmem:[%s3] sm:$0xf] %v780
  %825 = vst [vmem:[%s3 + $0x4] sm:$0xf] %v781
  %826 = vst [vmem:[%s3 + $0x8] sm:$0xf] %v782
  %827 = vst [vmem:[%s3 + $0xc] sm:$0xf] %v783
  %828 = vst [vmem:[%s3 + $0x10] sm:$0xf] %v784
  %829 = vst [vmem:[%s3 + $0x14] sm:$0xf] %v785
  %830 = vst [vmem:[%s3 + $0x18] sm:$0xf] %v786
  %831 = vst [vmem:[%s3 + $0x1c] sm:$0xf] %v787
  %832 = vst [vmem:[%s3 + $0x20] sm:$0xf] %v788
  %833 = vst [vmem:[%s3 + $0x24] sm:$0xf] %v789
  %834 = vst [vmem:[%s3 + $0x28] sm:$0xf] %v790
  %835 = vst [vmem:[%s3 + $0x2c] sm:$0xf] %v791
  %836 = vst [vmem:[%s3 + $0x30] sm:$0xf] %v792
  %837 = vst [vmem:[%s3 + $0x34] sm:$0xf] %v793
  %838 = vst [vmem:[%s3 + $0x38] sm:$0xf] %v794
  %839 = vst [vmem:[%s3 + $0x3c] sm:$0xf] %v795
  %840 = vst [vmem:[%s3 + $0x40] sm:$0xf] %v796
  %841 = vst [vmem:[%s3 + $0x44] sm:$0xf] %v797
  %842 = vst [vmem:[%s3 + $0x48] sm:$0xf] %v798
  %843 = vst [vmem:[%s3 + $0x4c] sm:$0xf] %v799
  %844 = vst [vmem:[%s3 + $0x50] sm:$0xf] %v800
  %845 = vst [vmem:[%s3 + $0x54] sm:$0xf] %v801
  %846 = vst [vmem:[%s3 + $0x58] sm:$0xf] %v802
  %847 = vst [vmem:[%s3 + $0x5c] sm:$0xf] %v803
  %848 = vst [vmem:[%s3 + $0x60] sm:$0xf] %v804
  %849 = vst [vmem:[%s3 + $0x64] sm:$0xf] %v805
  %850 = vst [vmem:[%s3 + $0x68] sm:$0xf] %v806
  %851 = vst [vmem:[%s3 + $0x6c] sm:$0xf] %v807
  %852 = vst [vmem:[%s3 + $0x70] sm:$0xf] %v808
  %853 = vst [vmem:[%s3 + $0x74] sm:$0xf] %v809
  %854 = vst [vmem:[%s3 + $0x78] sm:$0xf] %v810
  %855 = vst [vmem:[%s3 + $0x7c] sm:$0xf] %v811
  %856 = vst [vmem:[%s3 + $0x80] sm:$0xf] %v812
  %857 = vst [vmem:[%s3 + $0x84] sm:$0xf] %v813
  %858 = vst [vmem:[%s3 + $0x88] sm:$0xf] %v814
  %859 = vst [vmem:[%s3 + $0x8c] sm:$0xf] %v815
  %860 = vst [vmem:[%s3 + $0x90] sm:$0xf] %v816
  %861 = vst [vmem:[%s3 + $0x94] sm:$0xf] %v817
  %862 = vst [vmem:[%s3 + $0x98] sm:$0xf] %v818
  %863 = vst [vmem:[%s3 + $0x9c] sm:$0xf] %v819
  %864 = vst [vmem:[%s3 + $0xa0] sm:$0xf] %v820
  %865 = vst [vmem:[%s3 + $0xa4] sm:$0xf] %v821
  %866 = vst [vmem:[%s3 + $0xa8] sm:$0xf] %v822
  %867 = vst [vmem:[%s3 + $0xac] sm:$0xf] %v823
  // Predicated region
  $region14: #{veegan_discriminator_forward.5} parent=0 // pred_check
    _
  $region15: #{veegan_discriminator_forward.5} parent=0 // pred_check_branch
    %869 = sbr.rel (0) target = $region17
  $region16: #{veegan_discriminator_forward.5} parent=0 // pred_region
    _
  $region17: #{veegan_discriminator_forward.5} parent=0 // pred_fallthru
    _
  // Predicated region
  $region18: #{veegan_discriminator_forward.5} parent=0 // pred_check
    _
  $region19: #{veegan_discriminator_forward.5} parent=0 // pred_check_branch
    %871 = sbr.rel (0) target = $region21
  $region20: #{veegan_discriminator_forward.5} parent=0 // pred_region
    _
  $region21: #{veegan_discriminator_forward.5} parent=0 // pred_fallthru
    _

// kernel: veegan_discriminator_forward.6
$region0: #{veegan_discriminator_forward.6}
  #allocation0 [shape = 'u32[]', space=smem, size = 0x4, offset = 0x4, fixed_abs, tag = 'smem constant byte address 0x4 - core index']
  #allocation1 [shape = 'u32[72,128]{1,0:T(1,128)}', space=vmem, size = 0x9000, scoped, tag = 'internal scratch']
  %s0 = inlined_call_operand.vmem [shape: bf16[32,896], index: 0, kind: input, shape index: {}]
  %s1 = inlined_call_operand.vmem [shape: bf16[896,128], index: 1, kind: input, shape index: {}]
  %s2 = inlined_call_operand.vmem [shape: f32[1,128], index: 2, kind: input, shape index: {}]
  %s3 = inlined_call_operand.vmem [shape: bf16[32,128], index: 3, kind: output, shape index: {}]
  %s4 = sld [smem:[#allocation0]]
  $region22: #{veegan_discriminator_forward.6} parent=0
    _
  %s6 = ssub.s32 1, %s4
  %s7 = scalar_select 0, %s6, %s4
  // Predicated region
  $region2: #{veegan_discriminator_forward.6} parent=0 // pred_check
    _
  $region3: #{veegan_discriminator_forward.6} parent=0 // pred_check_branch
    %9 = sbr.rel (0) target = $region5
  $region4: #{veegan_discriminator_forward.6} parent=0 // pred_region
    _
  $region5: #{veegan_discriminator_forward.6} parent=0 // pred_fallthru
    _
  // Predicated region
  $region6: #{veegan_discriminator_forward.6} parent=0 // pred_check
    _
  $region7: #{veegan_discriminator_forward.6} parent=0 // pred_check_branch
    %11 = sbr.rel (0) target = $region9
  $region8: #{veegan_discriminator_forward.6} parent=0 // pred_region
    _
  $region9: #{veegan_discriminator_forward.6} parent=0 // pred_fallthru
    _
  // Predicated region
  $region10: #{veegan_discriminator_forward.6} parent=0 // pred_check
    _
  $region11: #{veegan_discriminator_forward.6} parent=0 // pred_check_branch
    %13 = sbr.rel (0) target = $region13
  $region12: #{veegan_discriminator_forward.6} parent=0 // pred_region
    _
  $region13: #{veegan_discriminator_forward.6} parent=0 // pred_fallthru
    _
  %v14 = vld [vmem:[%s0] sm:$0xff]
  %v15 = vld [vmem:[%s0 + $0x8] sm:$0xff]
  %v16 = vld [vmem:[%s0 + $0x10] sm:$0xff]
  %v17 = vld [vmem:[%s0 + $0x18] sm:$0xf]
  %v18 = vld [vmem:[%s0 + $0x1c] sm:$0xff]
  %v19 = vld [vmem:[%s0 + $0x24] sm:$0xff]
  %v20 = vld [vmem:[%s0 + $0x2c] sm:$0xff]
  %v21 = vld [vmem:[%s0 + $0x34] sm:$0xf]
  %v22 = vld [vmem:[%s0 + $0x38] sm:$0xff]
  %v23 = vld [vmem:[%s0 + $0x40] sm:$0xff]
  %v24 = vld [vmem:[%s0 + $0x48] sm:$0xff]
  %v25 = vld [vmem:[%s0 + $0x50] sm:$0xf]
  %v26 = vld [vmem:[%s0 + $0x54] sm:$0xff]
  %v27 = vld [vmem:[%s0 + $0x5c] sm:$0xff]
  %v28 = vld [vmem:[%s0 + $0x64] sm:$0xff]
  %v29 = vld [vmem:[%s0 + $0x6c] sm:$0xf]
  %v30 = vld [vmem:[%s1] sm:$0xf]
  %v31 = vld [vmem:[%s1 + $0x4] sm:$0xf]
  %v32 = vld [vmem:[%s1 + $0x8] sm:$0xf]
  %v33 = vld [vmem:[%s1 + $0xc] sm:$0xf]
  %v34 = vld [vmem:[%s1 + $0x10] sm:$0xf]
  %v35 = vld [vmem:[%s1 + $0x14] sm:$0xf]
  %v36 = vld [vmem:[%s1 + $0x18] sm:$0xf]
  %v37 = vld [vmem:[%s1 + $0x1c] sm:$0xf]
  %v38 = vld [vmem:[%s1 + $0x20] sm:$0xf]
  %v39 = vld [vmem:[%s1 + $0x24] sm:$0xf]
  %v40 = vld [vmem:[%s1 + $0x28] sm:$0xf]
  %v41 = vld [vmem:[%s1 + $0x2c] sm:$0xf]
  %v42 = vld [vmem:[%s1 + $0x30] sm:$0xf]
  %v43 = vld [vmem:[%s1 + $0x34] sm:$0xf]
  %v44 = vld [vmem:[%s1 + $0x38] sm:$0xf]
  %v45 = vld [vmem:[%s1 + $0x3c] sm:$0xf]
  %v46 = vld [vmem:[%s1 + $0x40] sm:$0xf]
  %v47 = vld [vmem:[%s1 + $0x44] sm:$0xf]
  %v48 = vld [vmem:[%s1 + $0x48] sm:$0xf]
  %v49 = vld [vmem:[%s1 + $0x4c] sm:$0xf]
  %v50 = vld [vmem:[%s1 + $0x50] sm:$0xf]
  %v51 = vld [vmem:[%s1 + $0x54] sm:$0xf]
  %v52 = vld [vmem:[%s1 + $0x58] sm:$0xf]
  %v53 = vld [vmem:[%s1 + $0x5c] sm:$0xf]
  %v54 = vld [vmem:[%s1 + $0x60] sm:$0xf]
  %v55 = vld [vmem:[%s1 + $0x64] sm:$0xf]
  %v56 = vld [vmem:[%s1 + $0x68] sm:$0xf]
  %v57 = vld [vmem:[%s1 + $0x6c] sm:$0xf]
  %v58 = vld [vmem:[%s1 + $0x70] sm:$0xf]
  %v59 = vld [vmem:[%s1 + $0x74] sm:$0xf]
  %v60 = vld [vmem:[%s1 + $0x78] sm:$0xf]
  %v61 = vld [vmem:[%s1 + $0x7c] sm:$0xf]
  %v62 = vld [vmem:[%s1 + $0x80] sm:$0xf]
  %v63 = vld [vmem:[%s1 + $0x84] sm:$0xf]
  %v64 = vld [vmem:[%s1 + $0x88] sm:$0xf]
  %v65 = vld [vmem:[%s1 + $0x8c] sm:$0xf]
  %v66 = vld [vmem:[%s1 + $0x90] sm:$0xf]
  %v67 = vld [vmem:[%s1 + $0x94] sm:$0xf]
  %v68 = vld [vmem:[%s1 + $0x98] sm:$0xf]
  %v69 = vld [vmem:[%s1 + $0x9c] sm:$0xf]
  %v70 = vld [vmem:[%s1 + $0xa0] sm:$0xf]
  %v71 = vld [vmem:[%s1 + $0xa4] sm:$0xf]
  %v72 = vld [vmem:[%s1 + $0xa8] sm:$0xf]
  %v73 = vld [vmem:[%s1 + $0xac] sm:$0xf]
  %v74 = vld [vmem:[%s1 + $0xb0] sm:$0xf]
  %v75 = vld [vmem:[%s1 + $0xb4] sm:$0xf]
  %v76 = vld [vmem:[%s1 + $0xb8] sm:$0xf]
  %v77 = vld [vmem:[%s1 + $0xbc] sm:$0xf]
  %v78 = vld [vmem:[%s1 + $0xc0] sm:$0xf]
  %v79 = vld [vmem:[%s1 + $0xc4] sm:$0xf]
  %v80 = vld [vmem:[%s1 + $0xc8] sm:$0xf]
  %v81 = vld [vmem:[%s1 + $0xcc] sm:$0xf]
  %v82 = vld [vmem:[%s1 + $0xd0] sm:$0xf]
  %v83 = vld [vmem:[%s1 + $0xd4] sm:$0xf]
  %v84 = vld [vmem:[%s1 + $0xd8] sm:$0xf]
  %v85 = vld [vmem:[%s1 + $0xdc] sm:$0xf]
  %v86 = vld [vmem:[%s1 + $0xe0] sm:$0xf]
  %v87 = vld [vmem:[%s1 + $0xe4] sm:$0xf]
  %v88 = vld [vmem:[%s1 + $0xe8] sm:$0xf]
  %v89 = vld [vmem:[%s1 + $0xec] sm:$0xf]
  %v90 = vld [vmem:[%s1 + $0xf0] sm:$0xf]
  %v91 = vld [vmem:[%s1 + $0xf4] sm:$0xf]
  %v92 = vld [vmem:[%s1 + $0xf8] sm:$0xf]
  %v93 = vld [vmem:[%s1 + $0xfc] sm:$0xf]
  %v94 = vld [vmem:[%s1 + $0x100] sm:$0xf]
  %v95 = vld [vmem:[%s1 + $0x104] sm:$0xf]
  %v96 = vld [vmem:[%s1 + $0x108] sm:$0xf]
  %v97 = vld [vmem:[%s1 + $0x10c] sm:$0xf]
  %v98 = vld [vmem:[%s1 + $0x110] sm:$0xf]
  %v99 = vld [vmem:[%s1 + $0x114] sm:$0xf]
  %v100 = vld [vmem:[%s1 + $0x118] sm:$0xf]
  %v101 = vld [vmem:[%s1 + $0x11c] sm:$0xf]
  %v102 = vld [vmem:[%s1 + $0x120] sm:$0xf]
  %v103 = vld [vmem:[%s1 + $0x124] sm:$0xf]
  %v104 = vld [vmem:[%s1 + $0x128] sm:$0xf]
  %v105 = vld [vmem:[%s1 + $0x12c] sm:$0xf]
  %v106 = vld [vmem:[%s1 + $0x130] sm:$0xf]
  %v107 = vld [vmem:[%s1 + $0x134] sm:$0xf]
  %v108 = vld [vmem:[%s1 + $0x138] sm:$0xf]
  %v109 = vld [vmem:[%s1 + $0x13c] sm:$0xf]
  %v110 = vld [vmem:[%s1 + $0x140] sm:$0xf]
  %v111 = vld [vmem:[%s1 + $0x144] sm:$0xf]
  %v112 = vld [vmem:[%s1 + $0x148] sm:$0xf]
  %v113 = vld [vmem:[%s1 + $0x14c] sm:$0xf]
  %v114 = vld [vmem:[%s1 + $0x150] sm:$0xf]
  %v115 = vld [vmem:[%s1 + $0x154] sm:$0xf]
  %v116 = vld [vmem:[%s1 + $0x158] sm:$0xf]
  %v117 = vld [vmem:[%s1 + $0x15c] sm:$0xf]
  %v118 = vld [vmem:[%s1 + $0x160] sm:$0xf]
  %v119 = vld [vmem:[%s1 + $0x164] sm:$0xf]
  %v120 = vld [vmem:[%s1 + $0x168] sm:$0xf]
  %v121 = vld [vmem:[%s1 + $0x16c] sm:$0xf]
  %v122 = vld [vmem:[%s1 + $0x170] sm:$0xf]
  %v123 = vld [vmem:[%s1 + $0x174] sm:$0xf]
  %v124 = vld [vmem:[%s1 + $0x178] sm:$0xf]
  %v125 = vld [vmem:[%s1 + $0x17c] sm:$0xf]
  %v126 = vld [vmem:[%s1 + $0x180] sm:$0xf]
  %v127 = vld [vmem:[%s1 + $0x184] sm:$0xf]
  %v128 = vld [vmem:[%s1 + $0x188] sm:$0xf]
  %v129 = vld [vmem:[%s1 + $0x18c] sm:$0xf]
  %v130 = vld [vmem:[%s1 + $0x190] sm:$0xf]
  %v131 = vld [vmem:[%s1 + $0x194] sm:$0xf]
  %v132 = vld [vmem:[%s1 + $0x198] sm:$0xf]
  %v133 = vld [vmem:[%s1 + $0x19c] sm:$0xf]
  %v134 = vld [vmem:[%s1 + $0x1a0] sm:$0xf]
  %v135 = vld [vmem:[%s1 + $0x1a4] sm:$0xf]
  %v136 = vld [vmem:[%s1 + $0x1a8] sm:$0xf]
  %v137 = vld [vmem:[%s1 + $0x1ac] sm:$0xf]
  %v138 = vld [vmem:[%s1 + $0x1b0] sm:$0xf]
  %v139 = vld [vmem:[%s1 + $0x1b4] sm:$0xf]
  %v140 = vld [vmem:[%s1 + $0x1b8] sm:$0xf]
  %v141 = vld [vmem:[%s1 + $0x1bc] sm:$0xf]
  %v142 = vld [vmem:[%s2] sm:$0x1]
  %v144 = vperm.slane %v142, 0
  %v162 = vunpack.c.l.b16 %v14
  %v163 = vunpack.c.h.b16 %v14
  %v164 = vunpack.c.l.b16 %v15
  %v165 = vunpack.c.h.b16 %v15
  %v166 = vunpack.c.l.b16 %v16
  %v167 = vunpack.c.h.b16 %v16
  %v168 = vunpack.c.l.b16 %v17
  %v169 = vunpack.c.l.b16 %v18
  %v170 = vunpack.c.h.b16 %v18
  %v171 = vunpack.c.l.b16 %v19
  %v172 = vunpack.c.h.b16 %v19
  %v173 = vunpack.c.l.b16 %v20
  %v174 = vunpack.c.h.b16 %v20
  %v175 = vunpack.c.l.b16 %v21
  %v176 = vunpack.c.l.b16 %v22
  %v177 = vunpack.c.h.b16 %v22
  %v178 = vunpack.c.l.b16 %v23
  %v179 = vunpack.c.h.b16 %v23
  %v180 = vunpack.c.l.b16 %v24
  %v181 = vunpack.c.h.b16 %v24
  %v182 = vunpack.c.l.b16 %v25
  %v183 = vunpack.c.l.b16 %v26
  %v184 = vunpack.c.h.b16 %v26
  %v185 = vunpack.c.l.b16 %v27
  %v186 = vunpack.c.h.b16 %v27
  %v187 = vunpack.c.l.b16 %v28
  %v188 = vunpack.c.h.b16 %v28
  %v189 = vunpack.c.l.b16 %v29
  %v190 = vpack.c.b16 %v169, %v162
  %v191 = vpack.c.b16 %v170, %v163
  %v192 = vpack.c.b16 %v171, %v164
  %v193 = vpack.c.b16 %v172, %v165
  %v194 = vpack.c.b16 %v173, %v166
  %v195 = vpack.c.b16 %v174, %v167
  %v196 = vpack.c.b16 %v175, %v168
  %v197 = vpack.c.b16 %v183, %v176
  %v198 = vpack.c.b16 %v184, %v177
  %v199 = vpack.c.b16 %v185, %v178
  %v200 = vpack.c.b16 %v186, %v179
  %v201 = vpack.c.b16 %v187, %v180
  %v202 = vpack.c.b16 %v188, %v181
  %v203 = vpack.c.b16 %v189, %v182
  %v330 = vunpack.c.l.b16 %v30
  %v331 = vunpack.c.l.b16 %v31
  %v332 = vunpack.c.l.b16 %v32
  %v333 = vunpack.c.l.b16 %v33
  %v334 = vunpack.c.l.b16 %v34
  %v335 = vunpack.c.l.b16 %v35
  %v336 = vunpack.c.l.b16 %v36
  %v337 = vunpack.c.l.b16 %v37
  %v338 = vunpack.c.l.b16 %v38
  %v339 = vunpack.c.l.b16 %v39
  %v340 = vunpack.c.l.b16 %v40
  %v341 = vunpack.c.l.b16 %v41
  %v342 = vunpack.c.l.b16 %v42
  %v343 = vunpack.c.l.b16 %v43
  %v344 = vunpack.c.l.b16 %v44
  %v345 = vunpack.c.l.b16 %v45
  %v346 = vunpack.c.l.b16 %v46
  %v347 = vunpack.c.l.b16 %v47
  %v348 = vunpack.c.l.b16 %v48
  %v349 = vunpack.c.l.b16 %v49
  %v350 = vunpack.c.l.b16 %v50
  %v351 = vunpack.c.l.b16 %v51
  %v352 = vunpack.c.l.b16 %v52
  %v353 = vunpack.c.l.b16 %v53
  %v354 = vunpack.c.l.b16 %v54
  %v355 = vunpack.c.l.b16 %v55
  %v356 = vunpack.c.l.b16 %v56
  %v357 = vunpack.c.l.b16 %v57
  %v358 = vunpack.c.l.b16 %v58
  %v359 = vunpack.c.l.b16 %v59
  %v360 = vunpack.c.l.b16 %v60
  %v361 = vunpack.c.l.b16 %v61
  %v362 = vunpack.c.l.b16 %v62
  %v363 = vunpack.c.l.b16 %v63
  %v364 = vunpack.c.l.b16 %v64
  %v365 = vunpack.c.l.b16 %v65
  %v366 = vunpack.c.l.b16 %v66
  %v367 = vunpack.c.l.b16 %v67
  %v368 = vunpack.c.l.b16 %v68
  %v369 = vunpack.c.l.b16 %v69
  %v370 = vunpack.c.l.b16 %v70
  %v371 = vunpack.c.l.b16 %v71
  %v372 = vunpack.c.l.b16 %v72
  %v373 = vunpack.c.l.b16 %v73
  %v374 = vunpack.c.l.b16 %v74
  %v375 = vunpack.c.l.b16 %v75
  %v376 = vunpack.c.l.b16 %v76
  %v377 = vunpack.c.l.b16 %v77
  %v378 = vunpack.c.l.b16 %v78
  %v379 = vunpack.c.l.b16 %v79
  %v380 = vunpack.c.l.b16 %v80
  %v381 = vunpack.c.l.b16 %v81
  %v382 = vunpack.c.l.b16 %v82
  %v383 = vunpack.c.l.b16 %v83
  %v384 = vunpack.c.l.b16 %v84
  %v385 = vunpack.c.l.b16 %v85
  %v386 = vunpack.c.l.b16 %v86
  %v387 = vunpack.c.l.b16 %v87
  %v388 = vunpack.c.l.b16 %v88
  %v389 = vunpack.c.l.b16 %v89
  %v390 = vunpack.c.l.b16 %v90
  %v391 = vunpack.c.l.b16 %v91
  %v392 = vunpack.c.l.b16 %v92
  %v393 = vunpack.c.l.b16 %v93
  %v394 = vunpack.c.l.b16 %v94
  %v395 = vunpack.c.l.b16 %v95
  %v396 = vunpack.c.l.b16 %v96
  %v397 = vunpack.c.l.b16 %v97
  %v398 = vunpack.c.l.b16 %v98
  %v399 = vunpack.c.l.b16 %v99
  %v400 = vunpack.c.l.b16 %v100
  %v401 = vunpack.c.l.b16 %v101
  %v402 = vunpack.c.l.b16 %v102
  %v403 = vunpack.c.l.b16 %v103
  %v404 = vunpack.c.l.b16 %v104
  %v405 = vunpack.c.l.b16 %v105
  %v406 = vunpack.c.l.b16 %v106
  %v407 = vunpack.c.l.b16 %v107
  %v408 = vunpack.c.l.b16 %v108
  %v409 = vunpack.c.l.b16 %v109
  %v410 = vunpack.c.l.b16 %v110
  %v411 = vunpack.c.l.b16 %v111
  %v412 = vunpack.c.l.b16 %v112
  %v413 = vunpack.c.l.b16 %v113
  %v414 = vunpack.c.l.b16 %v114
  %v415 = vunpack.c.l.b16 %v115
  %v416 = vunpack.c.l.b16 %v116
  %v417 = vunpack.c.l.b16 %v117
  %v418 = vunpack.c.l.b16 %v118
  %v419 = vunpack.c.l.b16 %v119
  %v420 = vunpack.c.l.b16 %v120
  %v421 = vunpack.c.l.b16 %v121
  %v422 = vunpack.c.l.b16 %v122
  %v423 = vunpack.c.l.b16 %v123
  %v424 = vunpack.c.l.b16 %v124
  %v425 = vunpack.c.l.b16 %v125
  %v426 = vunpack.c.l.b16 %v126
  %v427 = vunpack.c.l.b16 %v127
  %v428 = vunpack.c.l.b16 %v128
  %v429 = vunpack.c.l.b16 %v129
  %v430 = vunpack.c.l.b16 %v130
  %v431 = vunpack.c.l.b16 %v131
  %v432 = vunpack.c.l.b16 %v132
  %v433 = vunpack.c.l.b16 %v133
  %v434 = vunpack.c.l.b16 %v134
  %v435 = vunpack.c.l.b16 %v135
  %v436 = vunpack.c.l.b16 %v136
  %v437 = vunpack.c.l.b16 %v137
  %v438 = vunpack.c.l.b16 %v138
  %v439 = vunpack.c.l.b16 %v139
  %v440 = vunpack.c.l.b16 %v140
  %v441 = vunpack.c.l.b16 %v141
  %v442 = vpack.c.b16 %v331, %v330
  %v443 = vpack.c.b16 %v333, %v332
  %v444 = vpack.c.b16 %v335, %v334
  %v445 = vpack.c.b16 %v337, %v336
  %v446 = vpack.c.b16 %v339, %v338
  %v447 = vpack.c.b16 %v341, %v340
  %v448 = vpack.c.b16 %v343, %v342
  %v449 = vpack.c.b16 %v345, %v344
  %v450 = vpack.c.b16 %v347, %v346
  %v451 = vpack.c.b16 %v349, %v348
  %v452 = vpack.c.b16 %v351, %v350
  %v453 = vpack.c.b16 %v353, %v352
  %v454 = vpack.c.b16 %v355, %v354
  %v455 = vpack.c.b16 %v357, %v356
  %v456 = vpack.c.b16 %v359, %v358
  %v457 = vpack.c.b16 %v361, %v360
  %v458 = vpack.c.b16 %v363, %v362
  %v459 = vpack.c.b16 %v365, %v364
  %v460 = vpack.c.b16 %v367, %v366
  %v461 = vpack.c.b16 %v369, %v368
  %v462 = vpack.c.b16 %v371, %v370
  %v463 = vpack.c.b16 %v373, %v372
  %v464 = vpack.c.b16 %v375, %v374
  %v465 = vpack.c.b16 %v377, %v376
  %v466 = vpack.c.b16 %v379, %v378
  %v467 = vpack.c.b16 %v381, %v380
  %v468 = vpack.c.b16 %v383, %v382
  %v469 = vpack.c.b16 %v385, %v384
  %v470 = vpack.c.b16 %v387, %v386
  %v471 = vpack.c.b16 %v389, %v388
  %v472 = vpack.c.b16 %v391, %v390
  %v473 = vpack.c.b16 %v393, %v392
  %v474 = vpack.c.b16 %v395, %v394
  %v475 = vpack.c.b16 %v397, %v396
  %v476 = vpack.c.b16 %v399, %v398
  %v477 = vpack.c.b16 %v401, %v400
  %v478 = vpack.c.b16 %v403, %v402
  %v479 = vpack.c.b16 %v405, %v404
  %v480 = vpack.c.b16 %v407, %v406
  %v481 = vpack.c.b16 %v409, %v408
  %v482 = vpack.c.b16 %v411, %v410
  %v483 = vpack.c.b16 %v413, %v412
  %v484 = vpack.c.b16 %v415, %v414
  %v485 = vpack.c.b16 %v417, %v416
  %v486 = vpack.c.b16 %v419, %v418
  %v487 = vpack.c.b16 %v421, %v420
  %v488 = vpack.c.b16 %v423, %v422
  %v489 = vpack.c.b16 %v425, %v424
  %v490 = vpack.c.b16 %v427, %v426
  %v491 = vpack.c.b16 %v429, %v428
  %v492 = vpack.c.b16 %v431, %v430
  %v493 = vpack.c.b16 %v433, %v432
  %v494 = vpack.c.b16 %v435, %v434
  %v495 = vpack.c.b16 %v437, %v436
  %v496 = vpack.c.b16 %v439, %v438
  %v497 = vpack.c.b16 %v441, %v440
  %554 = vmatpush.bf16.msra.mxu0 %v449
  %555 = vmatpush.bf16.msra.mxu0 %v448
  %556 = vmatpush.bf16.msra.mxu0 %v447
  %557 = vmatpush.bf16.msra.mxu0 %v446
  %558 = vmatpush.bf16.msra.mxu0 %v445
  %559 = vmatpush.bf16.msra.mxu0 %v444
  %560 = vmatpush.bf16.msra.mxu0 %v443
  %561 = vmatpush.bf16.msra.mxu0 %v442
  %562 = vmatmul.bf16.gmra.mxu0 %v190
  %v563 = vpop.f32.mrf.mxu0
  %v564 = vadd.f32 %v144, %v563
  %v565 = vpop.f32.mrf.mxu0
  %v566 = vadd.f32 %v144, %v565
  %567 = vmatmul.bf16.gmra.mxu0 %v197
  %v568 = vpop.f32.mrf.mxu0
  %v569 = vadd.f32 %v144, %v568
  %v570 = vpop.f32.mrf.mxu0
  %v571 = vadd.f32 %v144, %v570
  %572 = vdwg.mxu0
  %573 = vmatpush.bf16.msra.mxu0 %v457
  %574 = vmatpush.bf16.msra.mxu0 %v456
  %575 = vmatpush.bf16.msra.mxu0 %v455
  %576 = vmatpush.bf16.msra.mxu0 %v454
  %577 = vmatpush.bf16.msra.mxu0 %v453
  %578 = vmatpush.bf16.msra.mxu0 %v452
  %579 = vmatpush.bf16.msra.mxu0 %v451
  %580 = vmatpush.bf16.msra.mxu0 %v450
  %581 = vmatmul.bf16.gmra.mxu0 %v191
  %v582 = vpop.f32.mrf.mxu0
  %v583 = vadd.f32 %v564, %v582
  %v584 = vpop.f32.mrf.mxu0
  %v585 = vadd.f32 %v566, %v584
  %586 = vmatmul.bf16.gmra.mxu0 %v198
  %v587 = vpop.f32.mrf.mxu0
  %v588 = vadd.f32 %v569, %v587
  %v589 = vpop.f32.mrf.mxu0
  %v590 = vadd.f32 %v571, %v589
  %591 = vdwg.mxu0
  %592 = vmatpush.bf16.msra.mxu0 %v465
  %593 = vmatpush.bf16.msra.mxu0 %v464
  %594 = vmatpush.bf16.msra.mxu0 %v463
  %595 = vmatpush.bf16.msra.mxu0 %v462
  %596 = vmatpush.bf16.msra.mxu0 %v461
  %597 = vmatpush.bf16.msra.mxu0 %v460
  %598 = vmatpush.bf16.msra.mxu0 %v459
  %599 = vmatpush.bf16.msra.mxu0 %v458
  %600 = vmatmul.bf16.gmra.mxu0 %v192
  %v601 = vpop.f32.mrf.mxu0
  %v602 = vadd.f32 %v583, %v601
  %v603 = vpop.f32.mrf.mxu0
  %v604 = vadd.f32 %v585, %v603
  %605 = vmatmul.bf16.gmra.mxu0 %v199
  %v606 = vpop.f32.mrf.mxu0
  %v607 = vadd.f32 %v588, %v606
  %v608 = vpop.f32.mrf.mxu0
  %v609 = vadd.f32 %v590, %v608
  %610 = vdwg.mxu0
  %611 = vmatpush.bf16.msra.mxu0 %v473
  %612 = vmatpush.bf16.msra.mxu0 %v472
  %613 = vmatpush.bf16.msra.mxu0 %v471
  %614 = vmatpush.bf16.msra.mxu0 %v470
  %615 = vmatpush.bf16.msra.mxu0 %v469
  %616 = vmatpush.bf16.msra.mxu0 %v468
  %617 = vmatpush.bf16.msra.mxu0 %v467
  %618 = vmatpush.bf16.msra.mxu0 %v466
  %619 = vmatmul.bf16.gmra.mxu0 %v193
  %v620 = vpop.f32.mrf.mxu0
  %v621 = vadd.f32 %v602, %v620
  %v622 = vpop.f32.mrf.mxu0
  %v623 = vadd.f32 %v604, %v622
  %624 = vmatmul.bf16.gmra.mxu0 %v200
  %v625 = vpop.f32.mrf.mxu0
  %v626 = vadd.f32 %v607, %v625
  %v627 = vpop.f32.mrf.mxu0
  %v628 = vadd.f32 %v609, %v627
  %629 = vdwg.mxu0
  %630 = vmatpush.bf16.msra.mxu0 %v481
  %631 = vmatpush.bf16.msra.mxu0 %v480
  %632 = vmatpush.bf16.msra.mxu0 %v479
  %633 = vmatpush.bf16.msra.mxu0 %v478
  %634 = vmatpush.bf16.msra.mxu0 %v477
  %635 = vmatpush.bf16.msra.mxu0 %v476
  %636 = vmatpush.bf16.msra.mxu0 %v475
  %637 = vmatpush.bf16.msra.mxu0 %v474
  %638 = vmatmul.bf16.gmra.mxu0 %v194
  %v639 = vpop.f32.mrf.mxu0
  %v640 = vadd.f32 %v621, %v639
  %v641 = vpop.f32.mrf.mxu0
  %v642 = vadd.f32 %v623, %v641
  %643 = vmatmul.bf16.gmra.mxu0 %v201
  %v644 = vpop.f32.mrf.mxu0
  %v645 = vadd.f32 %v626, %v644
  %v646 = vpop.f32.mrf.mxu0
  %v647 = vadd.f32 %v628, %v646
  %648 = vdwg.mxu0
  %649 = vmatpush.bf16.msra.mxu0 %v489
  %650 = vmatpush.bf16.msra.mxu0 %v488
  %651 = vmatpush.bf16.msra.mxu0 %v487
  %652 = vmatpush.bf16.msra.mxu0 %v486
  %653 = vmatpush.bf16.msra.mxu0 %v485
  %654 = vmatpush.bf16.msra.mxu0 %v484
  %655 = vmatpush.bf16.msra.mxu0 %v483
  %656 = vmatpush.bf16.msra.mxu0 %v482
  %657 = vmatmul.bf16.gmra.mxu0 %v195
  %v658 = vpop.f32.mrf.mxu0
  %v659 = vadd.f32 %v640, %v658
  %v660 = vpop.f32.mrf.mxu0
  %v661 = vadd.f32 %v642, %v660
  %662 = vmatmul.bf16.gmra.mxu0 %v202
  %v663 = vpop.f32.mrf.mxu0
  %v664 = vadd.f32 %v645, %v663
  %v665 = vpop.f32.mrf.mxu0
  %v666 = vadd.f32 %v647, %v665
  %667 = vdwg.mxu0
  %668 = vmatpush.bf16.msra.mxu0 %v497
  %669 = vmatpush.bf16.msra.mxu0 %v496
  %670 = vmatpush.bf16.msra.mxu0 %v495
  %671 = vmatpush.bf16.msra.mxu0 %v494
  %672 = vmatpush.bf16.msra.mxu0 %v493
  %673 = vmatpush.bf16.msra.mxu0 %v492
  %674 = vmatpush.bf16.msra.mxu0 %v491
  %675 = vmatpush.bf16.msra.mxu0 %v490
  %676 = vmatmul.bf16.gmra.mxu0 %v196
  %v677 = vpop.f32.mrf.mxu0
  %v678 = vadd.f32 %v659, %v677
  %v679 = vpop.f32.mrf.mxu0
  %v680 = vadd.f32 %v661, %v679
  %681 = vmatmul.bf16.gmra.mxu0 %v203
  %v682 = vpop.f32.mrf.mxu0
  %v683 = vadd.f32 %v664, %v682
  %v684 = vpop.f32.mrf.mxu0
  %v685 = vadd.f32 %v666, %v684
  %686 = vdwg.mxu0
  %vm687 = vcmp.ge.f32.partialorder %v678, 0.0
  %vm688 = vcmp.ge.f32.partialorder %v680, 0.0
  %vm689 = vcmp.ge.f32.partialorder %v683, 0.0
  %vm690 = vcmp.ge.f32.partialorder %v685, 0.0
  %v691 = vmul.f32 %v678, 0.02
  %v692 = vmul.f32 %v680, 0.02
  %v693 = vmul.f32 %v683, 0.02
  %v694 = vmul.f32 %v685, 0.02
  %v695 = vsel %vm687, %v678, %v691
  %v696 = vsel %vm688, %v680, %v692
  %v697 = vsel %vm689, %v683, %v693
  %v698 = vsel %vm690, %v685, %v694
  %v699 = vpack.c.bf16 %v695, %v695
  %v700 = vpack.c.bf16 %v696, %v696
  %v701 = vpack.c.bf16 %v697, %v697
  %v702 = vpack.c.bf16 %v698, %v698
  %703 = vst [vmem:[%s3] sm:$0xf] %v699
  %704 = vst [vmem:[%s3 + $0x4] sm:$0xf] %v700
  %705 = vst [vmem:[%s3 + $0x8] sm:$0xf] %v701
  %706 = vst [vmem:[%s3 + $0xc] sm:$0xf] %v702
  // Predicated region
  $region14: #{veegan_discriminator_forward.6} parent=0 // pred_check
    _
  $region15: #{veegan_discriminator_forward.6} parent=0 // pred_check_branch
    %708 = sbr.rel (0) target = $region17
  $region16: #{veegan_discriminator_forward.6} parent=0 // pred_region
    _
  $region17: #{veegan_discriminator_forward.6} parent=0 // pred_fallthru
    _
  // Predicated region
  $region18: #{veegan_discriminator_forward.6} parent=0 // pred_check
    _
  $region19: #{veegan_discriminator_forward.6} parent=0 // pred_check_branch
    %710 = sbr.rel (0) target = $region21
  $region20: #{veegan_discriminator_forward.6} parent=0 // pred_region
    _
  $region21: #{veegan_discriminator_forward.6} parent=0 // pred_fallthru
    _

// kernel: veegan_discriminator_forward.7
$region0: #{veegan_discriminator_forward.7}
  #allocation0 [shape = 'u32[]', space=smem, size = 0x4, offset = 0x4, fixed_abs, tag = 'smem constant byte address 0x4 - core index']
  #allocation1 [shape = 'u32[72,128]{1,0:T(1,128)}', space=vmem, size = 0x9000, scoped, tag = 'internal scratch']
  %s0 = inlined_call_operand.vmem [shape: bf16[32,512], index: 0, kind: input, shape index: {}]
  %s1 = inlined_call_operand.vmem [shape: bf16[512,128], index: 1, kind: input, shape index: {}]
  %s2 = inlined_call_operand.vmem [shape: f32[1,128], index: 2, kind: input, shape index: {}]
  %s3 = inlined_call_operand.vmem [shape: bf16[32,128], index: 3, kind: input, shape index: {}]
  %s4 = inlined_call_operand.vmem [shape: bf16[128,128], index: 4, kind: input, shape index: {}]
  %s5 = inlined_call_operand.vmem [shape: bf16[128,128], index: 5, kind: input, shape index: {}]
  %s6 = inlined_call_operand.vmem [shape: f32[1,128], index: 6, kind: input, shape index: {}]
  %s7 = inlined_call_operand.vmem [shape: bf16[128,128], index: 7, kind: input, shape index: {}]
  %s8 = inlined_call_operand.vmem [shape: f32[1,128], index: 8, kind: input, shape index: {}]
  %s9 = inlined_call_operand.vmem [shape: f32[32,128], index: 9, kind: output, shape index: {}]
  %s10 = sld [smem:[#allocation0]]
  $region46: #{veegan_discriminator_forward.7} parent=0
    _
  %s12 = ssub.s32 1, %s10
  %s13 = scalar_select 0, %s12, %s10
  // Predicated region
  $region2: #{veegan_discriminator_forward.7} parent=0 // pred_check
    _
  $region3: #{veegan_discriminator_forward.7} parent=0 // pred_check_branch
    %15 = sbr.rel (0) target = $region5
  $region4: #{veegan_discriminator_forward.7} parent=0 // pred_region
    _
  $region5: #{veegan_discriminator_forward.7} parent=0 // pred_fallthru
    _
  // Predicated region
  $region6: #{veegan_discriminator_forward.7} parent=0 // pred_check
    _
  $region7: #{veegan_discriminator_forward.7} parent=0 // pred_check_branch
    %17 = sbr.rel (0) target = $region9
  $region8: #{veegan_discriminator_forward.7} parent=0 // pred_region
    _
  $region9: #{veegan_discriminator_forward.7} parent=0 // pred_fallthru
    _
  // Predicated region
  $region10: #{veegan_discriminator_forward.7} parent=0 // pred_check
    _
  $region11: #{veegan_discriminator_forward.7} parent=0 // pred_check_branch
    %19 = sbr.rel (0) target = $region13
  $region12: #{veegan_discriminator_forward.7} parent=0 // pred_region
    _
  $region13: #{veegan_discriminator_forward.7} parent=0 // pred_fallthru
    _
  // Predicated region
  $region14: #{veegan_discriminator_forward.7} parent=0 // pred_check
    _
  $region15: #{veegan_discriminator_forward.7} parent=0 // pred_check_branch
    %21 = sbr.rel (0) target = $region17
  $region16: #{veegan_discriminator_forward.7} parent=0 // pred_region
    _
  $region17: #{veegan_discriminator_forward.7} parent=0 // pred_fallthru
    _
  // Predicated region
  $region18: #{veegan_discriminator_forward.7} parent=0 // pred_check
    _
  $region19: #{veegan_discriminator_forward.7} parent=0 // pred_check_branch
    %23 = sbr.rel (0) target = $region21
  $region20: #{veegan_discriminator_forward.7} parent=0 // pred_region
    _
  $region21: #{veegan_discriminator_forward.7} parent=0 // pred_fallthru
    _
  // Predicated region
  $region22: #{veegan_discriminator_forward.7} parent=0 // pred_check
    _
  $region23: #{veegan_discriminator_forward.7} parent=0 // pred_check_branch
    %25 = sbr.rel (0) target = $region25
  $region24: #{veegan_discriminator_forward.7} parent=0 // pred_region
    _
  $region25: #{veegan_discriminator_forward.7} parent=0 // pred_fallthru
    _
  // Predicated region
  $region26: #{veegan_discriminator_forward.7} parent=0 // pred_check
    _
  $region27: #{veegan_discriminator_forward.7} parent=0 // pred_check_branch
    %27 = sbr.rel (0) target = $region29
  $region28: #{veegan_discriminator_forward.7} parent=0 // pred_region
    _
  $region29: #{veegan_discriminator_forward.7} parent=0 // pred_fallthru
    _
  // Predicated region
  $region30: #{veegan_discriminator_forward.7} parent=0 // pred_check
    _
  $region31: #{veegan_discriminator_forward.7} parent=0 // pred_check_branch
    %29 = sbr.rel (0) target = $region33
  $region32: #{veegan_discriminator_forward.7} parent=0 // pred_region
    _
  $region33: #{veegan_discriminator_forward.7} parent=0 // pred_fallthru
    _
  // Predicated region
  $region34: #{veegan_discriminator_forward.7} parent=0 // pred_check
    _
  $region35: #{veegan_discriminator_forward.7} parent=0 // pred_check_branch
    %31 = sbr.rel (0) target = $region37
  $region36: #{veegan_discriminator_forward.7} parent=0 // pred_region
    _
  $region37: #{veegan_discriminator_forward.7} parent=0 // pred_fallthru
    _
  %v32 = vld [vmem:[%s0] sm:$0xff]
  %v33 = vld [vmem:[%s0 + $0x8] sm:$0xff]
  %v34 = vld [vmem:[%s0 + $0x10] sm:$0xff]
  %v35 = vld [vmem:[%s0 + $0x18] sm:$0xff]
  %v36 = vld [vmem:[%s0 + $0x20] sm:$0xff]
  %v37 = vld [vmem:[%s0 + $0x28] sm:$0xff]
  %v38 = vld [vmem:[%s0 + $0x30] sm:$0xff]
  %v39 = vld [vmem:[%s0 + $0x38] sm:$0xff]
  %v40 = vld [vmem:[%s1] sm:$0xf]
  %v41 = vld [vmem:[%s1 + $0x4] sm:$0xf]
  %v42 = vld [vmem:[%s1 + $0x8] sm:$0xf]
  %v43 = vld [vmem:[%s1 + $0xc] sm:$0xf]
  %v44 = vld [vmem:[%s1 + $0x10] sm:$0xf]
  %v45 = vld [vmem:[%s1 + $0x14] sm:$0xf]
  %v46 = vld [vmem:[%s1 + $0x18] sm:$0xf]
  %v47 = vld [vmem:[%s1 + $0x1c] sm:$0xf]
  %v48 = vld [vmem:[%s1 + $0x20] sm:$0xf]
  %v49 = vld [vmem:[%s1 + $0x24] sm:$0xf]
  %v50 = vld [vmem:[%s1 + $0x28] sm:$0xf]
  %v51 = vld [vmem:[%s1 + $0x2c] sm:$0xf]
  %v52 = vld [vmem:[%s1 + $0x30] sm:$0xf]
  %v53 = vld [vmem:[%s1 + $0x34] sm:$0xf]
  %v54 = vld [vmem:[%s1 + $0x38] sm:$0xf]
  %v55 = vld [vmem:[%s1 + $0x3c] sm:$0xf]
  %v56 = vld [vmem:[%s1 + $0x40] sm:$0xf]
  %v57 = vld [vmem:[%s1 + $0x44] sm:$0xf]
  %v58 = vld [vmem:[%s1 + $0x48] sm:$0xf]
  %v59 = vld [vmem:[%s1 + $0x4c] sm:$0xf]
  %v60 = vld [vmem:[%s1 + $0x50] sm:$0xf]
  %v61 = vld [vmem:[%s1 + $0x54] sm:$0xf]
  %v62 = vld [vmem:[%s1 + $0x58] sm:$0xf]
  %v63 = vld [vmem:[%s1 + $0x5c] sm:$0xf]
  %v64 = vld [vmem:[%s1 + $0x60] sm:$0xf]
  %v65 = vld [vmem:[%s1 + $0x64] sm:$0xf]
  %v66 = vld [vmem:[%s1 + $0x68] sm:$0xf]
  %v67 = vld [vmem:[%s1 + $0x6c] sm:$0xf]
  %v68 = vld [vmem:[%s1 + $0x70] sm:$0xf]
  %v69 = vld [vmem:[%s1 + $0x74] sm:$0xf]
  %v70 = vld [vmem:[%s1 + $0x78] sm:$0xf]
  %v71 = vld [vmem:[%s1 + $0x7c] sm:$0xf]
  %v72 = vld [vmem:[%s1 + $0x80] sm:$0xf]
  %v73 = vld [vmem:[%s1 + $0x84] sm:$0xf]
  %v74 = vld [vmem:[%s1 + $0x88] sm:$0xf]
  %v75 = vld [vmem:[%s1 + $0x8c] sm:$0xf]
  %v76 = vld [vmem:[%s1 + $0x90] sm:$0xf]
  %v77 = vld [vmem:[%s1 + $0x94] sm:$0xf]
  %v78 = vld [vmem:[%s1 + $0x98] sm:$0xf]
  %v79 = vld [vmem:[%s1 + $0x9c] sm:$0xf]
  %v80 = vld [vmem:[%s1 + $0xa0] sm:$0xf]
  %v81 = vld [vmem:[%s1 + $0xa4] sm:$0xf]
  %v82 = vld [vmem:[%s1 + $0xa8] sm:$0xf]
  %v83 = vld [vmem:[%s1 + $0xac] sm:$0xf]
  %v84 = vld [vmem:[%s1 + $0xb0] sm:$0xf]
  %v85 = vld [vmem:[%s1 + $0xb4] sm:$0xf]
  %v86 = vld [vmem:[%s1 + $0xb8] sm:$0xf]
  %v87 = vld [vmem:[%s1 + $0xbc] sm:$0xf]
  %v88 = vld [vmem:[%s1 + $0xc0] sm:$0xf]
  %v89 = vld [vmem:[%s1 + $0xc4] sm:$0xf]
  %v90 = vld [vmem:[%s1 + $0xc8] sm:$0xf]
  %v91 = vld [vmem:[%s1 + $0xcc] sm:$0xf]
  %v92 = vld [vmem:[%s1 + $0xd0] sm:$0xf]
  %v93 = vld [vmem:[%s1 + $0xd4] sm:$0xf]
  %v94 = vld [vmem:[%s1 + $0xd8] sm:$0xf]
  %v95 = vld [vmem:[%s1 + $0xdc] sm:$0xf]
  %v96 = vld [vmem:[%s1 + $0xe0] sm:$0xf]
  %v97 = vld [vmem:[%s1 + $0xe4] sm:$0xf]
  %v98 = vld [vmem:[%s1 + $0xe8] sm:$0xf]
  %v99 = vld [vmem:[%s1 + $0xec] sm:$0xf]
  %v100 = vld [vmem:[%s1 + $0xf0] sm:$0xf]
  %v101 = vld [vmem:[%s1 + $0xf4] sm:$0xf]
  %v102 = vld [vmem:[%s1 + $0xf8] sm:$0xf]
  %v103 = vld [vmem:[%s1 + $0xfc] sm:$0xf]
  %v104 = vld [vmem:[%s2] sm:$0x1]
  %v106 = vperm.slane %v104, 0
  %v116 = vunpack.c.l.b16 %v32
  %v117 = vunpack.c.h.b16 %v32
  %v118 = vunpack.c.l.b16 %v33
  %v119 = vunpack.c.h.b16 %v33
  %v120 = vunpack.c.l.b16 %v34
  %v121 = vunpack.c.h.b16 %v34
  %v122 = vunpack.c.l.b16 %v35
  %v123 = vunpack.c.h.b16 %v35
  %v124 = vunpack.c.l.b16 %v36
  %v125 = vunpack.c.h.b16 %v36
  %v126 = vunpack.c.l.b16 %v37
  %v127 = vunpack.c.h.b16 %v37
  %v128 = vunpack.c.l.b16 %v38
  %v129 = vunpack.c.h.b16 %v38
  %v130 = vunpack.c.l.b16 %v39
  %v131 = vunpack.c.h.b16 %v39
  %v132 = vpack.c.b16 %v120, %v116
  %v133 = vpack.c.b16 %v121, %v117
  %v134 = vpack.c.b16 %v122, %v118
  %v135 = vpack.c.b16 %v123, %v119
  %v136 = vpack.c.b16 %v128, %v124
  %v137 = vpack.c.b16 %v129, %v125
  %v138 = vpack.c.b16 %v130, %v126
  %v139 = vpack.c.b16 %v131, %v127
  %v212 = vunpack.c.l.b16 %v40
  %v213 = vunpack.c.l.b16 %v41
  %v214 = vunpack.c.l.b16 %v42
  %v215 = vunpack.c.l.b16 %v43
  %v216 = vunpack.c.l.b16 %v44
  %v217 = vunpack.c.l.b16 %v45
  %v218 = vunpack.c.l.b16 %v46
  %v219 = vunpack.c.l.b16 %v47
  %v220 = vunpack.c.l.b16 %v48
  %v221 = vunpack.c.l.b16 %v49
  %v222 = vunpack.c.l.b16 %v50
  %v223 = vunpack.c.l.b16 %v51
  %v224 = vunpack.c.l.b16 %v52
  %v225 = vunpack.c.l.b16 %v53
  %v226 = vunpack.c.l.b16 %v54
  %v227 = vunpack.c.l.b16 %v55
  %v228 = vunpack.c.l.b16 %v56
  %v229 = vunpack.c.l.b16 %v57
  %v230 = vunpack.c.l.b16 %v58
  %v231 = vunpack.c.l.b16 %v59
  %v232 = vunpack.c.l.b16 %v60
  %v233 = vunpack.c.l.b16 %v61
  %v234 = vunpack.c.l.b16 %v62
  %v235 = vunpack.c.l.b16 %v63
  %v236 = vunpack.c.l.b16 %v64
  %v237 = vunpack.c.l.b16 %v65
  %v238 = vunpack.c.l.b16 %v66
  %v239 = vunpack.c.l.b16 %v67
  %v240 = vunpack.c.l.b16 %v68
  %v241 = vunpack.c.l.b16 %v69
  %v242 = vunpack.c.l.b16 %v70
  %v243 = vunpack.c.l.b16 %v71
  %v244 = vunpack.c.l.b16 %v72
  %v245 = vunpack.c.l.b16 %v73
  %v246 = vunpack.c.l.b16 %v74
  %v247 = vunpack.c.l.b16 %v75
  %v248 = vunpack.c.l.b16 %v76
  %v249 = vunpack.c.l.b16 %v77
  %v250 = vunpack.c.l.b16 %v78
  %v251 = vunpack.c.l.b16 %v79
  %v252 = vunpack.c.l.b16 %v80
  %v253 = vunpack.c.l.b16 %v81
  %v254 = vunpack.c.l.b16 %v82
  %v255 = vunpack.c.l.b16 %v83
  %v256 = vunpack.c.l.b16 %v84
  %v257 = vunpack.c.l.b16 %v85
  %v258 = vunpack.c.l.b16 %v86
  %v259 = vunpack.c.l.b16 %v87
  %v260 = vunpack.c.l.b16 %v88
  %v261 = vunpack.c.l.b16 %v89
  %v262 = vunpack.c.l.b16 %v90
  %v263 = vunpack.c.l.b16 %v91
  %v264 = vunpack.c.l.b16 %v92
  %v265 = vunpack.c.l.b16 %v93
  %v266 = vunpack.c.l.b16 %v94
  %v267 = vunpack.c.l.b16 %v95
  %v268 = vunpack.c.l.b16 %v96
  %v269 = vunpack.c.l.b16 %v97
  %v270 = vunpack.c.l.b16 %v98
  %v271 = vunpack.c.l.b16 %v99
  %v272 = vunpack.c.l.b16 %v100
  %v273 = vunpack.c.l.b16 %v101
  %v274 = vunpack.c.l.b16 %v102
  %v275 = vunpack.c.l.b16 %v103
  %v276 = vpack.c.b16 %v213, %v212
  %v277 = vpack.c.b16 %v215, %v214
  %v278 = vpack.c.b16 %v217, %v216
  %v279 = vpack.c.b16 %v219, %v218
  %v280 = vpack.c.b16 %v221, %v220
  %v281 = vpack.c.b16 %v223, %v222
  %v282 = vpack.c.b16 %v225, %v224
  %v283 = vpack.c.b16 %v227, %v226
  %v284 = vpack.c.b16 %v229, %v228
  %v285 = vpack.c.b16 %v231, %v230
  %v286 = vpack.c.b16 %v233, %v232
  %v287 = vpack.c.b16 %v235, %v234
  %v288 = vpack.c.b16 %v237, %v236
  %v289 = vpack.c.b16 %v239, %v238
  %v290 = vpack.c.b16 %v241, %v240
  %v291 = vpack.c.b16 %v243, %v242
  %v292 = vpack.c.b16 %v245, %v244
  %v293 = vpack.c.b16 %v247, %v246
  %v294 = vpack.c.b16 %v249, %v248
  %v295 = vpack.c.b16 %v251, %v250
  %v296 = vpack.c.b16 %v253, %v252
  %v297 = vpack.c.b16 %v255, %v254
  %v298 = vpack.c.b16 %v257, %v256
  %v299 = vpack.c.b16 %v259, %v258
  %v300 = vpack.c.b16 %v261, %v260
  %v301 = vpack.c.b16 %v263, %v262
  %v302 = vpack.c.b16 %v265, %v264
  %v303 = vpack.c.b16 %v267, %v266
  %v304 = vpack.c.b16 %v269, %v268
  %v305 = vpack.c.b16 %v271, %v270
  %v306 = vpack.c.b16 %v273, %v272
  %v307 = vpack.c.b16 %v275, %v274
  %340 = vmatpush.bf16.msra.mxu0 %v283
  %341 = vmatpush.bf16.msra.mxu0 %v282
  %342 = vmatpush.bf16.msra.mxu0 %v281
  %343 = vmatpush.bf16.msra.mxu0 %v280
  %344 = vmatpush.bf16.msra.mxu0 %v279
  %345 = vmatpush.bf16.msra.mxu0 %v278
  %346 = vmatpush.bf16.msra.mxu0 %v277
  %347 = vmatpush.bf16.msra.mxu0 %v276
  %348 = vmatmul.bf16.gmra.mxu0 %v132
  %v349 = vpop.f32.mrf.mxu0
  %v350 = vadd.f32 %v106, %v349
  %v351 = vpop.f32.mrf.mxu0
  %v352 = vadd.f32 %v106, %v351
  %353 = vmatmul.bf16.gmra.mxu0 %v136
  %v354 = vpop.f32.mrf.mxu0
  %v355 = vadd.f32 %v106, %v354
  %v356 = vpop.f32.mrf.mxu0
  %v357 = vadd.f32 %v106, %v356
  %358 = vdwg.mxu0
  %359 = vmatpush.bf16.msra.mxu0 %v291
  %360 = vmatpush.bf16.msra.mxu0 %v290
  %361 = vmatpush.bf16.msra.mxu0 %v289
  %362 = vmatpush.bf16.msra.mxu0 %v288
  %363 = vmatpush.bf16.msra.mxu0 %v287
  %364 = vmatpush.bf16.msra.mxu0 %v286
  %365 = vmatpush.bf16.msra.mxu0 %v285
  %366 = vmatpush.bf16.msra.mxu0 %v284
  %367 = vmatmul.bf16.gmra.mxu0 %v133
  %v368 = vpop.f32.mrf.mxu0
  %v369 = vadd.f32 %v350, %v368
  %v370 = vpop.f32.mrf.mxu0
  %v371 = vadd.f32 %v352, %v370
  %372 = vmatmul.bf16.gmra.mxu0 %v137
  %v373 = vpop.f32.mrf.mxu0
  %v374 = vadd.f32 %v355, %v373
  %v375 = vpop.f32.mrf.mxu0
  %v376 = vadd.f32 %v357, %v375
  %377 = vdwg.mxu0
  %378 = vmatpush.bf16.msra.mxu0 %v299
  %379 = vmatpush.bf16.msra.mxu0 %v298
  %380 = vmatpush.bf16.msra.mxu0 %v297
  %381 = vmatpush.bf16.msra.mxu0 %v296
  %382 = vmatpush.bf16.msra.mxu0 %v295
  %383 = vmatpush.bf16.msra.mxu0 %v294
  %384 = vmatpush.bf16.msra.mxu0 %v293
  %385 = vmatpush.bf16.msra.mxu0 %v292
  %386 = vmatmul.bf16.gmra.mxu0 %v134
  %v387 = vpop.f32.mrf.mxu0
  %v388 = vadd.f32 %v369, %v387
  %v389 = vpop.f32.mrf.mxu0
  %v390 = vadd.f32 %v371, %v389
  %391 = vmatmul.bf16.gmra.mxu0 %v138
  %v392 = vpop.f32.mrf.mxu0
  %v393 = vadd.f32 %v374, %v392
  %v394 = vpop.f32.mrf.mxu0
  %v395 = vadd.f32 %v376, %v394
  %396 = vdwg.mxu0
  %397 = vmatpush.bf16.msra.mxu0 %v307
  %398 = vmatpush.bf16.msra.mxu0 %v306
  %399 = vmatpush.bf16.msra.mxu0 %v305
  %400 = vmatpush.bf16.msra.mxu0 %v304
  %401 = vmatpush.bf16.msra.mxu0 %v303
  %402 = vmatpush.bf16.msra.mxu0 %v302
  %403 = vmatpush.bf16.msra.mxu0 %v301
  %404 = vmatpush.bf16.msra.mxu0 %v300
  %405 = vmatmul.bf16.gmra.mxu0 %v135
  %v406 = vpop.f32.mrf.mxu0
  %v407 = vadd.f32 %v388, %v406
  %v408 = vpop.f32.mrf.mxu0
  %v409 = vadd.f32 %v390, %v408
  %410 = vmatmul.bf16.gmra.mxu0 %v139
  %v411 = vpop.f32.mrf.mxu0
  %v412 = vadd.f32 %v393, %v411
  %v413 = vpop.f32.mrf.mxu0
  %v414 = vadd.f32 %v395, %v413
  %415 = vdwg.mxu0
  %vm416 = vcmp.ge.f32.partialorder %v407, 0.0
  %vm417 = vcmp.ge.f32.partialorder %v409, 0.0
  %vm418 = vcmp.ge.f32.partialorder %v412, 0.0
  %vm419 = vcmp.ge.f32.partialorder %v414, 0.0
  %v420 = vmul.f32 %v407, 0.02
  %v421 = vmul.f32 %v409, 0.02
  %v422 = vmul.f32 %v412, 0.02
  %v423 = vmul.f32 %v414, 0.02
  %v424 = vsel %vm416, %v407, %v420
  %v425 = vsel %vm417, %v409, %v421
  %v426 = vsel %vm418, %v412, %v422
  %v427 = vsel %vm419, %v414, %v423
  %v428 = vpack.c.bf16 %v425, %v424
  %v429 = vpack.c.bf16 %v427, %v426
  %v430 = vld [vmem:[%s4] sm:$0xf]
  %v431 = vld [vmem:[%s4 + $0x4] sm:$0xf]
  %v432 = vld [vmem:[%s4 + $0x8] sm:$0xf]
  %v433 = vld [vmem:[%s4 + $0xc] sm:$0xf]
  %v434 = vld [vmem:[%s4 + $0x10] sm:$0xf]
  %v435 = vld [vmem:[%s4 + $0x14] sm:$0xf]
  %v436 = vld [vmem:[%s4 + $0x18] sm:$0xf]
  %v437 = vld [vmem:[%s4 + $0x1c] sm:$0xf]
  %v438 = vld [vmem:[%s4 + $0x20] sm:$0xf]
  %v439 = vld [vmem:[%s4 + $0x24] sm:$0xf]
  %v440 = vld [vmem:[%s4 + $0x28] sm:$0xf]
  %v441 = vld [vmem:[%s4 + $0x2c] sm:$0xf]
  %v442 = vld [vmem:[%s4 + $0x30] sm:$0xf]
  %v443 = vld [vmem:[%s4 + $0x34] sm:$0xf]
  %v444 = vld [vmem:[%s4 + $0x38] sm:$0xf]
  %v445 = vld [vmem:[%s4 + $0x3c] sm:$0xf]
  %v446 = vld [vmem:[%s3] sm:$0xf]
  %v447 = vld [vmem:[%s3 + $0x4] sm:$0xf]
  %v448 = vld [vmem:[%s3 + $0x8] sm:$0xf]
  %v449 = vld [vmem:[%s3 + $0xc] sm:$0xf]
  %v450 = vld [vmem:[%s5] sm:$0xf]
  %v451 = vld [vmem:[%s5 + $0x4] sm:$0xf]
  %v452 = vld [vmem:[%s5 + $0x8] sm:$0xf]
  %v453 = vld [vmem:[%s5 + $0xc] sm:$0xf]
  %v454 = vld [vmem:[%s5 + $0x10] sm:$0xf]
  %v455 = vld [vmem:[%s5 + $0x14] sm:$0xf]
  %v456 = vld [vmem:[%s5 + $0x18] sm:$0xf]
  %v457 = vld [vmem:[%s5 + $0x1c] sm:$0xf]
  %v458 = vld [vmem:[%s5 + $0x20] sm:$0xf]
  %v459 = vld [vmem:[%s5 + $0x24] sm:$0xf]
  %v460 = vld [vmem:[%s5 + $0x28] sm:$0xf]
  %v461 = vld [vmem:[%s5 + $0x2c] sm:$0xf]
  %v462 = vld [vmem:[%s5 + $0x30] sm:$0xf]
  %v463 = vld [vmem:[%s5 + $0x34] sm:$0xf]
  %v464 = vld [vmem:[%s5 + $0x38] sm:$0xf]
  %v465 = vld [vmem:[%s5 + $0x3c] sm:$0xf]
  %v470 = vunpack.c.l.b16 %v446
  %v471 = vunpack.c.l.b16 %v447
  %v472 = vunpack.c.l.b16 %v448
  %v473 = vunpack.c.l.b16 %v449
  %v474 = vpack.c.b16 %v471, %v470
  %v475 = vpack.c.b16 %v473, %v472
  %v494 = vunpack.c.l.b16 %v450
  %v495 = vunpack.c.l.b16 %v451
  %v496 = vunpack.c.l.b16 %v452
  %v497 = vunpack.c.l.b16 %v453
  %v498 = vunpack.c.l.b16 %v454
  %v499 = vunpack.c.l.b16 %v455
  %v500 = vunpack.c.l.b16 %v456
  %v501 = vunpack.c.l.b16 %v457
  %v502 = vunpack.c.l.b16 %v458
  %v503 = vunpack.c.l.b16 %v459
  %v504 = vunpack.c.l.b16 %v460
  %v505 = vunpack.c.l.b16 %v461
  %v506 = vunpack.c.l.b16 %v462
  %v507 = vunpack.c.l.b16 %v463
  %v508 = vunpack.c.l.b16 %v464
  %v509 = vunpack.c.l.b16 %v465
  %v510 = vpack.c.b16 %v495, %v494
  %v511 = vpack.c.b16 %v497, %v496
  %v512 = vpack.c.b16 %v499, %v498
  %v513 = vpack.c.b16 %v501, %v500
  %v514 = vpack.c.b16 %v503, %v502
  %v515 = vpack.c.b16 %v505, %v504
  %v516 = vpack.c.b16 %v507, %v506
  %v517 = vpack.c.b16 %v509, %v508
  %526 = vmatpush.bf16.msra.mxu0 %v517
  %527 = vmatpush.bf16.msra.mxu0 %v516
  %528 = vmatpush.bf16.msra.mxu0 %v515
  %529 = vmatpush.bf16.msra.mxu0 %v514
  %530 = vmatpush.bf16.msra.mxu0 %v513
  %531 = vmatpush.bf16.msra.mxu0 %v512
  %532 = vmatpush.bf16.msra.mxu0 %v511
  %533 = vmatpush.bf16.msra.mxu0 %v510
  %534 = vmatmul.bf16.gmra.mxu0 %v474
  %v535 = vpop.f32.mrf.mxu0
  %v536 = vadd.f32 0.0, %v535
  %v537 = vpop.f32.mrf.mxu0
  %v538 = vadd.f32 0.0, %v537
  %539 = vmatmul.bf16.gmra.mxu0 %v475
  %v540 = vpop.f32.mrf.mxu0
  %v541 = vadd.f32 0.0, %v540
  %v542 = vpop.f32.mrf.mxu0
  %v543 = vadd.f32 0.0, %v542
  %544 = vdwg.mxu0
  %v561 = vunpack.c.l.b16 %v430
  %v562 = vunpack.c.l.b16 %v431
  %v563 = vunpack.c.l.b16 %v432
  %v564 = vunpack.c.l.b16 %v433
  %v565 = vunpack.c.l.b16 %v434
  %v566 = vunpack.c.l.b16 %v435
  %v567 = vunpack.c.l.b16 %v436
  %v568 = vunpack.c.l.b16 %v437
  %v569 = vunpack.c.l.b16 %v438
  %v570 = vunpack.c.l.b16 %v439
  %v571 = vunpack.c.l.b16 %v440
  %v572 = vunpack.c.l.b16 %v441
  %v573 = vunpack.c.l.b16 %v442
  %v574 = vunpack.c.l.b16 %v443
  %v575 = vunpack.c.l.b16 %v444
  %v576 = vunpack.c.l.b16 %v445
  %v577 = vpack.c.b16 %v562, %v561
  %v578 = vpack.c.b16 %v564, %v563
  %v579 = vpack.c.b16 %v566, %v565
  %v580 = vpack.c.b16 %v568, %v567
  %v581 = vpack.c.b16 %v570, %v569
  %v582 = vpack.c.b16 %v572, %v571
  %v583 = vpack.c.b16 %v574, %v573
  %v584 = vpack.c.b16 %v576, %v575
  %593 = vmatpush.bf16.msra.mxu0 %v584
  %594 = vmatpush.bf16.msra.mxu0 %v583
  %595 = vmatpush.bf16.msra.mxu0 %v582
  %596 = vmatpush.bf16.msra.mxu0 %v581
  %597 = vmatpush.bf16.msra.mxu0 %v580
  %598 = vmatpush.bf16.msra.mxu0 %v579
  %599 = vmatpush.bf16.msra.mxu0 %v578
  %600 = vmatpush.bf16.msra.mxu0 %v577
  %601 = vmatmul.bf16.gmra.mxu0 %v428
  %v602 = vpop.f32.mrf.mxu0
  %v603 = vadd.f32 %v536, %v602
  %v604 = vpop.f32.mrf.mxu0
  %v605 = vadd.f32 %v538, %v604
  %606 = vmatmul.bf16.gmra.mxu0 %v429
  %v607 = vpop.f32.mrf.mxu0
  %v608 = vadd.f32 %v541, %v607
  %v609 = vpop.f32.mrf.mxu0
  %v610 = vadd.f32 %v543, %v609
  %611 = vdwg.mxu0
  %v612 = vld [vmem:[%s6] sm:$0x1]
  %v614 = vperm.slane %v612, 0
  %v616 = vadd.f32 %v603, %v614
  %v617 = vadd.f32 %v605, %v614
  %v618 = vadd.f32 %v608, %v614
  %v619 = vadd.f32 %v610, %v614
  %vm620 = vcmp.ge.f32.partialorder %v616, 0.0
  %vm621 = vcmp.ge.f32.partialorder %v617, 0.0
  %vm622 = vcmp.ge.f32.partialorder %v618, 0.0
  %vm623 = vcmp.ge.f32.partialorder %v619, 0.0
  %v624 = vmul.f32 %v616, 0.02
  %v625 = vmul.f32 %v617, 0.02
  %v626 = vmul.f32 %v618, 0.02
  %v627 = vmul.f32 %v619, 0.02
  %v628 = vsel %vm620, %v616, %v624
  %v629 = vsel %vm621, %v617, %v625
  %v630 = vsel %vm622, %v618, %v626
  %v631 = vsel %vm623, %v619, %v627
  %v632 = vpack.c.bf16 %v629, %v628
  %v633 = vpack.c.bf16 %v631, %v630
  %v634 = vld [vmem:[%s7] sm:$0xf]
  %v635 = vld [vmem:[%s7 + $0x4] sm:$0xf]
  %v636 = vld [vmem:[%s7 + $0x8] sm:$0xf]
  %v637 = vld [vmem:[%s7 + $0xc] sm:$0xf]
  %v638 = vld [vmem:[%s7 + $0x10] sm:$0xf]
  %v639 = vld [vmem:[%s7 + $0x14] sm:$0xf]
  %v640 = vld [vmem:[%s7 + $0x18] sm:$0xf]
  %v641 = vld [vmem:[%s7 + $0x1c] sm:$0xf]
  %v642 = vld [vmem:[%s7 + $0x20] sm:$0xf]
  %v643 = vld [vmem:[%s7 + $0x24] sm:$0xf]
  %v644 = vld [vmem:[%s7 + $0x28] sm:$0xf]
  %v645 = vld [vmem:[%s7 + $0x2c] sm:$0xf]
  %v646 = vld [vmem:[%s7 + $0x30] sm:$0xf]
  %v647 = vld [vmem:[%s7 + $0x34] sm:$0xf]
  %v648 = vld [vmem:[%s7 + $0x38] sm:$0xf]
  %v649 = vld [vmem:[%s7 + $0x3c] sm:$0xf]
  %v650 = vld [vmem:[%s8] sm:$0x1]
  %v652 = vperm.slane %v650, 0
  %v670 = vunpack.c.l.b16 %v634
  %v671 = vunpack.c.l.b16 %v635
  %v672 = vunpack.c.l.b16 %v636
  %v673 = vunpack.c.l.b16 %v637
  %v674 = vunpack.c.l.b16 %v638
  %v675 = vunpack.c.l.b16 %v639
  %v676 = vunpack.c.l.b16 %v640
  %v677 = vunpack.c.l.b16 %v641
  %v678 = vunpack.c.l.b16 %v642
  %v679 = vunpack.c.l.b16 %v643
  %v680 = vunpack.c.l.b16 %v644
  %v681 = vunpack.c.l.b16 %v645
  %v682 = vunpack.c.l.b16 %v646
  %v683 = vunpack.c.l.b16 %v647
  %v684 = vunpack.c.l.b16 %v648
  %v685 = vunpack.c.l.b16 %v649
  %v686 = vpack.c.b16 %v671, %v670
  %v687 = vpack.c.b16 %v673, %v672
  %v688 = vpack.c.b16 %v675, %v674
  %v689 = vpack.c.b16 %v677, %v676
  %v690 = vpack.c.b16 %v679, %v678
  %v691 = vpack.c.b16 %v681, %v680
  %v692 = vpack.c.b16 %v683, %v682
  %v693 = vpack.c.b16 %v685, %v684
  %702 = vmatpush.bf16.msra.mxu0 %v693
  %703 = vmatpush.bf16.msra.mxu0 %v692
  %704 = vmatpush.bf16.msra.mxu0 %v691
  %705 = vmatpush.bf16.msra.mxu0 %v690
  %706 = vmatpush.bf16.msra.mxu0 %v689
  %707 = vmatpush.bf16.msra.mxu0 %v688
  %708 = vmatpush.bf16.msra.mxu0 %v687
  %709 = vmatpush.bf16.msra.mxu0 %v686
  %710 = vmatmul.bf16.gmra.mxu0 %v632
  %v711 = vpop.f32.mrf.mxu0
  %v712 = vadd.f32 %v652, %v711
  %v713 = vpop.f32.mrf.mxu0
  %v714 = vadd.f32 %v652, %v713
  %715 = vmatmul.bf16.gmra.mxu0 %v633
  %v716 = vpop.f32.mrf.mxu0
  %v717 = vadd.f32 %v652, %v716
  %v718 = vpop.f32.mrf.mxu0
  %v719 = vadd.f32 %v652, %v718
  %720 = vdwg.mxu0
  %721 = vst [vmem:[%s9] sm:$0xff] %v712
  %722 = vst [vmem:[%s9 + $0x8] sm:$0xff] %v714
  %723 = vst [vmem:[%s9 + $0x10] sm:$0xff] %v717
  %724 = vst [vmem:[%s9 + $0x18] sm:$0xff] %v719
  // Predicated region
  $region38: #{veegan_discriminator_forward.7} parent=0 // pred_check
    _
  $region39: #{veegan_discriminator_forward.7} parent=0 // pred_check_branch
    %726 = sbr.rel (0) target = $region41
  $region40: #{veegan_discriminator_forward.7} parent=0 // pred_region
    _
  $region41: #{veegan_discriminator_forward.7} parent=0 // pred_fallthru
    _
  // Predicated region
  $region42: #{veegan_discriminator_forward.7} parent=0 // pred_check
    _
  $region43: #{veegan_discriminator_forward.7} parent=0 // pred_check_branch
    %728 = sbr.rel (0) target = $region45
  $region44: #{veegan_discriminator_forward.7} parent=0 // pred_region
    _
  $region45: #{veegan_discriminator_forward.7} parent=0 // pred_fallthru
    _

</llo_original>
